<compile_context>
chip_gen: v7x
topology: tpu7x:2x2x1
jax: 0.10.0
libtpu: 0.0.40
codegen_flags: <defaults>
</compile_context>

<pallas_src>
import jax
import jax.numpy as jnp
from jax import lax
from jax.experimental import pallas as pl
from jax.experimental.pallas import tpu as pltpu


def _round_up(x, m):
  return ((x + m - 1) // m) * m


def _pick_time_chunk(T, target=32):
  """Largest divisor of T that is <= target (bounds VMEM scratch per chunk)."""
  for d in range(min(T, target), 0, -1):
    if T % d == 0:
      return d
  return 1


# ----------------------------------------------------------------------------
# LSTM stack kernel: grid over time chunks, layers unrolled inside.
# ----------------------------------------------------------------------------
def _lstm_stack_kernel(x_ref, h0_ref, c0_ref, wih_ref, whh_ref, b_ref,
                       out_ref, hn_ref, cn_ref, xbuf, gbuf):
  """One time chunk of the full LSTM stack.

  x_ref:   (Tc, Bp, F)    bf16 padded embeddings for this chunk (streamed)
  h0_ref:  (L, Bp, Hp)    f32 initial hidden (resident)
  c0_ref:  (L, Bp, Hp)    f32 initial cell   (resident)
  wih_ref: (L, F, 4Hp)    bf16 transposed, gate-padded W_ih (resident)
  whh_ref: (L, Hp, 4Hp)   bf16 transposed, gate-padded W_hh (resident)
  b_ref:   (L, 1, 4Hp)    f32 bias_ih + bias_hh (resident)
  out_ref: (Tc, Bp, Hp)   bf16 last-layer per-step hidden for this chunk
  hn_ref:  (L, Bp, Hp)    f32 running hidden state (resident output, carries chunks)
  cn_ref:  (L, Bp, Hp)    f32 running cell state   (resident output, carries chunks)
  xbuf:    (Tc, Bp, Hp)   bf16 scratch: previous layer's chunk output
  gbuf:    (Tc, Bp, 4Hp)  f32 scratch: precomputed gate pre-activations
  """
  c = pl.program_id(0)
  Tc, Bp, F = x_ref.shape
  L, Hp, G = whh_ref.shape  # G == 4 * Hp

  @pl.when(c == 0)
  def _():
    hn_ref[...] = h0_ref[...]
    cn_ref[...] = c0_ref[...]

  for l in range(L):  # static unroll over layers
    # Hoisted per-layer weight / bias loads (once per chunk, not per timestep).
    whh_l = whh_ref[l]                     # (Hp, 4Hp) bf16
    b_l = b_ref[l]                         # (1, 4Hp)  f32

    # Hoisted input projection for the whole chunk: (Tc*Bp, in) @ (in, 4Hp).
    if l == 0:
      x2 = x_ref[...].reshape(Tc * Bp, F)            # bf16
      wih_l = wih_ref[l]                             # (F, 4Hp)
    else:
      x2 = xbuf[...].reshape(Tc * Bp, Hp)            # bf16
      wih_l = wih_ref[l][:Hp, :] if F > Hp else wih_ref[l]
    gx = jnp.dot(x2, wih_l, preferred_element_type=jnp.float32) + b_l
    gbuf[...] = gx.reshape(Tc, Bp, G)

    is_last = (l == L - 1)

    def step(t, carry, whh_l=whh_l, is_last=is_last):
      h_prev, c_prev = carry               # (Bp, Hp) f32 vreg carries
      g = gbuf[t] + jnp.dot(h_prev.astype(jnp.bfloat16), whh_l,
                            preferred_element_type=jnp.float32)
      # PyTorch gate order: input, forget, cell(g), output (128-lane aligned).
      i_g = jax.nn.sigmoid(g[:, 0 * Hp:1 * Hp])
      f_g = jax.nn.sigmoid(g[:, 1 * Hp:2 * Hp])
      g_g = jnp.tanh(g[:, 2 * Hp:3 * Hp])
      o_g = jax.nn.sigmoid(g[:, 3 * Hp:4 * Hp])
      c_new = f_g * c_prev + i_g * g_g
      h_new = o_g * jnp.tanh(c_new)
      if is_last:
        out_ref[t] = h_new.astype(out_ref.dtype)     # direct store, no trailing copy
      else:
        xbuf[t] = h_new.astype(xbuf.dtype)
      return (h_new, c_new)

    h_last, c_last = lax.fori_loop(0, Tc, step, (hn_ref[l], cn_ref[l]),
                                   unroll=min(Tc, 8))
    hn_ref[l] = h_last
    cn_ref[l] = c_last


def _lstm_vmem_limit_bytes(Tc, Bp, F, Hp, L):
  g = 4 * Hp
  resident = (L * F * g * 2 + L * Hp * g * 2 + L * g * 4      # wih, whh, bias
              + 4 * L * Bp * Hp * 4)                          # h0, c0, hn, cn
  streamed = 2 * (Tc * Bp * F * 2 + Tc * Bp * Hp * 2)         # x + out, double-buffered
  scratch = Tc * Bp * Hp * 2 + Tc * Bp * g * 4                # xbuf + gbuf
  est = resident + streamed + scratch
  # ~50% headroom, clamped to v7x's 64 MiB physical VMEM per TensorCore.
  return int(min(64 * 2 ** 20, max(4 * 2 ** 20, int(est * 1.5) + (1 << 20))))


def _lstm_stack(x_tbf, h0_p, c0_p, wih_all, whh_all, b_all, t_chunk):
  T, Bp, F = x_tbf.shape
  L, Hp = whh_all.shape[0], whh_all.shape[1]
  Gp = 4 * Hp
  num_chunks = T // t_chunk

  out_shapes = (
      jax.ShapeDtypeStruct((T, Bp, Hp), jnp.bfloat16),   # per-step hidden (last layer)
      jax.ShapeDtypeStruct((L, Bp, Hp), jnp.float32),    # h_n
      jax.ShapeDtypeStruct((L, Bp, Hp), jnp.float32),    # c_n
  )
  return pl.pallas_call(
      _lstm_stack_kernel,
      out_shape=out_shapes,
      grid=(num_chunks,),
      in_specs=[
          pl.BlockSpec((t_chunk, Bp, F), lambda c: (c, 0, 0)),   # streamed x chunk
          pl.BlockSpec((L, Bp, Hp), lambda c: (0, 0, 0)),        # h0 (resident)
          pl.BlockSpec((L, Bp, Hp), lambda c: (0, 0, 0)),        # c0 (resident)
          pl.BlockSpec((L, F, Gp), lambda c: (0, 0, 0)),         # W_ih (resident)
          pl.BlockSpec((L, Hp, Gp), lambda c: (0, 0, 0)),        # W_hh (resident)
          pl.BlockSpec((L, 1, Gp), lambda c: (0, 0, 0)),         # bias (resident)
      ],
      out_specs=(
          pl.BlockSpec((t_chunk, Bp, Hp), lambda c: (c, 0, 0)),  # out chunk
          pl.BlockSpec((L, Bp, Hp), lambda c: (0, 0, 0)),        # h_n (resident carry)
          pl.BlockSpec((L, Bp, Hp), lambda c: (0, 0, 0)),        # c_n (resident carry)
      ),
      scratch_shapes=[pltpu.VMEM((t_chunk, Bp, Hp), jnp.bfloat16),
                      pltpu.VMEM((t_chunk, Bp, Gp), jnp.float32)],
      compiler_params=pltpu.CompilerParams(
          dimension_semantics=("arbitrary",),
          vmem_limit_bytes=_lstm_vmem_limit_bytes(t_chunk, Bp, F, Hp, L)),
  )(x_tbf, h0_p, c0_p, wih_all, whh_all, b_all)


# ----------------------------------------------------------------------------
# FC (vocab projection) kernel: vocab tiles on the outer grid axis so each
# weight tile is DMA'd exactly once; row tiles stream on the inner axis.
# ----------------------------------------------------------------------------
def _fc_kernel(x_ref, w_ref, b_ref, o_ref):
  o_ref[...] = (jnp.dot(x_ref[...], w_ref[...],
                        preferred_element_type=jnp.float32)
                + b_ref[...])


def _fc(x_p, w_p, b_p, tn, tv):
  Np, Hp = x_p.shape
  Vp = w_p.shape[1]
  grid = (Vp // tv, Np // tn)   # vocab outer -> weight tile loaded once per tile
  return pl.pallas_call(
      _fc_kernel,
      out_shape=jax.ShapeDtypeStruct((Np, Vp), jnp.float32),
      grid=grid,
      in_specs=[pl.BlockSpec((tn, Hp), lambda j, i: (i, 0)),
                pl.BlockSpec((Hp, tv), lambda j, i: (0, j)),
                pl.BlockSpec((1, tv), lambda j, i: (0, j))],
      out_specs=pl.BlockSpec((tn, tv), lambda j, i: (i, j)),
      compiler_params=pltpu.CompilerParams(
          dimension_semantics=("parallel", "parallel")),
  )(x_p, w_p, b_p)


# ----------------------------------------------------------------------------
# Parameters (PyTorch-equivalent init, stored pre-padded / pre-transposed)
# ----------------------------------------------------------------------------
def init_params(key, vocab_size, embed_size, hidden_size, num_layers):
  F = _round_up(max(embed_size, hidden_size), 128)   # common padded input dim
  Hp = _round_up(hidden_size, 128)
  Gp = 4 * Hp
  Vp = _round_up(vocab_size, 128)

  def pad_gatewise(w_t, in_dim, in_pad):
    # w_t: (in_dim, 4H), columns gate-major [i|f|g|o] -> (in_pad, 4Hp)
    w4 = w_t.reshape(in_dim, 4, hidden_size)
    w4 = jnp.pad(w4, ((0, in_pad - in_dim), (0, 0), (0, Hp - hidden_size)))
    return w4.reshape(in_pad, Gp)

  params = {}
  k_emb, key = jax.random.split(key)
  emb = jax.random.normal(k_emb, (vocab_size, embed_size), jnp.float32)
  params["embedding_p"] = jnp.pad(emb, ((0, 0), (0, F - embed_size)))

  bound = 1.0 / (hidden_size ** 0.5)
  wih_list, whh_list, b_list = [], [], []
  for l in range(num_layers):
    in_size = embed_size if l == 0 else hidden_size
    k1, k2, k3, k4, key = jax.random.split(key, 5)
    wih = jax.random.uniform(k1, (4 * hidden_size, in_size), jnp.float32, -bound, bound)
    whh = jax.random.uniform(k2, (4 * hidden_size, hidden_size), jnp.float32, -bound, bound)
    bih = jax.random.uniform(k3, (4 * hidden_size,), jnp.float32, -bound, bound)
    bhh = jax.random.uniform(k4, (4 * hidden_size,), jnp.float32, -bound, bound)
    wih_list.append(pad_gatewise(wih.T, in_size, F))
    whh_list.append(pad_gatewise(whh.T, hidden_size, Hp))
    b4 = (bih + bhh).reshape(4, hidden_size)
    b4 = jnp.pad(b4, ((0, 0), (0, Hp - hidden_size)))
    b_list.append(b4.reshape(1, Gp))

  params["wih_all"] = jnp.stack(wih_list).astype(jnp.bfloat16)   # (L, F, 4Hp)
  params["whh_all"] = jnp.stack(whh_list).astype(jnp.bfloat16)   # (L, Hp, 4Hp)
  params["b_all"] = jnp.stack(b_list)                            # (L, 1, 4Hp) f32

  k5, k6, _ = jax.random.split(key, 3)
  w_fc = jax.random.uniform(k5, (vocab_size, hidden_size), jnp.float32, -bound, bound)
  b_fc = jax.random.uniform(k6, (vocab_size,), jnp.float32, -bound, bound)
  params["fc_w_p"] = jnp.pad(
      w_fc.T, ((0, Hp - hidden_size), (0, Vp - vocab_size))).astype(jnp.bfloat16)
  params["fc_b_p"] = jnp.pad(b_fc, (0, Vp - vocab_size)).reshape(1, Vp)
  return params


def init_hidden(num_layers, batch_size, hidden_size):
  return (jnp.zeros((num_layers, batch_size, hidden_size), jnp.float32),
          jnp.zeros((num_layers, batch_size, hidden_size), jnp.float32))


# ----------------------------------------------------------------------------
# Forward
# ----------------------------------------------------------------------------
@jax.jit
def text_generation_forward(params, x_tokens, hidden):
  """Matches TextGenerationModel.forward (rnn_type='LSTM', batch_first)."""
  h0_all, c0_all = hidden                       # (L, B, H)
  L, B, H = h0_all.shape
  T = x_tokens.shape[1]

  emb_p = params["embedding_p"]                 # (V, F) f32
  V = emb_p.shape[0]
  Hp = params["whh_all"].shape[1]
  Vp = params["fc_w_p"].shape[1]
  Bp = _round_up(B, 8)
  t_chunk = _pick_time_chunk(T, target=32)

  # Pad tokens to the padded batch first, then gather time-major: one gather,
  # no second full-tensor pad/copy of the embedded activations.
  tok_p = jnp.pad(x_tokens, ((0, Bp - B), (0, 0)))          # (Bp, T) int32
  x_tbf = jnp.take(emb_p, tok_p.T, axis=0).astype(jnp.bfloat16)   # (T, Bp, F)

  h0_p = jnp.pad(h0_all, ((0, 0), (0, Bp - B), (0, Hp - H)))
  c0_p = jnp.pad(c0_all, ((0, 0), (0, Bp - B), (0, Hp - H)))

  out_tbh, hn_p, cn_p = _lstm_stack(x_tbf, h0_p, c0_p,
                                    params["wih_all"], params["whh_all"],
                                    params["b_all"], t_chunk)

  # Batch-first flatten (bf16) to match PyTorch row ordering of the FC.
  fc_in = jnp.transpose(out_tbh[:, :B, :], (1, 0, 2)).reshape(B * T, Hp)

  N = B * T
  tn = min(256, _round_up(N, 8))
  Np = _round_up(N, tn)
  tv = 512 if Vp % 512 == 0 else (256 if Vp % 256 == 0 else 128)
  fc_in_p = jnp.pad(fc_in, ((0, Np - N), (0, 0)))

  logits_p = _fc(fc_in_p, params["fc_w_p"], params["fc_b_p"], tn, tv)
  logits = logits_p[:N, :V]                     # (B*T, V) f32

  h_n = hn_p[:, :B, :H]
  c_n = cn_p[:, :B, :H]
  return logits, (h_n, c_n)


# ----------------------------------------------------------------------------
# Main
# ----------------------------------------------------------------------------
if __name__ == "__main__":
  VOCAB = 50
  EMBED = 32
  HIDDEN = 32
  LAYERS = 2
  BATCH = 2
  SEQ = 8

  key = jax.random.PRNGKey(0)
  k_params, k_tokens = jax.random.split(key)

  params = init_params(k_params, VOCAB, EMBED, HIDDEN, LAYERS)
  x_tokens = jax.random.randint(k_tokens, (BATCH, SEQ), 0, VOCAB, jnp.int32)
  hidden = init_hidden(LAYERS, BATCH, HIDDEN)

  logits, (h_n, c_n) = text_generation_forward(params, x_tokens, hidden)
  jax.block_until_ready((logits, h_n, c_n))

  assert logits.shape == (BATCH * SEQ, VOCAB)
  assert h_n.shape == (LAYERS, BATCH, HIDDEN)
  assert c_n.shape == (LAYERS, BATCH, HIDDEN)
  print("KERNEL_OK")
</pallas_src>

<mosaic_0001>
module attributes {stable_mosaic.version = 11 : i64} {
  func.func @_fc_kernel(%arg0: i32, %arg1: i32, %arg2: memref<16x128xbf16, #tpu.memory_space<vmem>>, %arg3: memref<128x128xbf16, #tpu.memory_space<vmem>>, %arg4: memref<1x128xf32, #tpu.memory_space<vmem>>, %arg5: memref<16x128xf32, #tpu.memory_space<vmem>>) attributes {dimension_semantics = [#tpu.dimension_semantics<parallel>, #tpu.dimension_semantics<parallel>], iteration_bounds = array<i64: 1, 1>, scalar_prefetch = 0 : i64, scratch_operands = 0 : i64, tpu.core_type = #tpu.core_type<tc>, window_params = [{transform_indices = @transform_0, window_bounds = array<i64: 16, 128>}, {transform_indices = @transform_1, window_bounds = array<i64: 128, 128>}, {transform_indices = @transform_2, window_bounds = array<i64: 1, 128>}, {transform_indices = @transform_3, window_bounds = array<i64: 16, 128>}]} {
    %c0 = arith.constant 0 : index
    %c0_0 = arith.constant 0 : index
    %0 = vector.load %arg2[%c0, %c0_0] : memref<16x128xbf16, #tpu.memory_space<vmem>>, vector<16x128xbf16>
    %c0_1 = arith.constant 0 : index
    %c0_2 = arith.constant 0 : index
    %1 = vector.load %arg3[%c0_1, %c0_2] : memref<128x128xbf16, #tpu.memory_space<vmem>>, vector<128x128xbf16>
    %cst = arith.constant dense<0.000000e+00> : vector<16x128xf32>
    %2 = tpu.matmul %0, %1, %cst {dimension_numbers = #tpu.dot_dimension_numbers<[1], [0], [0], [1], [0, 0, 1, 1], [], []>} : vector<16x128xbf16>, vector<128x128xbf16>, vector<16x128xf32> -> vector<16x128xf32>
    %c0_3 = arith.constant 0 : index
    %c0_4 = arith.constant 0 : index
    %3 = vector.load %arg4[%c0_3, %c0_4] : memref<1x128xf32, #tpu.memory_space<vmem>>, vector<1x128xf32>
    %4 = vector.broadcast %3 : vector<1x128xf32> to vector<16x128xf32>
    %5 = arith.addf %2, %4 : vector<16x128xf32>
    %c0_5 = arith.constant 0 : index
    %c0_6 = arith.constant 0 : index
    %6 = vector.load %arg5[%c0_5, %c0_6] : memref<16x128xf32, #tpu.memory_space<vmem>>, vector<16x128xf32>
    tpu.vector_store %arg5[%c0_5, %c0_6], %5 {strides = array<i32>} : memref<16x128xf32, #tpu.memory_space<vmem>>, vector<16x128xf32>,
    return
  }
  func.func @transform_0(%arg0: i32, %arg1: i32) -> (i32, i32) {
    %c0_i32 = arith.constant 0 : i32
    %c0_i32_0 = arith.constant 0 : i32
    return %arg1, %c0_i32 : i32, i32
  }
  func.func @transform_1(%arg0: i32, %arg1: i32) -> (i32, i32) {
    %c0_i32 = arith.constant 0 : i32
    %c0_i32_0 = arith.constant 0 : i32
    return %c0_i32, %arg0 : i32, i32
  }
  func.func @transform_2(%arg0: i32, %arg1: i32) -> (i32, i32) {
    %c0_i32 = arith.constant 0 : i32
    %c0_i32_0 = arith.constant 0 : i32
    return %c0_i32, %arg0 : i32, i32
  }
  func.func @transform_3(%arg0: i32, %arg1: i32) -> (i32, i32) {
    %c0_i32 = arith.constant 0 : i32
    return %arg1, %arg0 : i32, i32
  }
}

module attributes {stable_mosaic.version = 11 : i64} {
  func.func @_lstm_stack_kernel(%arg0: i32, %arg1: memref<8x8x128xbf16, #tpu.memory_space<vmem>>, %arg2: memref<2x8x128xf32, #tpu.memory_space<vmem>>, %arg3: memref<2x8x128xf32, #tpu.memory_space<vmem>>, %arg4: memref<2x128x512xbf16, #tpu.memory_space<vmem>>, %arg5: memref<2x128x512xbf16, #tpu.memory_space<vmem>>, %arg6: memref<2x1x512xf32, #tpu.memory_space<vmem>>, %arg7: memref<8x8x128xbf16, #tpu.memory_space<vmem>>, %arg8: memref<2x8x128xf32, #tpu.memory_space<vmem>>, %arg9: memref<2x8x128xf32, #tpu.memory_space<vmem>>, %arg10: memref<8x8x128xbf16, #tpu.memory_space<vmem>>, %arg11: memref<8x8x512xf32, #tpu.memory_space<vmem>>) attributes {dimension_semantics = [#tpu.dimension_semantics<arbitrary>], iteration_bounds = array<i64: 1>, scalar_prefetch = 0 : i64, scratch_operands = 2 : i64, tpu.core_type = #tpu.core_type<tc>, window_params = [{transform_indices = @transform_0, window_bounds = array<i64: 8, 8, 128>}, {pipeline_mode = #tpu.pipeline_mode<synchronous>, transform_indices = @transform_1, window_bounds = array<i64: 2, 8, 128>}, {pipeline_mode = #tpu.pipeline_mode<synchronous>, transform_indices = @transform_2, window_bounds = array<i64: 2, 8, 128>}, {pipeline_mode = #tpu.pipeline_mode<synchronous>, transform_indices = @transform_3, window_bounds = array<i64: 2, 128, 512>}, {pipeline_mode = #tpu.pipeline_mode<synchronous>, transform_indices = @transform_4, window_bounds = array<i64: 2, 128, 512>}, {pipeline_mode = #tpu.pipeline_mode<synchronous>, transform_indices = @transform_5, window_bounds = array<i64: 2, 1, 512>}, {transform_indices = @transform_6, window_bounds = array<i64: 8, 8, 128>}, {pipeline_mode = #tpu.pipeline_mode<synchronous>, transform_indices = @transform_7, window_bounds = array<i64: 2, 8, 128>}, {pipeline_mode = #tpu.pipeline_mode<synchronous>, transform_indices = @transform_8, window_bounds = array<i64: 2, 8, 128>}]} {
    %c0_i32 = arith.constant 0 : i32
    %0 = arith.cmpi eq, %arg0, %c0_i32 : i32
    %1 = arith.extui %0 : i1 to i32
    %c0_i32_0 = arith.constant 0 : i32
    %2 = arith.cmpi ne, %1, %c0_i32_0 : i32
    scf.if %2 {
      %c0_192 = arith.constant 0 : index
      %c0_193 = arith.constant 0 : index
      %c0_194 = arith.constant 0 : index
      %625 = vector.load %arg2[%c0_192, %c0_193, %c0_194] : memref<2x8x128xf32, #tpu.memory_space<vmem>>, vector<2x8x128xf32>
      %c0_195 = arith.constant 0 : index
      %c0_196 = arith.constant 0 : index
      %c0_197 = arith.constant 0 : index
      %626 = vector.load %arg8[%c0_195, %c0_196, %c0_197] : memref<2x8x128xf32, #tpu.memory_space<vmem>>, vector<2x8x128xf32>
      tpu.vector_store %arg8[%c0_195, %c0_196, %c0_197], %625 {strides = array<i32>} : memref<2x8x128xf32, #tpu.memory_space<vmem>>, vector<2x8x128xf32>,
      %c0_198 = arith.constant 0 : index
      %c0_199 = arith.constant 0 : index
      %c0_200 = arith.constant 0 : index
      %627 = vector.load %arg3[%c0_198, %c0_199, %c0_200] : memref<2x8x128xf32, #tpu.memory_space<vmem>>, vector<2x8x128xf32>
      %c0_201 = arith.constant 0 : index
      %c0_202 = arith.constant 0 : index
      %c0_203 = arith.constant 0 : index
      %628 = vector.load %arg9[%c0_201, %c0_202, %c0_203] : memref<2x8x128xf32, #tpu.memory_space<vmem>>, vector<2x8x128xf32>
      tpu.vector_store %arg9[%c0_201, %c0_202, %c0_203], %627 {strides = array<i32>} : memref<2x8x128xf32, #tpu.memory_space<vmem>>, vector<2x8x128xf32>,
    } else {
    }
    %c0 = arith.constant 0 : index
    %c0_1 = arith.constant 0 : index
    %c0_2 = arith.constant 0 : index
    %3 = vector.load %arg5[%c0, %c0_1, %c0_2] : memref<2x128x512xbf16, #tpu.memory_space<vmem>>, vector<1x128x512xbf16>
    %4 = vector.shape_cast %3 : vector<1x128x512xbf16> to vector<128x512xbf16>
    %c0_3 = arith.constant 0 : index
    %c0_4 = arith.constant 0 : index
    %c0_5 = arith.constant 0 : index
    %5 = vector.load %arg6[%c0_3, %c0_4, %c0_5] : memref<2x1x512xf32, #tpu.memory_space<vmem>>, vector<1x1x512xf32>
    %6 = vector.shape_cast %5 : vector<1x1x512xf32> to vector<1x512xf32>
    %c0_6 = arith.constant 0 : index
    %c0_7 = arith.constant 0 : index
    %c0_8 = arith.constant 0 : index
    %7 = vector.load %arg1[%c0_6, %c0_7, %c0_8] : memref<8x8x128xbf16, #tpu.memory_space<vmem>>, vector<8x8x128xbf16>
    %8 = vector.shape_cast %7 : vector<8x8x128xbf16> to vector<64x128xbf16>
    %c0_9 = arith.constant 0 : index
    %c0_10 = arith.constant 0 : index
    %c0_11 = arith.constant 0 : index
    %9 = vector.load %arg4[%c0_9, %c0_10, %c0_11] : memref<2x128x512xbf16, #tpu.memory_space<vmem>>, vector<1x128x512xbf16>
    %10 = vector.shape_cast %9 : vector<1x128x512xbf16> to vector<128x512xbf16>
    %cst = arith.constant dense<0.000000e+00> : vector<64x512xf32>
    %11 = tpu.matmul %8, %10, %cst {dimension_numbers = #tpu.dot_dimension_numbers<[1], [0], [0], [1], [0, 0, 1, 1], [], []>} : vector<64x128xbf16>, vector<128x512xbf16>, vector<64x512xf32> -> vector<64x512xf32>
    %12 = vector.broadcast %6 : vector<1x512xf32> to vector<64x512xf32>
    %13 = arith.addf %11, %12 : vector<64x512xf32>
    %14 = vector.shape_cast %13 : vector<64x512xf32> to vector<8x8x512xf32>
    %c0_12 = arith.constant 0 : index
    %c0_13 = arith.constant 0 : index
    %c0_14 = arith.constant 0 : index
    %15 = vector.load %arg11[%c0_12, %c0_13, %c0_14] : memref<8x8x512xf32, #tpu.memory_space<vmem>>, vector<8x8x512xf32>
    tpu.vector_store %arg11[%c0_12, %c0_13, %c0_14], %14 {strides = array<i32>} : memref<8x8x512xf32, #tpu.memory_space<vmem>>, vector<8x8x512xf32>,
    %c0_15 = arith.constant 0 : index
    %c0_16 = arith.constant 0 : index
    %c0_17 = arith.constant 0 : index
    %16 = vector.load %arg8[%c0_15, %c0_16, %c0_17] : memref<2x8x128xf32, #tpu.memory_space<vmem>>, vector<1x8x128xf32>
    %17 = vector.shape_cast %16 : vector<1x8x128xf32> to vector<8x128xf32>
    %c0_18 = arith.constant 0 : index
    %c0_19 = arith.constant 0 : index
    %c0_20 = arith.constant 0 : index
    %18 = vector.load %arg9[%c0_18, %c0_19, %c0_20] : memref<2x8x128xf32, #tpu.memory_space<vmem>>, vector<1x8x128xf32>
    %19 = vector.shape_cast %18 : vector<1x8x128xf32> to vector<8x128xf32>
    %c0_i32_21 = arith.constant 0 : i32
    %20 = arith.index_cast %c0_i32_21 : i32 to index
    %c0_22 = arith.constant 0 : index
    %c0_23 = arith.constant 0 : index
    %21 = vector.load %arg11[%20, %c0_22, %c0_23] : memref<8x8x512xf32, #tpu.memory_space<vmem>>, vector<1x8x512xf32>
    %22 = vector.shape_cast %21 : vector<1x8x512xf32> to vector<8x512xf32>
    %23 = arith.truncf %17 : vector<8x128xf32> to vector<8x128xbf16>
    %cst_24 = arith.constant dense<0.000000e+00> : vector<8x512xf32>
    %24 = tpu.matmul %23, %4, %cst_24 {dimension_numbers = #tpu.dot_dimension_numbers<[1], [0], [0], [1], [0, 0, 1, 1], [], []>} : vector<8x128xbf16>, vector<128x512xbf16>, vector<8x512xf32> -> vector<8x512xf32>
    %25 = arith.addf %22, %24 : vector<8x512xf32>
    %26 = vector.extract_strided_slice %25 {offsets = [0, 0], sizes = [8, 128], strides = [1, 1]} : vector<8x512xf32> to vector<8x128xf32>
    %27 = arith.negf %26 : vector<8x128xf32>
    %28 = math.exp %27 : vector<8x128xf32>
    %cst_25 = arith.constant 1.000000e+00 : f32
    %29 = vector.broadcast %cst_25 : f32 to vector<8x128xf32>
    %30 = arith.addf %29, %28 : vector<8x128xf32>
    %31 = arith.divf %29, %30 : vector<8x128xf32>
    %32 = vector.extract_strided_slice %25 {offsets = [0, 128], sizes = [8, 128], strides = [1, 1]} : vector<8x512xf32> to vector<8x128xf32>
    %33 = arith.negf %32 : vector<8x128xf32>
    %34 = math.exp %33 : vector<8x128xf32>
    %cst_26 = arith.constant 1.000000e+00 : f32
    %35 = vector.broadcast %cst_26 : f32 to vector<8x128xf32>
    %36 = arith.addf %35, %34 : vector<8x128xf32>
    %37 = arith.divf %35, %36 : vector<8x128xf32>
    %38 = vector.extract_strided_slice %25 {offsets = [0, 256], sizes = [8, 128], strides = [1, 1]} : vector<8x512xf32> to vector<8x128xf32>
    %39 = math.tanh %38 : vector<8x128xf32>
    %40 = vector.extract_strided_slice %25 {offsets = [0, 384], sizes = [8, 128], strides = [1, 1]} : vector<8x512xf32> to vector<8x128xf32>
    %41 = arith.negf %40 : vector<8x128xf32>
    %42 = math.exp %41 : vector<8x128xf32>
    %cst_27 = arith.constant 1.000000e+00 : f32
    %43 = vector.broadcast %cst_27 : f32 to vector<8x128xf32>
    %44 = arith.addf %43, %42 : vector<8x128xf32>
    %45 = arith.divf %43, %44 : vector<8x128xf32>
    %46 = arith.mulf %37, %19 : vector<8x128xf32>
    %47 = arith.mulf %31, %39 : vector<8x128xf32>
    %48 = arith.addf %46, %47 : vector<8x128xf32>
    %49 = math.tanh %48 : vector<8x128xf32>
    %50 = arith.mulf %45, %49 : vector<8x128xf32>
    %51 = arith.truncf %50 : vector<8x128xf32> to vector<8x128xbf16>
    %52 = arith.index_cast %c0_i32_21 : i32 to index
    %c0_28 = arith.constant 0 : index
    %c0_29 = arith.constant 0 : index
    %53 = vector.load %arg10[%52, %c0_28, %c0_29] : memref<8x8x128xbf16, #tpu.memory_space<vmem>>, vector<1x8x128xbf16>
    %54 = vector.shape_cast %53 : vector<1x8x128xbf16> to vector<8x128xbf16>
    %55 = vector.shape_cast %51 : vector<8x128xbf16> to vector<1x8x128xbf16>
    tpu.vector_store %arg10[%52, %c0_28, %c0_29], %55 {strides = array<i32>} : memref<8x8x128xbf16, #tpu.memory_space<vmem>>, vector<1x8x128xbf16>,
    %c1_i32 = arith.constant 1 : i32
    %56 = arith.index_cast %c1_i32 : i32 to index
    %c0_30 = arith.constant 0 : index
    %c0_31 = arith.constant 0 : index
    %57 = vector.load %arg11[%56, %c0_30, %c0_31] : memref<8x8x512xf32, #tpu.memory_space<vmem>>, vector<1x8x512xf32>
    %58 = vector.shape_cast %57 : vector<1x8x512xf32> to vector<8x512xf32>
    %59 = arith.truncf %50 : vector<8x128xf32> to vector<8x128xbf16>
    %cst_32 = arith.constant dense<0.000000e+00> : vector<8x512xf32>
    %60 = tpu.matmul %59, %4, %cst_32 {dimension_numbers = #tpu.dot_dimension_numbers<[1], [0], [0], [1], [0, 0, 1, 1], [], []>} : vector<8x128xbf16>, vector<128x512xbf16>, vector<8x512xf32> -> vector<8x512xf32>
    %61 = arith.addf %58, %60 : vector<8x512xf32>
    %62 = vector.extract_strided_slice %61 {offsets = [0, 0], sizes = [8, 128], strides = [1, 1]} : vector<8x512xf32> to vector<8x128xf32>
    %63 = arith.negf %62 : vector<8x128xf32>
    %64 = math.exp %63 : vector<8x128xf32>
    %cst_33 = arith.constant 1.000000e+00 : f32
    %65 = vector.broadcast %cst_33 : f32 to vector<8x128xf32>
    %66 = arith.addf %65, %64 : vector<8x128xf32>
    %67 = arith.divf %65, %66 : vector<8x128xf32>
    %68 = vector.extract_strided_slice %61 {offsets = [0, 128], sizes = [8, 128], strides = [1, 1]} : vector<8x512xf32> to vector<8x128xf32>
    %69 = arith.negf %68 : vector<8x128xf32>
    %70 = math.exp %69 : vector<8x128xf32>
    %cst_34 = arith.constant 1.000000e+00 : f32
    %71 = vector.broadcast %cst_34 : f32 to vector<8x128xf32>
    %72 = arith.addf %71, %70 : vector<8x128xf32>
    %73 = arith.divf %71, %72 : vector<8x128xf32>
    %74 = vector.extract_strided_slice %61 {offsets = [0, 256], sizes = [8, 128], strides = [1, 1]} : vector<8x512xf32> to vector<8x128xf32>
    %75 = math.tanh %74 : vector<8x128xf32>
    %76 = vector.extract_strided_slice %61 {offsets = [0, 384], sizes = [8, 128], strides = [1, 1]} : vector<8x512xf32> to vector<8x128xf32>
    %77 = arith.negf %76 : vector<8x128xf32>
    %78 = math.exp %77 : vector<8x128xf32>
    %cst_35 = arith.constant 1.000000e+00 : f32
    %79 = vector.broadcast %cst_35 : f32 to vector<8x128xf32>
    %80 = arith.addf %79, %78 : vector<8x128xf32>
    %81 = arith.divf %79, %80 : vector<8x128xf32>
    %82 = arith.mulf %73, %48 : vector<8x128xf32>
    %83 = arith.mulf %67, %75 : vector<8x128xf32>
    %84 = arith.addf %82, %83 : vector<8x128xf32>
    %85 = math.tanh %84 : vector<8x128xf32>
    %86 = arith.mulf %81, %85 : vector<8x128xf32>
    %87 = arith.truncf %86 : vector<8x128xf32> to vector<8x128xbf16>
    %88 = arith.index_cast %c1_i32 : i32 to index
    %c0_36 = arith.constant 0 : index
    %c0_37 = arith.constant 0 : index
    %89 = vector.load %arg10[%88, %c0_36, %c0_37] : memref<8x8x128xbf16, #tpu.memory_space<vmem>>, vector<1x8x128xbf16>
    %90 = vector.shape_cast %89 : vector<1x8x128xbf16> to vector<8x128xbf16>
    %91 = vector.shape_cast %87 : vector<8x128xbf16> to vector<1x8x128xbf16>
    tpu.vector_store %arg10[%88, %c0_36, %c0_37], %91 {strides = array<i32>} : memref<8x8x128xbf16, #tpu.memory_space<vmem>>, vector<1x8x128xbf16>,
    %c2_i32 = arith.constant 2 : i32
    %92 = arith.index_cast %c2_i32 : i32 to index
    %c0_38 = arith.constant 0 : index
    %c0_39 = arith.constant 0 : index
    %93 = vector.load %arg11[%92, %c0_38, %c0_39] : memref<8x8x512xf32, #tpu.memory_space<vmem>>, vector<1x8x512xf32>
    %94 = vector.shape_cast %93 : vector<1x8x512xf32> to vector<8x512xf32>
    %95 = arith.truncf %86 : vector<8x128xf32> to vector<8x128xbf16>
    %cst_40 = arith.constant dense<0.000000e+00> : vector<8x512xf32>
    %96 = tpu.matmul %95, %4, %cst_40 {dimension_numbers = #tpu.dot_dimension_numbers<[1], [0], [0], [1], [0, 0, 1, 1], [], []>} : vector<8x128xbf16>, vector<128x512xbf16>, vector<8x512xf32> -> vector<8x512xf32>
    %97 = arith.addf %94, %96 : vector<8x512xf32>
    %98 = vector.extract_strided_slice %97 {offsets = [0, 0], sizes = [8, 128], strides = [1, 1]} : vector<8x512xf32> to vector<8x128xf32>
    %99 = arith.negf %98 : vector<8x128xf32>
    %100 = math.exp %99 : vector<8x128xf32>
    %cst_41 = arith.constant 1.000000e+00 : f32
    %101 = vector.broadcast %cst_41 : f32 to vector<8x128xf32>
    %102 = arith.addf %101, %100 : vector<8x128xf32>
    %103 = arith.divf %101, %102 : vector<8x128xf32>
    %104 = vector.extract_strided_slice %97 {offsets = [0, 128], sizes = [8, 128], strides = [1, 1]} : vector<8x512xf32> to vector<8x128xf32>
    %105 = arith.negf %104 : vector<8x128xf32>
    %106 = math.exp %105 : vector<8x128xf32>
    %cst_42 = arith.constant 1.000000e+00 : f32
    %107 = vector.broadcast %cst_42 : f32 to vector<8x128xf32>
    %108 = arith.addf %107, %106 : vector<8x128xf32>
    %109 = arith.divf %107, %108 : vector<8x128xf32>
    %110 = vector.extract_strided_slice %97 {offsets = [0, 256], sizes = [8, 128], strides = [1, 1]} : vector<8x512xf32> to vector<8x128xf32>
    %111 = math.tanh %110 : vector<8x128xf32>
    %112 = vector.extract_strided_slice %97 {offsets = [0, 384], sizes = [8, 128], strides = [1, 1]} : vector<8x512xf32> to vector<8x128xf32>
    %113 = arith.negf %112 : vector<8x128xf32>
    %114 = math.exp %113 : vector<8x128xf32>
    %cst_43 = arith.constant 1.000000e+00 : f32
    %115 = vector.broadcast %cst_43 : f32 to vector<8x128xf32>
    %116 = arith.addf %115, %114 : vector<8x128xf32>
    %117 = arith.divf %115, %116 : vector<8x128xf32>
    %118 = arith.mulf %109, %84 : vector<8x128xf32>
    %119 = arith.mulf %103, %111 : vector<8x128xf32>
    %120 = arith.addf %118, %119 : vector<8x128xf32>
    %121 = math.tanh %120 : vector<8x128xf32>
    %122 = arith.mulf %117, %121 : vector<8x128xf32>
    %123 = arith.truncf %122 : vector<8x128xf32> to vector<8x128xbf16>
    %124 = arith.index_cast %c2_i32 : i32 to index
    %c0_44 = arith.constant 0 : index
    %c0_45 = arith.constant 0 : index
    %125 = vector.load %arg10[%124, %c0_44, %c0_45] : memref<8x8x128xbf16, #tpu.memory_space<vmem>>, vector<1x8x128xbf16>
    %126 = vector.shape_cast %125 : vector<1x8x128xbf16> to vector<8x128xbf16>
    %127 = vector.shape_cast %123 : vector<8x128xbf16> to vector<1x8x128xbf16>
    tpu.vector_store %arg10[%124, %c0_44, %c0_45], %127 {strides = array<i32>} : memref<8x8x128xbf16, #tpu.memory_space<vmem>>, vector<1x8x128xbf16>,
    %c3_i32 = arith.constant 3 : i32
    %128 = arith.index_cast %c3_i32 : i32 to index
    %c0_46 = arith.constant 0 : index
    %c0_47 = arith.constant 0 : index
    %129 = vector.load %arg11[%128, %c0_46, %c0_47] : memref<8x8x512xf32, #tpu.memory_space<vmem>>, vector<1x8x512xf32>
    %130 = vector.shape_cast %129 : vector<1x8x512xf32> to vector<8x512xf32>
    %131 = arith.truncf %122 : vector<8x128xf32> to vector<8x128xbf16>
    %cst_48 = arith.constant dense<0.000000e+00> : vector<8x512xf32>
    %132 = tpu.matmul %131, %4, %cst_48 {dimension_numbers = #tpu.dot_dimension_numbers<[1], [0], [0], [1], [0, 0, 1, 1], [], []>} : vector<8x128xbf16>, vector<128x512xbf16>, vector<8x512xf32> -> vector<8x512xf32>
    %133 = arith.addf %130, %132 : vector<8x512xf32>
    %134 = vector.extract_strided_slice %133 {offsets = [0, 0], sizes = [8, 128], strides = [1, 1]} : vector<8x512xf32> to vector<8x128xf32>
    %135 = arith.negf %134 : vector<8x128xf32>
    %136 = math.exp %135 : vector<8x128xf32>
    %cst_49 = arith.constant 1.000000e+00 : f32
    %137 = vector.broadcast %cst_49 : f32 to vector<8x128xf32>
    %138 = arith.addf %137, %136 : vector<8x128xf32>
    %139 = arith.divf %137, %138 : vector<8x128xf32>
    %140 = vector.extract_strided_slice %133 {offsets = [0, 128], sizes = [8, 128], strides = [1, 1]} : vector<8x512xf32> to vector<8x128xf32>
    %141 = arith.negf %140 : vector<8x128xf32>
    %142 = math.exp %141 : vector<8x128xf32>
    %cst_50 = arith.constant 1.000000e+00 : f32
    %143 = vector.broadcast %cst_50 : f32 to vector<8x128xf32>
    %144 = arith.addf %143, %142 : vector<8x128xf32>
    %145 = arith.divf %143, %144 : vector<8x128xf32>
    %146 = vector.extract_strided_slice %133 {offsets = [0, 256], sizes = [8, 128], strides = [1, 1]} : vector<8x512xf32> to vector<8x128xf32>
    %147 = math.tanh %146 : vector<8x128xf32>
    %148 = vector.extract_strided_slice %133 {offsets = [0, 384], sizes = [8, 128], strides = [1, 1]} : vector<8x512xf32> to vector<8x128xf32>
    %149 = arith.negf %148 : vector<8x128xf32>
    %150 = math.exp %149 : vector<8x128xf32>
    %cst_51 = arith.constant 1.000000e+00 : f32
    %151 = vector.broadcast %cst_51 : f32 to vector<8x128xf32>
    %152 = arith.addf %151, %150 : vector<8x128xf32>
    %153 = arith.divf %151, %152 : vector<8x128xf32>
    %154 = arith.mulf %145, %120 : vector<8x128xf32>
    %155 = arith.mulf %139, %147 : vector<8x128xf32>
    %156 = arith.addf %154, %155 : vector<8x128xf32>
    %157 = math.tanh %156 : vector<8x128xf32>
    %158 = arith.mulf %153, %157 : vector<8x128xf32>
    %159 = arith.truncf %158 : vector<8x128xf32> to vector<8x128xbf16>
    %160 = arith.index_cast %c3_i32 : i32 to index
    %c0_52 = arith.constant 0 : index
    %c0_53 = arith.constant 0 : index
    %161 = vector.load %arg10[%160, %c0_52, %c0_53] : memref<8x8x128xbf16, #tpu.memory_space<vmem>>, vector<1x8x128xbf16>
    %162 = vector.shape_cast %161 : vector<1x8x128xbf16> to vector<8x128xbf16>
    %163 = vector.shape_cast %159 : vector<8x128xbf16> to vector<1x8x128xbf16>
    tpu.vector_store %arg10[%160, %c0_52, %c0_53], %163 {strides = array<i32>} : memref<8x8x128xbf16, #tpu.memory_space<vmem>>, vector<1x8x128xbf16>,
    %c4_i32 = arith.constant 4 : i32
    %164 = arith.index_cast %c4_i32 : i32 to index
    %c0_54 = arith.constant 0 : index
    %c0_55 = arith.constant 0 : index
    %165 = vector.load %arg11[%164, %c0_54, %c0_55] : memref<8x8x512xf32, #tpu.memory_space<vmem>>, vector<1x8x512xf32>
    %166 = vector.shape_cast %165 : vector<1x8x512xf32> to vector<8x512xf32>
    %167 = arith.truncf %158 : vector<8x128xf32> to vector<8x128xbf16>
    %cst_56 = arith.constant dense<0.000000e+00> : vector<8x512xf32>
    %168 = tpu.matmul %167, %4, %cst_56 {dimension_numbers = #tpu.dot_dimension_numbers<[1], [0], [0], [1], [0, 0, 1, 1], [], []>} : vector<8x128xbf16>, vector<128x512xbf16>, vector<8x512xf32> -> vector<8x512xf32>
    %169 = arith.addf %166, %168 : vector<8x512xf32>
    %170 = vector.extract_strided_slice %169 {offsets = [0, 0], sizes = [8, 128], strides = [1, 1]} : vector<8x512xf32> to vector<8x128xf32>
    %171 = arith.negf %170 : vector<8x128xf32>
    %172 = math.exp %171 : vector<8x128xf32>
    %cst_57 = arith.constant 1.000000e+00 : f32
    %173 = vector.broadcast %cst_57 : f32 to vector<8x128xf32>
    %174 = arith.addf %173, %172 : vector<8x128xf32>
    %175 = arith.divf %173, %174 : vector<8x128xf32>
    %176 = vector.extract_strided_slice %169 {offsets = [0, 128], sizes = [8, 128], strides = [1, 1]} : vector<8x512xf32> to vector<8x128xf32>
    %177 = arith.negf %176 : vector<8x128xf32>
    %178 = math.exp %177 : vector<8x128xf32>
    %cst_58 = arith.constant 1.000000e+00 : f32
    %179 = vector.broadcast %cst_58 : f32 to vector<8x128xf32>
    %180 = arith.addf %179, %178 : vector<8x128xf32>
    %181 = arith.divf %179, %180 : vector<8x128xf32>
    %182 = vector.extract_strided_slice %169 {offsets = [0, 256], sizes = [8, 128], strides = [1, 1]} : vector<8x512xf32> to vector<8x128xf32>
    %183 = math.tanh %182 : vector<8x128xf32>
    %184 = vector.extract_strided_slice %169 {offsets = [0, 384], sizes = [8, 128], strides = [1, 1]} : vector<8x512xf32> to vector<8x128xf32>
    %185 = arith.negf %184 : vector<8x128xf32>
    %186 = math.exp %185 : vector<8x128xf32>
    %cst_59 = arith.constant 1.000000e+00 : f32
    %187 = vector.broadcast %cst_59 : f32 to vector<8x128xf32>
    %188 = arith.addf %187, %186 : vector<8x128xf32>
    %189 = arith.divf %187, %188 : vector<8x128xf32>
    %190 = arith.mulf %181, %156 : vector<8x128xf32>
    %191 = arith.mulf %175, %183 : vector<8x128xf32>
    %192 = arith.addf %190, %191 : vector<8x128xf32>
    %193 = math.tanh %192 : vector<8x128xf32>
    %194 = arith.mulf %189, %193 : vector<8x128xf32>
    %195 = arith.truncf %194 : vector<8x128xf32> to vector<8x128xbf16>
    %196 = arith.index_cast %c4_i32 : i32 to index
    %c0_60 = arith.constant 0 : index
    %c0_61 = arith.constant 0 : index
    %197 = vector.load %arg10[%196, %c0_60, %c0_61] : memref<8x8x128xbf16, #tpu.memory_space<vmem>>, vector<1x8x128xbf16>
    %198 = vector.shape_cast %197 : vector<1x8x128xbf16> to vector<8x128xbf16>
    %199 = vector.shape_cast %195 : vector<8x128xbf16> to vector<1x8x128xbf16>
    tpu.vector_store %arg10[%196, %c0_60, %c0_61], %199 {strides = array<i32>} : memref<8x8x128xbf16, #tpu.memory_space<vmem>>, vector<1x8x128xbf16>,
    %c5_i32 = arith.constant 5 : i32
    %200 = arith.index_cast %c5_i32 : i32 to index
    %c0_62 = arith.constant 0 : index
    %c0_63 = arith.constant 0 : index
    %201 = vector.load %arg11[%200, %c0_62, %c0_63] : memref<8x8x512xf32, #tpu.memory_space<vmem>>, vector<1x8x512xf32>
    %202 = vector.shape_cast %201 : vector<1x8x512xf32> to vector<8x512xf32>
    %203 = arith.truncf %194 : vector<8x128xf32> to vector<8x128xbf16>
    %cst_64 = arith.constant dense<0.000000e+00> : vector<8x512xf32>
    %204 = tpu.matmul %203, %4, %cst_64 {dimension_numbers = #tpu.dot_dimension_numbers<[1], [0], [0], [1], [0, 0, 1, 1], [], []>} : vector<8x128xbf16>, vector<128x512xbf16>, vector<8x512xf32> -> vector<8x512xf32>
    %205 = arith.addf %202, %204 : vector<8x512xf32>
    %206 = vector.extract_strided_slice %205 {offsets = [0, 0], sizes = [8, 128], strides = [1, 1]} : vector<8x512xf32> to vector<8x128xf32>
    %207 = arith.negf %206 : vector<8x128xf32>
    %208 = math.exp %207 : vector<8x128xf32>
    %cst_65 = arith.constant 1.000000e+00 : f32
    %209 = vector.broadcast %cst_65 : f32 to vector<8x128xf32>
    %210 = arith.addf %209, %208 : vector<8x128xf32>
    %211 = arith.divf %209, %210 : vector<8x128xf32>
    %212 = vector.extract_strided_slice %205 {offsets = [0, 128], sizes = [8, 128], strides = [1, 1]} : vector<8x512xf32> to vector<8x128xf32>
    %213 = arith.negf %212 : vector<8x128xf32>
    %214 = math.exp %213 : vector<8x128xf32>
    %cst_66 = arith.constant 1.000000e+00 : f32
    %215 = vector.broadcast %cst_66 : f32 to vector<8x128xf32>
    %216 = arith.addf %215, %214 : vector<8x128xf32>
    %217 = arith.divf %215, %216 : vector<8x128xf32>
    %218 = vector.extract_strided_slice %205 {offsets = [0, 256], sizes = [8, 128], strides = [1, 1]} : vector<8x512xf32> to vector<8x128xf32>
    %219 = math.tanh %218 : vector<8x128xf32>
    %220 = vector.extract_strided_slice %205 {offsets = [0, 384], sizes = [8, 128], strides = [1, 1]} : vector<8x512xf32> to vector<8x128xf32>
    %221 = arith.negf %220 : vector<8x128xf32>
    %222 = math.exp %221 : vector<8x128xf32>
    %cst_67 = arith.constant 1.000000e+00 : f32
    %223 = vector.broadcast %cst_67 : f32 to vector<8x128xf32>
    %224 = arith.addf %223, %222 : vector<8x128xf32>
    %225 = arith.divf %223, %224 : vector<8x128xf32>
    %226 = arith.mulf %217, %192 : vector<8x128xf32>
    %227 = arith.mulf %211, %219 : vector<8x128xf32>
    %228 = arith.addf %226, %227 : vector<8x128xf32>
    %229 = math.tanh %228 : vector<8x128xf32>
    %230 = arith.mulf %225, %229 : vector<8x128xf32>
    %231 = arith.truncf %230 : vector<8x128xf32> to vector<8x128xbf16>
    %232 = arith.index_cast %c5_i32 : i32 to index
    %c0_68 = arith.constant 0 : index
    %c0_69 = arith.constant 0 : index
    %233 = vector.load %arg10[%232, %c0_68, %c0_69] : memref<8x8x128xbf16, #tpu.memory_space<vmem>>, vector<1x8x128xbf16>
    %234 = vector.shape_cast %233 : vector<1x8x128xbf16> to vector<8x128xbf16>
    %235 = vector.shape_cast %231 : vector<8x128xbf16> to vector<1x8x128xbf16>
    tpu.vector_store %arg10[%232, %c0_68, %c0_69], %235 {strides = array<i32>} : memref<8x8x128xbf16, #tpu.memory_space<vmem>>, vector<1x8x128xbf16>,
    %c6_i32 = arith.constant 6 : i32
    %236 = arith.index_cast %c6_i32 : i32 to index
    %c0_70 = arith.constant 0 : index
    %c0_71 = arith.constant 0 : index
    %237 = vector.load %arg11[%236, %c0_70, %c0_71] : memref<8x8x512xf32, #tpu.memory_space<vmem>>, vector<1x8x512xf32>
    %238 = vector.shape_cast %237 : vector<1x8x512xf32> to vector<8x512xf32>
    %239 = arith.truncf %230 : vector<8x128xf32> to vector<8x128xbf16>
    %cst_72 = arith.constant dense<0.000000e+00> : vector<8x512xf32>
    %240 = tpu.matmul %239, %4, %cst_72 {dimension_numbers = #tpu.dot_dimension_numbers<[1], [0], [0], [1], [0, 0, 1, 1], [], []>} : vector<8x128xbf16>, vector<128x512xbf16>, vector<8x512xf32> -> vector<8x512xf32>
    %241 = arith.addf %238, %240 : vector<8x512xf32>
    %242 = vector.extract_strided_slice %241 {offsets = [0, 0], sizes = [8, 128], strides = [1, 1]} : vector<8x512xf32> to vector<8x128xf32>
    %243 = arith.negf %242 : vector<8x128xf32>
    %244 = math.exp %243 : vector<8x128xf32>
    %cst_73 = arith.constant 1.000000e+00 : f32
    %245 = vector.broadcast %cst_73 : f32 to vector<8x128xf32>
    %246 = arith.addf %245, %244 : vector<8x128xf32>
    %247 = arith.divf %245, %246 : vector<8x128xf32>
    %248 = vector.extract_strided_slice %241 {offsets = [0, 128], sizes = [8, 128], strides = [1, 1]} : vector<8x512xf32> to vector<8x128xf32>
    %249 = arith.negf %248 : vector<8x128xf32>
    %250 = math.exp %249 : vector<8x128xf32>
    %cst_74 = arith.constant 1.000000e+00 : f32
    %251 = vector.broadcast %cst_74 : f32 to vector<8x128xf32>
    %252 = arith.addf %251, %250 : vector<8x128xf32>
    %253 = arith.divf %251, %252 : vector<8x128xf32>
    %254 = vector.extract_strided_slice %241 {offsets = [0, 256], sizes = [8, 128], strides = [1, 1]} : vector<8x512xf32> to vector<8x128xf32>
    %255 = math.tanh %254 : vector<8x128xf32>
    %256 = vector.extract_strided_slice %241 {offsets = [0, 384], sizes = [8, 128], strides = [1, 1]} : vector<8x512xf32> to vector<8x128xf32>
    %257 = arith.negf %256 : vector<8x128xf32>
    %258 = math.exp %257 : vector<8x128xf32>
    %cst_75 = arith.constant 1.000000e+00 : f32
    %259 = vector.broadcast %cst_75 : f32 to vector<8x128xf32>
    %260 = arith.addf %259, %258 : vector<8x128xf32>
    %261 = arith.divf %259, %260 : vector<8x128xf32>
    %262 = arith.mulf %253, %228 : vector<8x128xf32>
    %263 = arith.mulf %247, %255 : vector<8x128xf32>
    %264 = arith.addf %262, %263 : vector<8x128xf32>
    %265 = math.tanh %264 : vector<8x128xf32>
    %266 = arith.mulf %261, %265 : vector<8x128xf32>
    %267 = arith.truncf %266 : vector<8x128xf32> to vector<8x128xbf16>
    %268 = arith.index_cast %c6_i32 : i32 to index
    %c0_76 = arith.constant 0 : index
    %c0_77 = arith.constant 0 : index
    %269 = vector.load %arg10[%268, %c0_76, %c0_77] : memref<8x8x128xbf16, #tpu.memory_space<vmem>>, vector<1x8x128xbf16>
    %270 = vector.shape_cast %269 : vector<1x8x128xbf16> to vector<8x128xbf16>
    %271 = vector.shape_cast %267 : vector<8x128xbf16> to vector<1x8x128xbf16>
    tpu.vector_store %arg10[%268, %c0_76, %c0_77], %271 {strides = array<i32>} : memref<8x8x128xbf16, #tpu.memory_space<vmem>>, vector<1x8x128xbf16>,
    %c7_i32 = arith.constant 7 : i32
    %272 = arith.index_cast %c7_i32 : i32 to index
    %c0_78 = arith.constant 0 : index
    %c0_79 = arith.constant 0 : index
    %273 = vector.load %arg11[%272, %c0_78, %c0_79] : memref<8x8x512xf32, #tpu.memory_space<vmem>>, vector<1x8x512xf32>
    %274 = vector.shape_cast %273 : vector<1x8x512xf32> to vector<8x512xf32>
    %275 = arith.truncf %266 : vector<8x128xf32> to vector<8x128xbf16>
    %cst_80 = arith.constant dense<0.000000e+00> : vector<8x512xf32>
    %276 = tpu.matmul %275, %4, %cst_80 {dimension_numbers = #tpu.dot_dimension_numbers<[1], [0], [0], [1], [0, 0, 1, 1], [], []>} : vector<8x128xbf16>, vector<128x512xbf16>, vector<8x512xf32> -> vector<8x512xf32>
    %277 = arith.addf %274, %276 : vector<8x512xf32>
    %278 = vector.extract_strided_slice %277 {offsets = [0, 0], sizes = [8, 128], strides = [1, 1]} : vector<8x512xf32> to vector<8x128xf32>
    %279 = arith.negf %278 : vector<8x128xf32>
    %280 = math.exp %279 : vector<8x128xf32>
    %cst_81 = arith.constant 1.000000e+00 : f32
    %281 = vector.broadcast %cst_81 : f32 to vector<8x128xf32>
    %282 = arith.addf %281, %280 : vector<8x128xf32>
    %283 = arith.divf %281, %282 : vector<8x128xf32>
    %284 = vector.extract_strided_slice %277 {offsets = [0, 128], sizes = [8, 128], strides = [1, 1]} : vector<8x512xf32> to vector<8x128xf32>
    %285 = arith.negf %284 : vector<8x128xf32>
    %286 = math.exp %285 : vector<8x128xf32>
    %cst_82 = arith.constant 1.000000e+00 : f32
    %287 = vector.broadcast %cst_82 : f32 to vector<8x128xf32>
    %288 = arith.addf %287, %286 : vector<8x128xf32>
    %289 = arith.divf %287, %288 : vector<8x128xf32>
    %290 = vector.extract_strided_slice %277 {offsets = [0, 256], sizes = [8, 128], strides = [1, 1]} : vector<8x512xf32> to vector<8x128xf32>
    %291 = math.tanh %290 : vector<8x128xf32>
    %292 = vector.extract_strided_slice %277 {offsets = [0, 384], sizes = [8, 128], strides = [1, 1]} : vector<8x512xf32> to vector<8x128xf32>
    %293 = arith.negf %292 : vector<8x128xf32>
    %294 = math.exp %293 : vector<8x128xf32>
    %cst_83 = arith.constant 1.000000e+00 : f32
    %295 = vector.broadcast %cst_83 : f32 to vector<8x128xf32>
    %296 = arith.addf %295, %294 : vector<8x128xf32>
    %297 = arith.divf %295, %296 : vector<8x128xf32>
    %298 = arith.mulf %289, %264 : vector<8x128xf32>
    %299 = arith.mulf %283, %291 : vector<8x128xf32>
    %300 = arith.addf %298, %299 : vector<8x128xf32>
    %301 = math.tanh %300 : vector<8x128xf32>
    %302 = arith.mulf %297, %301 : vector<8x128xf32>
    %303 = arith.truncf %302 : vector<8x128xf32> to vector<8x128xbf16>
    %304 = arith.index_cast %c7_i32 : i32 to index
    %c0_84 = arith.constant 0 : index
    %c0_85 = arith.constant 0 : index
    %305 = vector.load %arg10[%304, %c0_84, %c0_85] : memref<8x8x128xbf16, #tpu.memory_space<vmem>>, vector<1x8x128xbf16>
    %306 = vector.shape_cast %305 : vector<1x8x128xbf16> to vector<8x128xbf16>
    %307 = vector.shape_cast %303 : vector<8x128xbf16> to vector<1x8x128xbf16>
    tpu.vector_store %arg10[%304, %c0_84, %c0_85], %307 {strides = array<i32>} : memref<8x8x128xbf16, #tpu.memory_space<vmem>>, vector<1x8x128xbf16>,
    %c8_i32 = arith.constant 8 : i32
    %c0_86 = arith.constant 0 : index
    %c0_87 = arith.constant 0 : index
    %c0_88 = arith.constant 0 : index
    %308 = vector.load %arg8[%c0_86, %c0_87, %c0_88] : memref<2x8x128xf32, #tpu.memory_space<vmem>>, vector<1x8x128xf32>
    %309 = vector.shape_cast %308 : vector<1x8x128xf32> to vector<8x128xf32>
    %310 = vector.shape_cast %302 : vector<8x128xf32> to vector<1x8x128xf32>
    tpu.vector_store %arg8[%c0_86, %c0_87, %c0_88], %310 {strides = array<i32>} : memref<2x8x128xf32, #tpu.memory_space<vmem>>, vector<1x8x128xf32>,
    %c0_89 = arith.constant 0 : index
    %c0_90 = arith.constant 0 : index
    %c0_91 = arith.constant 0 : index
    %311 = vector.load %arg9[%c0_89, %c0_90, %c0_91] : memref<2x8x128xf32, #tpu.memory_space<vmem>>, vector<1x8x128xf32>
    %312 = vector.shape_cast %311 : vector<1x8x128xf32> to vector<8x128xf32>
    %313 = vector.shape_cast %300 : vector<8x128xf32> to vector<1x8x128xf32>
    tpu.vector_store %arg9[%c0_89, %c0_90, %c0_91], %313 {strides = array<i32>} : memref<2x8x128xf32, #tpu.memory_space<vmem>>, vector<1x8x128xf32>,
    %c1 = arith.constant 1 : index
    %c0_92 = arith.constant 0 : index
    %c0_93 = arith.constant 0 : index
    %314 = vector.load %arg5[%c1, %c0_92, %c0_93] : memref<2x128x512xbf16, #tpu.memory_space<vmem>>, vector<1x128x512xbf16>
    %315 = vector.shape_cast %314 : vector<1x128x512xbf16> to vector<128x512xbf16>
    %c1_94 = arith.constant 1 : index
    %c0_95 = arith.constant 0 : index
    %c0_96 = arith.constant 0 : index
    %316 = vector.load %arg6[%c1_94, %c0_95, %c0_96] : memref<2x1x512xf32, #tpu.memory_space<vmem>>, vector<1x1x512xf32>
    %317 = vector.shape_cast %316 : vector<1x1x512xf32> to vector<1x512xf32>
    %c0_97 = arith.constant 0 : index
    %c0_98 = arith.constant 0 : index
    %c0_99 = arith.constant 0 : index
    %318 = vector.load %arg10[%c0_97, %c0_98, %c0_99] : memref<8x8x128xbf16, #tpu.memory_space<vmem>>, vector<8x8x128xbf16>
    %319 = vector.shape_cast %318 : vector<8x8x128xbf16> to vector<64x128xbf16>
    %c1_100 = arith.constant 1 : index
    %c0_101 = arith.constant 0 : index
    %c0_102 = arith.constant 0 : index
    %320 = vector.load %arg4[%c1_100, %c0_101, %c0_102] : memref<2x128x512xbf16, #tpu.memory_space<vmem>>, vector<1x128x512xbf16>
    %321 = vector.shape_cast %320 : vector<1x128x512xbf16> to vector<128x512xbf16>
    %cst_103 = arith.constant dense<0.000000e+00> : vector<64x512xf32>
    %322 = tpu.matmul %319, %321, %cst_103 {dimension_numbers = #tpu.dot_dimension_numbers<[1], [0], [0], [1], [0, 0, 1, 1], [], []>} : vector<64x128xbf16>, vector<128x512xbf16>, vector<64x512xf32> -> vector<64x512xf32>
    %323 = vector.broadcast %317 : vector<1x512xf32> to vector<64x512xf32>
    %324 = arith.addf %322, %323 : vector<64x512xf32>
    %325 = vector.shape_cast %324 : vector<64x512xf32> to vector<8x8x512xf32>
    %c0_104 = arith.constant 0 : index
    %c0_105 = arith.constant 0 : index
    %c0_106 = arith.constant 0 : index
    %326 = vector.load %arg11[%c0_104, %c0_105, %c0_106] : memref<8x8x512xf32, #tpu.memory_space<vmem>>, vector<8x8x512xf32>
    tpu.vector_store %arg11[%c0_104, %c0_105, %c0_106], %325 {strides = array<i32>} : memref<8x8x512xf32, #tpu.memory_space<vmem>>, vector<8x8x512xf32>,
    %c1_107 = arith.constant 1 : index
    %c0_108 = arith.constant 0 : index
    %c0_109 = arith.constant 0 : index
    %327 = vector.load %arg8[%c1_107, %c0_108, %c0_109] : memref<2x8x128xf32, #tpu.memory_space<vmem>>, vector<1x8x128xf32>
    %328 = vector.shape_cast %327 : vector<1x8x128xf32> to vector<8x128xf32>
    %c1_110 = arith.constant 1 : index
    %c0_111 = arith.constant 0 : index
    %c0_112 = arith.constant 0 : index
    %329 = vector.load %arg9[%c1_110, %c0_111, %c0_112] : memref<2x8x128xf32, #tpu.memory_space<vmem>>, vector<1x8x128xf32>
    %330 = vector.shape_cast %329 : vector<1x8x128xf32> to vector<8x128xf32>
    %c0_i32_113 = arith.constant 0 : i32
    %331 = arith.index_cast %c0_i32_113 : i32 to index
    %c0_114 = arith.constant 0 : index
    %c0_115 = arith.constant 0 : index
    %332 = vector.load %arg11[%331, %c0_114, %c0_115] : memref<8x8x512xf32, #tpu.memory_space<vmem>>, vector<1x8x512xf32>
    %333 = vector.shape_cast %332 : vector<1x8x512xf32> to vector<8x512xf32>
    %334 = arith.truncf %328 : vector<8x128xf32> to vector<8x128xbf16>
    %cst_116 = arith.constant dense<0.000000e+00> : vector<8x512xf32>
    %335 = tpu.matmul %334, %315, %cst_116 {dimension_numbers = #tpu.dot_dimension_numbers<[1], [0], [0], [1], [0, 0, 1, 1], [], []>} : vector<8x128xbf16>, vector<128x512xbf16>, vector<8x512xf32> -> vector<8x512xf32>
    %336 = arith.addf %333, %335 : vector<8x512xf32>
    %337 = vector.extract_strided_slice %336 {offsets = [0, 0], sizes = [8, 128], strides = [1, 1]} : vector<8x512xf32> to vector<8x128xf32>
    %338 = arith.negf %337 : vector<8x128xf32>
    %339 = math.exp %338 : vector<8x128xf32>
    %cst_117 = arith.constant 1.000000e+00 : f32
    %340 = vector.broadcast %cst_117 : f32 to vector<8x128xf32>
    %341 = arith.addf %340, %339 : vector<8x128xf32>
    %342 = arith.divf %340, %341 : vector<8x128xf32>
    %343 = vector.extract_strided_slice %336 {offsets = [0, 128], sizes = [8, 128], strides = [1, 1]} : vector<8x512xf32> to vector<8x128xf32>
    %344 = arith.negf %343 : vector<8x128xf32>
    %345 = math.exp %344 : vector<8x128xf32>
    %cst_118 = arith.constant 1.000000e+00 : f32
    %346 = vector.broadcast %cst_118 : f32 to vector<8x128xf32>
    %347 = arith.addf %346, %345 : vector<8x128xf32>
    %348 = arith.divf %346, %347 : vector<8x128xf32>
    %349 = vector.extract_strided_slice %336 {offsets = [0, 256], sizes = [8, 128], strides = [1, 1]} : vector<8x512xf32> to vector<8x128xf32>
    %350 = math.tanh %349 : vector<8x128xf32>
    %351 = vector.extract_strided_slice %336 {offsets = [0, 384], sizes = [8, 128], strides = [1, 1]} : vector<8x512xf32> to vector<8x128xf32>
    %352 = arith.negf %351 : vector<8x128xf32>
    %353 = math.exp %352 : vector<8x128xf32>
    %cst_119 = arith.constant 1.000000e+00 : f32
    %354 = vector.broadcast %cst_119 : f32 to vector<8x128xf32>
    %355 = arith.addf %354, %353 : vector<8x128xf32>
    %356 = arith.divf %354, %355 : vector<8x128xf32>
    %357 = arith.mulf %348, %330 : vector<8x128xf32>
    %358 = arith.mulf %342, %350 : vector<8x128xf32>
    %359 = arith.addf %357, %358 : vector<8x128xf32>
    %360 = math.tanh %359 : vector<8x128xf32>
    %361 = arith.mulf %356, %360 : vector<8x128xf32>
    %362 = arith.truncf %361 : vector<8x128xf32> to vector<8x128xbf16>
    %363 = arith.index_cast %c0_i32_113 : i32 to index
    %c0_120 = arith.constant 0 : index
    %c0_121 = arith.constant 0 : index
    %364 = vector.load %arg7[%363, %c0_120, %c0_121] : memref<8x8x128xbf16, #tpu.memory_space<vmem>>, vector<1x8x128xbf16>
    %365 = vector.shape_cast %364 : vector<1x8x128xbf16> to vector<8x128xbf16>
    %366 = vector.shape_cast %362 : vector<8x128xbf16> to vector<1x8x128xbf16>
    tpu.vector_store %arg7[%363, %c0_120, %c0_121], %366 {strides = array<i32>} : memref<8x8x128xbf16, #tpu.memory_space<vmem>>, vector<1x8x128xbf16>,
    %c1_i32_122 = arith.constant 1 : i32
    %367 = arith.index_cast %c1_i32_122 : i32 to index
    %c0_123 = arith.constant 0 : index
    %c0_124 = arith.constant 0 : index
    %368 = vector.load %arg11[%367, %c0_123, %c0_124] : memref<8x8x512xf32, #tpu.memory_space<vmem>>, vector<1x8x512xf32>
    %369 = vector.shape_cast %368 : vector<1x8x512xf32> to vector<8x512xf32>
    %370 = arith.truncf %361 : vector<8x128xf32> to vector<8x128xbf16>
    %cst_125 = arith.constant dense<0.000000e+00> : vector<8x512xf32>
    %371 = tpu.matmul %370, %315, %cst_125 {dimension_numbers = #tpu.dot_dimension_numbers<[1], [0], [0], [1], [0, 0, 1, 1], [], []>} : vector<8x128xbf16>, vector<128x512xbf16>, vector<8x512xf32> -> vector<8x512xf32>
    %372 = arith.addf %369, %371 : vector<8x512xf32>
    %373 = vector.extract_strided_slice %372 {offsets = [0, 0], sizes = [8, 128], strides = [1, 1]} : vector<8x512xf32> to vector<8x128xf32>
    %374 = arith.negf %373 : vector<8x128xf32>
    %375 = math.exp %374 : vector<8x128xf32>
    %cst_126 = arith.constant 1.000000e+00 : f32
    %376 = vector.broadcast %cst_126 : f32 to vector<8x128xf32>
    %377 = arith.addf %376, %375 : vector<8x128xf32>
    %378 = arith.divf %376, %377 : vector<8x128xf32>
    %379 = vector.extract_strided_slice %372 {offsets = [0, 128], sizes = [8, 128], strides = [1, 1]} : vector<8x512xf32> to vector<8x128xf32>
    %380 = arith.negf %379 : vector<8x128xf32>
    %381 = math.exp %380 : vector<8x128xf32>
    %cst_127 = arith.constant 1.000000e+00 : f32
    %382 = vector.broadcast %cst_127 : f32 to vector<8x128xf32>
    %383 = arith.addf %382, %381 : vector<8x128xf32>
    %384 = arith.divf %382, %383 : vector<8x128xf32>
    %385 = vector.extract_strided_slice %372 {offsets = [0, 256], sizes = [8, 128], strides = [1, 1]} : vector<8x512xf32> to vector<8x128xf32>
    %386 = math.tanh %385 : vector<8x128xf32>
    %387 = vector.extract_strided_slice %372 {offsets = [0, 384], sizes = [8, 128], strides = [1, 1]} : vector<8x512xf32> to vector<8x128xf32>
    %388 = arith.negf %387 : vector<8x128xf32>
    %389 = math.exp %388 : vector<8x128xf32>
    %cst_128 = arith.constant 1.000000e+00 : f32
    %390 = vector.broadcast %cst_128 : f32 to vector<8x128xf32>
    %391 = arith.addf %390, %389 : vector<8x128xf32>
    %392 = arith.divf %390, %391 : vector<8x128xf32>
    %393 = arith.mulf %384, %359 : vector<8x128xf32>
    %394 = arith.mulf %378, %386 : vector<8x128xf32>
    %395 = arith.addf %393, %394 : vector<8x128xf32>
    %396 = math.tanh %395 : vector<8x128xf32>
    %397 = arith.mulf %392, %396 : vector<8x128xf32>
    %398 = arith.truncf %397 : vector<8x128xf32> to vector<8x128xbf16>
    %399 = arith.index_cast %c1_i32_122 : i32 to index
    %c0_129 = arith.constant 0 : index
    %c0_130 = arith.constant 0 : index
    %400 = vector.load %arg7[%399, %c0_129, %c0_130] : memref<8x8x128xbf16, #tpu.memory_space<vmem>>, vector<1x8x128xbf16>
    %401 = vector.shape_cast %400 : vector<1x8x128xbf16> to vector<8x128xbf16>
    %402 = vector.shape_cast %398 : vector<8x128xbf16> to vector<1x8x128xbf16>
    tpu.vector_store %arg7[%399, %c0_129, %c0_130], %402 {strides = array<i32>} : memref<8x8x128xbf16, #tpu.memory_space<vmem>>, vector<1x8x128xbf16>,
    %c2_i32_131 = arith.constant 2 : i32
    %403 = arith.index_cast %c2_i32_131 : i32 to index
    %c0_132 = arith.constant 0 : index
    %c0_133 = arith.constant 0 : index
    %404 = vector.load %arg11[%403, %c0_132, %c0_133] : memref<8x8x512xf32, #tpu.memory_space<vmem>>, vector<1x8x512xf32>
    %405 = vector.shape_cast %404 : vector<1x8x512xf32> to vector<8x512xf32>
    %406 = arith.truncf %397 : vector<8x128xf32> to vector<8x128xbf16>
    %cst_134 = arith.constant dense<0.000000e+00> : vector<8x512xf32>
    %407 = tpu.matmul %406, %315, %cst_134 {dimension_numbers = #tpu.dot_dimension_numbers<[1], [0], [0], [1], [0, 0, 1, 1], [], []>} : vector<8x128xbf16>, vector<128x512xbf16>, vector<8x512xf32> -> vector<8x512xf32>
    %408 = arith.addf %405, %407 : vector<8x512xf32>
    %409 = vector.extract_strided_slice %408 {offsets = [0, 0], sizes = [8, 128], strides = [1, 1]} : vector<8x512xf32> to vector<8x128xf32>
    %410 = arith.negf %409 : vector<8x128xf32>
    %411 = math.exp %410 : vector<8x128xf32>
    %cst_135 = arith.constant 1.000000e+00 : f32
    %412 = vector.broadcast %cst_135 : f32 to vector<8x128xf32>
    %413 = arith.addf %412, %411 : vector<8x128xf32>
    %414 = arith.divf %412, %413 : vector<8x128xf32>
    %415 = vector.extract_strided_slice %408 {offsets = [0, 128], sizes = [8, 128], strides = [1, 1]} : vector<8x512xf32> to vector<8x128xf32>
    %416 = arith.negf %415 : vector<8x128xf32>
    %417 = math.exp %416 : vector<8x128xf32>
    %cst_136 = arith.constant 1.000000e+00 : f32
    %418 = vector.broadcast %cst_136 : f32 to vector<8x128xf32>
    %419 = arith.addf %418, %417 : vector<8x128xf32>
    %420 = arith.divf %418, %419 : vector<8x128xf32>
    %421 = vector.extract_strided_slice %408 {offsets = [0, 256], sizes = [8, 128], strides = [1, 1]} : vector<8x512xf32> to vector<8x128xf32>
    %422 = math.tanh %421 : vector<8x128xf32>
    %423 = vector.extract_strided_slice %408 {offsets = [0, 384], sizes = [8, 128], strides = [1, 1]} : vector<8x512xf32> to vector<8x128xf32>
    %424 = arith.negf %423 : vector<8x128xf32>
    %425 = math.exp %424 : vector<8x128xf32>
    %cst_137 = arith.constant 1.000000e+00 : f32
    %426 = vector.broadcast %cst_137 : f32 to vector<8x128xf32>
    %427 = arith.addf %426, %425 : vector<8x128xf32>
    %428 = arith.divf %426, %427 : vector<8x128xf32>
    %429 = arith.mulf %420, %395 : vector<8x128xf32>
    %430 = arith.mulf %414, %422 : vector<8x128xf32>
    %431 = arith.addf %429, %430 : vector<8x128xf32>
    %432 = math.tanh %431 : vector<8x128xf32>
    %433 = arith.mulf %428, %432 : vector<8x128xf32>
    %434 = arith.truncf %433 : vector<8x128xf32> to vector<8x128xbf16>
    %435 = arith.index_cast %c2_i32_131 : i32 to index
    %c0_138 = arith.constant 0 : index
    %c0_139 = arith.constant 0 : index
    %436 = vector.load %arg7[%435, %c0_138, %c0_139] : memref<8x8x128xbf16, #tpu.memory_space<vmem>>, vector<1x8x128xbf16>
    %437 = vector.shape_cast %436 : vector<1x8x128xbf16> to vector<8x128xbf16>
    %438 = vector.shape_cast %434 : vector<8x128xbf16> to vector<1x8x128xbf16>
    tpu.vector_store %arg7[%435, %c0_138, %c0_139], %438 {strides = array<i32>} : memref<8x8x128xbf16, #tpu.memory_space<vmem>>, vector<1x8x128xbf16>,
    %c3_i32_140 = arith.constant 3 : i32
    %439 = arith.index_cast %c3_i32_140 : i32 to index
    %c0_141 = arith.constant 0 : index
    %c0_142 = arith.constant 0 : index
    %440 = vector.load %arg11[%439, %c0_141, %c0_142] : memref<8x8x512xf32, #tpu.memory_space<vmem>>, vector<1x8x512xf32>
    %441 = vector.shape_cast %440 : vector<1x8x512xf32> to vector<8x512xf32>
    %442 = arith.truncf %433 : vector<8x128xf32> to vector<8x128xbf16>
    %cst_143 = arith.constant dense<0.000000e+00> : vector<8x512xf32>
    %443 = tpu.matmul %442, %315, %cst_143 {dimension_numbers = #tpu.dot_dimension_numbers<[1], [0], [0], [1], [0, 0, 1, 1], [], []>} : vector<8x128xbf16>, vector<128x512xbf16>, vector<8x512xf32> -> vector<8x512xf32>
    %444 = arith.addf %441, %443 : vector<8x512xf32>
    %445 = vector.extract_strided_slice %444 {offsets = [0, 0], sizes = [8, 128], strides = [1, 1]} : vector<8x512xf32> to vector<8x128xf32>
    %446 = arith.negf %445 : vector<8x128xf32>
    %447 = math.exp %446 : vector<8x128xf32>
    %cst_144 = arith.constant 1.000000e+00 : f32
    %448 = vector.broadcast %cst_144 : f32 to vector<8x128xf32>
    %449 = arith.addf %448, %447 : vector<8x128xf32>
    %450 = arith.divf %448, %449 : vector<8x128xf32>
    %451 = vector.extract_strided_slice %444 {offsets = [0, 128], sizes = [8, 128], strides = [1, 1]} : vector<8x512xf32> to vector<8x128xf32>
    %452 = arith.negf %451 : vector<8x128xf32>
    %453 = math.exp %452 : vector<8x128xf32>
    %cst_145 = arith.constant 1.000000e+00 : f32
    %454 = vector.broadcast %cst_145 : f32 to vector<8x128xf32>
    %455 = arith.addf %454, %453 : vector<8x128xf32>
    %456 = arith.divf %454, %455 : vector<8x128xf32>
    %457 = vector.extract_strided_slice %444 {offsets = [0, 256], sizes = [8, 128], strides = [1, 1]} : vector<8x512xf32> to vector<8x128xf32>
    %458 = math.tanh %457 : vector<8x128xf32>
    %459 = vector.extract_strided_slice %444 {offsets = [0, 384], sizes = [8, 128], strides = [1, 1]} : vector<8x512xf32> to vector<8x128xf32>
    %460 = arith.negf %459 : vector<8x128xf32>
    %461 = math.exp %460 : vector<8x128xf32>
    %cst_146 = arith.constant 1.000000e+00 : f32
    %462 = vector.broadcast %cst_146 : f32 to vector<8x128xf32>
    %463 = arith.addf %462, %461 : vector<8x128xf32>
    %464 = arith.divf %462, %463 : vector<8x128xf32>
    %465 = arith.mulf %456, %431 : vector<8x128xf32>
    %466 = arith.mulf %450, %458 : vector<8x128xf32>
    %467 = arith.addf %465, %466 : vector<8x128xf32>
    %468 = math.tanh %467 : vector<8x128xf32>
    %469 = arith.mulf %464, %468 : vector<8x128xf32>
    %470 = arith.truncf %469 : vector<8x128xf32> to vector<8x128xbf16>
    %471 = arith.index_cast %c3_i32_140 : i32 to index
    %c0_147 = arith.constant 0 : index
    %c0_148 = arith.constant 0 : index
    %472 = vector.load %arg7[%471, %c0_147, %c0_148] : memref<8x8x128xbf16, #tpu.memory_space<vmem>>, vector<1x8x128xbf16>
    %473 = vector.shape_cast %472 : vector<1x8x128xbf16> to vector<8x128xbf16>
    %474 = vector.shape_cast %470 : vector<8x128xbf16> to vector<1x8x128xbf16>
    tpu.vector_store %arg7[%471, %c0_147, %c0_148], %474 {strides = array<i32>} : memref<8x8x128xbf16, #tpu.memory_space<vmem>>, vector<1x8x128xbf16>,
    %c4_i32_149 = arith.constant 4 : i32
    %475 = arith.index_cast %c4_i32_149 : i32 to index
    %c0_150 = arith.constant 0 : index
    %c0_151 = arith.constant 0 : index
    %476 = vector.load %arg11[%475, %c0_150, %c0_151] : memref<8x8x512xf32, #tpu.memory_space<vmem>>, vector<1x8x512xf32>
    %477 = vector.shape_cast %476 : vector<1x8x512xf32> to vector<8x512xf32>
    %478 = arith.truncf %469 : vector<8x128xf32> to vector<8x128xbf16>
    %cst_152 = arith.constant dense<0.000000e+00> : vector<8x512xf32>
    %479 = tpu.matmul %478, %315, %cst_152 {dimension_numbers = #tpu.dot_dimension_numbers<[1], [0], [0], [1], [0, 0, 1, 1], [], []>} : vector<8x128xbf16>, vector<128x512xbf16>, vector<8x512xf32> -> vector<8x512xf32>
    %480 = arith.addf %477, %479 : vector<8x512xf32>
    %481 = vector.extract_strided_slice %480 {offsets = [0, 0], sizes = [8, 128], strides = [1, 1]} : vector<8x512xf32> to vector<8x128xf32>
    %482 = arith.negf %481 : vector<8x128xf32>
    %483 = math.exp %482 : vector<8x128xf32>
    %cst_153 = arith.constant 1.000000e+00 : f32
    %484 = vector.broadcast %cst_153 : f32 to vector<8x128xf32>
    %485 = arith.addf %484, %483 : vector<8x128xf32>
    %486 = arith.divf %484, %485 : vector<8x128xf32>
    %487 = vector.extract_strided_slice %480 {offsets = [0, 128], sizes = [8, 128], strides = [1, 1]} : vector<8x512xf32> to vector<8x128xf32>
    %488 = arith.negf %487 : vector<8x128xf32>
    %489 = math.exp %488 : vector<8x128xf32>
    %cst_154 = arith.constant 1.000000e+00 : f32
    %490 = vector.broadcast %cst_154 : f32 to vector<8x128xf32>
    %491 = arith.addf %490, %489 : vector<8x128xf32>
    %492 = arith.divf %490, %491 : vector<8x128xf32>
    %493 = vector.extract_strided_slice %480 {offsets = [0, 256], sizes = [8, 128], strides = [1, 1]} : vector<8x512xf32> to vector<8x128xf32>
    %494 = math.tanh %493 : vector<8x128xf32>
    %495 = vector.extract_strided_slice %480 {offsets = [0, 384], sizes = [8, 128], strides = [1, 1]} : vector<8x512xf32> to vector<8x128xf32>
    %496 = arith.negf %495 : vector<8x128xf32>
    %497 = math.exp %496 : vector<8x128xf32>
    %cst_155 = arith.constant 1.000000e+00 : f32
    %498 = vector.broadcast %cst_155 : f32 to vector<8x128xf32>
    %499 = arith.addf %498, %497 : vector<8x128xf32>
    %500 = arith.divf %498, %499 : vector<8x128xf32>
    %501 = arith.mulf %492, %467 : vector<8x128xf32>
    %502 = arith.mulf %486, %494 : vector<8x128xf32>
    %503 = arith.addf %501, %502 : vector<8x128xf32>
    %504 = math.tanh %503 : vector<8x128xf32>
    %505 = arith.mulf %500, %504 : vector<8x128xf32>
    %506 = arith.truncf %505 : vector<8x128xf32> to vector<8x128xbf16>
    %507 = arith.index_cast %c4_i32_149 : i32 to index
    %c0_156 = arith.constant 0 : index
    %c0_157 = arith.constant 0 : index
    %508 = vector.load %arg7[%507, %c0_156, %c0_157] : memref<8x8x128xbf16, #tpu.memory_space<vmem>>, vector<1x8x128xbf16>
    %509 = vector.shape_cast %508 : vector<1x8x128xbf16> to vector<8x128xbf16>
    %510 = vector.shape_cast %506 : vector<8x128xbf16> to vector<1x8x128xbf16>
    tpu.vector_store %arg7[%507, %c0_156, %c0_157], %510 {strides = array<i32>} : memref<8x8x128xbf16, #tpu.memory_space<vmem>>, vector<1x8x128xbf16>,
    %c5_i32_158 = arith.constant 5 : i32
    %511 = arith.index_cast %c5_i32_158 : i32 to index
    %c0_159 = arith.constant 0 : index
    %c0_160 = arith.constant 0 : index
    %512 = vector.load %arg11[%511, %c0_159, %c0_160] : memref<8x8x512xf32, #tpu.memory_space<vmem>>, vector<1x8x512xf32>
    %513 = vector.shape_cast %512 : vector<1x8x512xf32> to vector<8x512xf32>
    %514 = arith.truncf %505 : vector<8x128xf32> to vector<8x128xbf16>
    %cst_161 = arith.constant dense<0.000000e+00> : vector<8x512xf32>
    %515 = tpu.matmul %514, %315, %cst_161 {dimension_numbers = #tpu.dot_dimension_numbers<[1], [0], [0], [1], [0, 0, 1, 1], [], []>} : vector<8x128xbf16>, vector<128x512xbf16>, vector<8x512xf32> -> vector<8x512xf32>
    %516 = arith.addf %513, %515 : vector<8x512xf32>
    %517 = vector.extract_strided_slice %516 {offsets = [0, 0], sizes = [8, 128], strides = [1, 1]} : vector<8x512xf32> to vector<8x128xf32>
    %518 = arith.negf %517 : vector<8x128xf32>
    %519 = math.exp %518 : vector<8x128xf32>
    %cst_162 = arith.constant 1.000000e+00 : f32
    %520 = vector.broadcast %cst_162 : f32 to vector<8x128xf32>
    %521 = arith.addf %520, %519 : vector<8x128xf32>
    %522 = arith.divf %520, %521 : vector<8x128xf32>
    %523 = vector.extract_strided_slice %516 {offsets = [0, 128], sizes = [8, 128], strides = [1, 1]} : vector<8x512xf32> to vector<8x128xf32>
    %524 = arith.negf %523 : vector<8x128xf32>
    %525 = math.exp %524 : vector<8x128xf32>
    %cst_163 = arith.constant 1.000000e+00 : f32
    %526 = vector.broadcast %cst_163 : f32 to vector<8x128xf32>
    %527 = arith.addf %526, %525 : vector<8x128xf32>
    %528 = arith.divf %526, %527 : vector<8x128xf32>
    %529 = vector.extract_strided_slice %516 {offsets = [0, 256], sizes = [8, 128], strides = [1, 1]} : vector<8x512xf32> to vector<8x128xf32>
    %530 = math.tanh %529 : vector<8x128xf32>
    %531 = vector.extract_strided_slice %516 {offsets = [0, 384], sizes = [8, 128], strides = [1, 1]} : vector<8x512xf32> to vector<8x128xf32>
    %532 = arith.negf %531 : vector<8x128xf32>
    %533 = math.exp %532 : vector<8x128xf32>
    %cst_164 = arith.constant 1.000000e+00 : f32
    %534 = vector.broadcast %cst_164 : f32 to vector<8x128xf32>
    %535 = arith.addf %534, %533 : vector<8x128xf32>
    %536 = arith.divf %534, %535 : vector<8x128xf32>
    %537 = arith.mulf %528, %503 : vector<8x128xf32>
    %538 = arith.mulf %522, %530 : vector<8x128xf32>
    %539 = arith.addf %537, %538 : vector<8x128xf32>
    %540 = math.tanh %539 : vector<8x128xf32>
    %541 = arith.mulf %536, %540 : vector<8x128xf32>
    %542 = arith.truncf %541 : vector<8x128xf32> to vector<8x128xbf16>
    %543 = arith.index_cast %c5_i32_158 : i32 to index
    %c0_165 = arith.constant 0 : index
    %c0_166 = arith.constant 0 : index
    %544 = vector.load %arg7[%543, %c0_165, %c0_166] : memref<8x8x128xbf16, #tpu.memory_space<vmem>>, vector<1x8x128xbf16>
    %545 = vector.shape_cast %544 : vector<1x8x128xbf16> to vector<8x128xbf16>
    %546 = vector.shape_cast %542 : vector<8x128xbf16> to vector<1x8x128xbf16>
    tpu.vector_store %arg7[%543, %c0_165, %c0_166], %546 {strides = array<i32>} : memref<8x8x128xbf16, #tpu.memory_space<vmem>>, vector<1x8x128xbf16>,
    %c6_i32_167 = arith.constant 6 : i32
    %547 = arith.index_cast %c6_i32_167 : i32 to index
    %c0_168 = arith.constant 0 : index
    %c0_169 = arith.constant 0 : index
    %548 = vector.load %arg11[%547, %c0_168, %c0_169] : memref<8x8x512xf32, #tpu.memory_space<vmem>>, vector<1x8x512xf32>
    %549 = vector.shape_cast %548 : vector<1x8x512xf32> to vector<8x512xf32>
    %550 = arith.truncf %541 : vector<8x128xf32> to vector<8x128xbf16>
    %cst_170 = arith.constant dense<0.000000e+00> : vector<8x512xf32>
    %551 = tpu.matmul %550, %315, %cst_170 {dimension_numbers = #tpu.dot_dimension_numbers<[1], [0], [0], [1], [0, 0, 1, 1], [], []>} : vector<8x128xbf16>, vector<128x512xbf16>, vector<8x512xf32> -> vector<8x512xf32>
    %552 = arith.addf %549, %551 : vector<8x512xf32>
    %553 = vector.extract_strided_slice %552 {offsets = [0, 0], sizes = [8, 128], strides = [1, 1]} : vector<8x512xf32> to vector<8x128xf32>
    %554 = arith.negf %553 : vector<8x128xf32>
    %555 = math.exp %554 : vector<8x128xf32>
    %cst_171 = arith.constant 1.000000e+00 : f32
    %556 = vector.broadcast %cst_171 : f32 to vector<8x128xf32>
    %557 = arith.addf %556, %555 : vector<8x128xf32>
    %558 = arith.divf %556, %557 : vector<8x128xf32>
    %559 = vector.extract_strided_slice %552 {offsets = [0, 128], sizes = [8, 128], strides = [1, 1]} : vector<8x512xf32> to vector<8x128xf32>
    %560 = arith.negf %559 : vector<8x128xf32>
    %561 = math.exp %560 : vector<8x128xf32>
    %cst_172 = arith.constant 1.000000e+00 : f32
    %562 = vector.broadcast %cst_172 : f32 to vector<8x128xf32>
    %563 = arith.addf %562, %561 : vector<8x128xf32>
    %564 = arith.divf %562, %563 : vector<8x128xf32>
    %565 = vector.extract_strided_slice %552 {offsets = [0, 256], sizes = [8, 128], strides = [1, 1]} : vector<8x512xf32> to vector<8x128xf32>
    %566 = math.tanh %565 : vector<8x128xf32>
    %567 = vector.extract_strided_slice %552 {offsets = [0, 384], sizes = [8, 128], strides = [1, 1]} : vector<8x512xf32> to vector<8x128xf32>
    %568 = arith.negf %567 : vector<8x128xf32>
    %569 = math.exp %568 : vector<8x128xf32>
    %cst_173 = arith.constant 1.000000e+00 : f32
    %570 = vector.broadcast %cst_173 : f32 to vector<8x128xf32>
    %571 = arith.addf %570, %569 : vector<8x128xf32>
    %572 = arith.divf %570, %571 : vector<8x128xf32>
    %573 = arith.mulf %564, %539 : vector<8x128xf32>
    %574 = arith.mulf %558, %566 : vector<8x128xf32>
    %575 = arith.addf %573, %574 : vector<8x128xf32>
    %576 = math.tanh %575 : vector<8x128xf32>
    %577 = arith.mulf %572, %576 : vector<8x128xf32>
    %578 = arith.truncf %577 : vector<8x128xf32> to vector<8x128xbf16>
    %579 = arith.index_cast %c6_i32_167 : i32 to index
    %c0_174 = arith.constant 0 : index
    %c0_175 = arith.constant 0 : index
    %580 = vector.load %arg7[%579, %c0_174, %c0_175] : memref<8x8x128xbf16, #tpu.memory_space<vmem>>, vector<1x8x128xbf16>
    %581 = vector.shape_cast %580 : vector<1x8x128xbf16> to vector<8x128xbf16>
    %582 = vector.shape_cast %578 : vector<8x128xbf16> to vector<1x8x128xbf16>
    tpu.vector_store %arg7[%579, %c0_174, %c0_175], %582 {strides = array<i32>} : memref<8x8x128xbf16, #tpu.memory_space<vmem>>, vector<1x8x128xbf16>,
    %c7_i32_176 = arith.constant 7 : i32
    %583 = arith.index_cast %c7_i32_176 : i32 to index
    %c0_177 = arith.constant 0 : index
    %c0_178 = arith.constant 0 : index
    %584 = vector.load %arg11[%583, %c0_177, %c0_178] : memref<8x8x512xf32, #tpu.memory_space<vmem>>, vector<1x8x512xf32>
    %585 = vector.shape_cast %584 : vector<1x8x512xf32> to vector<8x512xf32>
    %586 = arith.truncf %577 : vector<8x128xf32> to vector<8x128xbf16>
    %cst_179 = arith.constant dense<0.000000e+00> : vector<8x512xf32>
    %587 = tpu.matmul %586, %315, %cst_179 {dimension_numbers = #tpu.dot_dimension_numbers<[1], [0], [0], [1], [0, 0, 1, 1], [], []>} : vector<8x128xbf16>, vector<128x512xbf16>, vector<8x512xf32> -> vector<8x512xf32>
    %588 = arith.addf %585, %587 : vector<8x512xf32>
    %589 = vector.extract_strided_slice %588 {offsets = [0, 0], sizes = [8, 128], strides = [1, 1]} : vector<8x512xf32> to vector<8x128xf32>
    %590 = arith.negf %589 : vector<8x128xf32>
    %591 = math.exp %590 : vector<8x128xf32>
    %cst_180 = arith.constant 1.000000e+00 : f32
    %592 = vector.broadcast %cst_180 : f32 to vector<8x128xf32>
    %593 = arith.addf %592, %591 : vector<8x128xf32>
    %594 = arith.divf %592, %593 : vector<8x128xf32>
    %595 = vector.extract_strided_slice %588 {offsets = [0, 128], sizes = [8, 128], strides = [1, 1]} : vector<8x512xf32> to vector<8x128xf32>
    %596 = arith.negf %595 : vector<8x128xf32>
    %597 = math.exp %596 : vector<8x128xf32>
    %cst_181 = arith.constant 1.000000e+00 : f32
    %598 = vector.broadcast %cst_181 : f32 to vector<8x128xf32>
    %599 = arith.addf %598, %597 : vector<8x128xf32>
    %600 = arith.divf %598, %599 : vector<8x128xf32>
    %601 = vector.extract_strided_slice %588 {offsets = [0, 256], sizes = [8, 128], strides = [1, 1]} : vector<8x512xf32> to vector<8x128xf32>
    %602 = math.tanh %601 : vector<8x128xf32>
    %603 = vector.extract_strided_slice %588 {offsets = [0, 384], sizes = [8, 128], strides = [1, 1]} : vector<8x512xf32> to vector<8x128xf32>
    %604 = arith.negf %603 : vector<8x128xf32>
    %605 = math.exp %604 : vector<8x128xf32>
    %cst_182 = arith.constant 1.000000e+00 : f32
    %606 = vector.broadcast %cst_182 : f32 to vector<8x128xf32>
    %607 = arith.addf %606, %605 : vector<8x128xf32>
    %608 = arith.divf %606, %607 : vector<8x128xf32>
    %609 = arith.mulf %600, %575 : vector<8x128xf32>
    %610 = arith.mulf %594, %602 : vector<8x128xf32>
    %611 = arith.addf %609, %610 : vector<8x128xf32>
    %612 = math.tanh %611 : vector<8x128xf32>
    %613 = arith.mulf %608, %612 : vector<8x128xf32>
    %614 = arith.truncf %613 : vector<8x128xf32> to vector<8x128xbf16>
    %615 = arith.index_cast %c7_i32_176 : i32 to index
    %c0_183 = arith.constant 0 : index
    %c0_184 = arith.constant 0 : index
    %616 = vector.load %arg7[%615, %c0_183, %c0_184] : memref<8x8x128xbf16, #tpu.memory_space<vmem>>, vector<1x8x128xbf16>
    %617 = vector.shape_cast %616 : vector<1x8x128xbf16> to vector<8x128xbf16>
    %618 = vector.shape_cast %614 : vector<8x128xbf16> to vector<1x8x128xbf16>
    tpu.vector_store %arg7[%615, %c0_183, %c0_184], %618 {strides = array<i32>} : memref<8x8x128xbf16, #tpu.memory_space<vmem>>, vector<1x8x128xbf16>,
    %c8_i32_185 = arith.constant 8 : i32
    %c1_186 = arith.constant 1 : index
    %c0_187 = arith.constant 0 : index
    %c0_188 = arith.constant 0 : index
    %619 = vector.load %arg8[%c1_186, %c0_187, %c0_188] : memref<2x8x128xf32, #tpu.memory_space<vmem>>, vector<1x8x128xf32>
    %620 = vector.shape_cast %619 : vector<1x8x128xf32> to vector<8x128xf32>
    %621 = vector.shape_cast %613 : vector<8x128xf32> to vector<1x8x128xf32>
    tpu.vector_store %arg8[%c1_186, %c0_187, %c0_188], %621 {strides = array<i32>} : memref<2x8x128xf32, #tpu.memory_space<vmem>>, vector<1x8x128xf32>,
    %c1_189 = arith.constant 1 : index
    %c0_190 = arith.constant 0 : index
    %c0_191 = arith.constant 0 : index
    %622 = vector.load %arg9[%c1_189, %c0_190, %c0_191] : memref<2x8x128xf32, #tpu.memory_space<vmem>>, vector<1x8x128xf32>
    %623 = vector.shape_cast %622 : vector<1x8x128xf32> to vector<8x128xf32>
    %624 = vector.shape_cast %611 : vector<8x128xf32> to vector<1x8x128xf32>
    tpu.vector_store %arg9[%c1_189, %c0_190, %c0_191], %624 {strides = array<i32>} : memref<2x8x128xf32, #tpu.memory_space<vmem>>, vector<1x8x128xf32>,
    return
  }
  func.func @transform_0(%arg0: i32) -> (i32, i32, i32) {
    %c0_i32 = arith.constant 0 : i32
    %c0_i32_0 = arith.constant 0 : i32
    %c0_i32_1 = arith.constant 0 : i32
    return %arg0, %c0_i32, %c0_i32_0 : i32, i32, i32
  }
  func.func @transform_1(%arg0: i32) -> (i32, i32, i32) {
    %c0_i32 = arith.constant 0 : i32
    %c0_i32_0 = arith.constant 0 : i32
    %c0_i32_1 = arith.constant 0 : i32
    %c0_i32_2 = arith.constant 0 : i32
    return %c0_i32, %c0_i32_0, %c0_i32_1 : i32, i32, i32
  }
  func.func @transform_2(%arg0: i32) -> (i32, i32, i32) {
    %c0_i32 = arith.constant 0 : i32
    %c0_i32_0 = arith.constant 0 : i32
    %c0_i32_1 = arith.constant 0 : i32
    %c0_i32_2 = arith.constant 0 : i32
    return %c0_i32, %c0_i32_0, %c0_i32_1 : i32, i32, i32
  }
  func.func @transform_3(%arg0: i32) -> (i32, i32, i32) {
    %c0_i32 = arith.constant 0 : i32
    %c0_i32_0 = arith.constant 0 : i32
    %c0_i32_1 = arith.constant 0 : i32
    %c0_i32_2 = arith.constant 0 : i32
    return %c0_i32, %c0_i32_0, %c0_i32_1 : i32, i32, i32
  }
  func.func @transform_4(%arg0: i32) -> (i32, i32, i32) {
    %c0_i32 = arith.constant 0 : i32
    %c0_i32_0 = arith.constant 0 : i32
    %c0_i32_1 = arith.constant 0 : i32
    %c0_i32_2 = arith.constant 0 : i32
    return %c0_i32, %c0_i32_0, %c0_i32_1 : i32, i32, i32
  }
  func.func @transform_5(%arg0: i32) -> (i32, i32, i32) {
    %c0_i32 = arith.constant 0 : i32
    %c0_i32_0 = arith.constant 0 : i32
    %c0_i32_1 = arith.constant 0 : i32
    %c0_i32_2 = arith.constant 0 : i32
    return %c0_i32, %c0_i32_0, %c0_i32_1 : i32, i32, i32
  }
  func.func @transform_6(%arg0: i32) -> (i32, i32, i32) {
    %c0_i32 = arith.constant 0 : i32
    %c0_i32_0 = arith.constant 0 : i32
    %c0_i32_1 = arith.constant 0 : i32
    return %arg0, %c0_i32, %c0_i32_0 : i32, i32, i32
  }
  func.func @transform_7(%arg0: i32) -> (i32, i32, i32) {
    %c0_i32 = arith.constant 0 : i32
    %c0_i32_0 = arith.constant 0 : i32
    %c0_i32_1 = arith.constant 0 : i32
    %c0_i32_2 = arith.constant 0 : i32
    return %c0_i32, %c0_i32_0, %c0_i32_1 : i32, i32, i32
  }
  func.func @transform_8(%arg0: i32) -> (i32, i32, i32) {
    %c0_i32 = arith.constant 0 : i32
    %c0_i32_0 = arith.constant 0 : i32
    %c0_i32_1 = arith.constant 0 : i32
    %c0_i32_2 = arith.constant 0 : i32
    return %c0_i32, %c0_i32_0, %c0_i32_1 : i32, i32, i32
  }
}

</mosaic_0001>

<llo_original>
// kernel: text_generation_forward.3
$region0: #{text_generation_forward.3}
  #allocation0 [shape = 'u32[]', space=smem, size = 0x4, offset = 0x4, fixed_abs, tag = 'smem constant byte address 0x4 - core index']
  #allocation1 [shape = 'u32[144,128]{1,0:T(1,128)}', space=vmem, size = 0x12000, scoped, tag = 'internal scratch']
  %s0 = inlined_call_operand.vmem [shape: bf16[16,128], index: 0, kind: input, shape index: {}]
  %s1 = inlined_call_operand.vmem [shape: bf16[128,128], index: 1, kind: input, shape index: {}]
  %s2 = inlined_call_operand.vmem [shape: f32[1,128], index: 2, kind: input, shape index: {}]
  %s3 = inlined_call_operand.hbm [shape: f32[16,128], index: 3, kind: output, shape index: {}]
  %s4 = sld [smem:[#allocation0]]
  $region22: #{text_generation_forward.3} parent=0
    _
  %s6 = ssub.s32 1, %s4
  %s7 = scalar_select 0, %s6, %s4
  $region1: #{text_generation_forward.3} parent=0
    #allocation2 [shape = 'u8[8192]{0}', space=vmem, size = 0x2000, scoped, tag = 'output window, operand 0, single buffered']
    #allocation3 [shape = 's32[1]{0}', space=sflag, size = 0x4, scoped, tag = 'scoped memory for text_generation_forward.3']
    %8 = vsyncpa [#allocation3], 0
    // Predicated region
    $region2: #{text_generation_forward.3} parent=1 // pred_check
      _
    $region3: #{text_generation_forward.3} parent=1 // pred_check_branch
      %10 = sbr.rel (0) target = $region5
    $region4: #{text_generation_forward.3} parent=1 // pred_region
      _
    $region5: #{text_generation_forward.3} parent=1 // pred_fallthru
      _
    // Predicated region
    $region6: #{text_generation_forward.3} parent=1 // pred_check
      _
    $region7: #{text_generation_forward.3} parent=1 // pred_check_branch
      %12 = sbr.rel (0) target = $region9
    $region8: #{text_generation_forward.3} parent=1 // pred_region
      _
    $region9: #{text_generation_forward.3} parent=1 // pred_fallthru
      _
    // Predicated region
    $region10: #{text_generation_forward.3} parent=1 // pred_check
      _
    $region11: #{text_generation_forward.3} parent=1 // pred_check_branch
      %14 = sbr.rel (0) target = $region13
    $region12: #{text_generation_forward.3} parent=1 // pred_region
      _
    $region13: #{text_generation_forward.3} parent=1 // pred_fallthru
      _
    %v16 = vld [vmem:[%s0] sm:$0xf]
    %v17 = vld [vmem:[%s0 + $0x4] sm:$0xf]
    %v18 = vld [vmem:[%s1] sm:$0xf]
    %v19 = vld [vmem:[%s1 + $0x4] sm:$0xf]
    %v20 = vld [vmem:[%s1 + $0x8] sm:$0xf]
    %v21 = vld [vmem:[%s1 + $0xc] sm:$0xf]
    %v22 = vld [vmem:[%s1 + $0x10] sm:$0xf]
    %v23 = vld [vmem:[%s1 + $0x14] sm:$0xf]
    %v24 = vld [vmem:[%s1 + $0x18] sm:$0xf]
    %v25 = vld [vmem:[%s1 + $0x1c] sm:$0xf]
    %v26 = vld [vmem:[%s1 + $0x20] sm:$0xf]
    %v27 = vld [vmem:[%s1 + $0x24] sm:$0xf]
    %v28 = vld [vmem:[%s1 + $0x28] sm:$0xf]
    %v29 = vld [vmem:[%s1 + $0x2c] sm:$0xf]
    %v30 = vld [vmem:[%s1 + $0x30] sm:$0xf]
    %v31 = vld [vmem:[%s1 + $0x34] sm:$0xf]
    %v32 = vld [vmem:[%s1 + $0x38] sm:$0xf]
    %v33 = vld [vmem:[%s1 + $0x3c] sm:$0xf]
    %v34 = vld [vmem:[%s2] sm:$0x1]
    %v36 = vlaneseq
    %v37 = vshrl.u32 %v36, 7
    %v38 = vsub.s32 0, %v37
    %v39 = vrot.slane %v34, %v38
    %v43 = vunpack.c.l.b16 %v16
    %v44 = vunpack.c.l.b16 %v17
    %v45 = vpack.c.b16 %v44, %v43
    %v63 = vunpack.c.l.b16 %v18
    %v64 = vunpack.c.l.b16 %v19
    %v65 = vunpack.c.l.b16 %v20
    %v66 = vunpack.c.l.b16 %v21
    %v67 = vunpack.c.l.b16 %v22
    %v68 = vunpack.c.l.b16 %v23
    %v69 = vunpack.c.l.b16 %v24
    %v70 = vunpack.c.l.b16 %v25
    %v71 = vunpack.c.l.b16 %v26
    %v72 = vunpack.c.l.b16 %v27
    %v73 = vunpack.c.l.b16 %v28
    %v74 = vunpack.c.l.b16 %v29
    %v75 = vunpack.c.l.b16 %v30
    %v76 = vunpack.c.l.b16 %v31
    %v77 = vunpack.c.l.b16 %v32
    %v78 = vunpack.c.l.b16 %v33
    %v79 = vpack.c.b16 %v64, %v63
    %v80 = vpack.c.b16 %v66, %v65
    %v81 = vpack.c.b16 %v68, %v67
    %v82 = vpack.c.b16 %v70, %v69
    %v83 = vpack.c.b16 %v72, %v71
    %v84 = vpack.c.b16 %v74, %v73
    %v85 = vpack.c.b16 %v76, %v75
    %v86 = vpack.c.b16 %v78, %v77
    %95 = vmatprep.subr.bf16.mxu0 0
    %96 = vmatpush1.bf16.msra.mxu0 %v79
    %97 = vmatprep.subr.bf16.mxu0 0
    %98 = vmatpush1.bf16.msra.mxu0 %v80
    %99 = vmatprep.subr.bf16.mxu0 0
    %100 = vmatpush1.bf16.msra.mxu0 %v81
    %101 = vmatprep.subr.bf16.mxu0 0
    %102 = vmatpush1.bf16.msra.mxu0 %v82
    %103 = vmatprep.subr.bf16.mxu0 0
    %104 = vmatpush1.bf16.msra.mxu0 %v83
    %105 = vmatprep.subr.bf16.mxu0 0
    %106 = vmatpush1.bf16.msra.mxu0 %v84
    %107 = vmatprep.subr.bf16.mxu0 0
    %108 = vmatpush1.bf16.msra.mxu0 %v85
    %109 = vmatprep.subr.bf16.mxu0 0
    %110 = vmatpush1.bf16.msra.mxu0 %v86
    %111 = vmatprep.subr.bf16.mxu0 0
    %112 = vmatpush1.bf16.msra.mxu0 0
    %113 = vmatprep.subr.bf16.mxu0 0
    %114 = vmatpush1.bf16.msra.mxu0 0
    %115 = vmatprep.subr.bf16.mxu0 0
    %116 = vmatpush1.bf16.msra.mxu0 0
    %117 = vmatprep.subr.bf16.mxu0 0
    %118 = vmatpush1.bf16.msra.mxu0 0
    %119 = vmatprep.subr.bf16.mxu0 0
    %120 = vmatpush1.bf16.msra.mxu0 0
    %121 = vmatprep.subr.bf16.mxu0 0
    %122 = vmatpush1.bf16.msra.mxu0 0
    %123 = vmatprep.subr.bf16.mxu0 0
    %124 = vmatpush1.bf16.msra.mxu0 0
    %125 = vmatprep.subr.bf16.mxu0 0
    %126 = vmatpush1.bf16.msra.mxu0 0
    %127 = vmatprep.mubr.bf16.mxu0 0
    %128 = vmatmul.mubr.bf16.gmra.mrb[0].mxu0 %v45
    %v129 = vpop.f32.mrb[0].mxu0
    %v130 = vadd.f32 %v39, %v129
    %v131 = vpop.f32.mrb[0].mxu0
    %v132 = vpop.f32.mrb[0].mxu0
    %v133 = vadd.f32 %v39, %v132
    %v134 = vpop.f32.mrb[0].mxu0
    %135 = vdwg.mxu0
    %136 = vst [vmem:[#allocation2] sm:$0xff] %v130
    %137 = vst [vmem:[#allocation2 + $0x8] sm:$0xff] %v133
    // Predicated region
    $region14: #{text_generation_forward.3} parent=1 // pred_check
      _
    $region15: #{text_generation_forward.3} parent=1 // pred_check_branch
      %139 = sbr.rel (0) target = $region17
    $region16: #{text_generation_forward.3} parent=1 // pred_region
      %s141 = ssub.s32 256, 256
      %142 = vsyncadd [#allocation3], %s141
      %s143 = sshll.u32 [#allocation2], 4
      %s144 = int_to_ptr.vmem [resolvable:$true] %s143
      %149 = dma.vmem_to_hbm [thread:$0]  %s144, 256, %s3, [#allocation3], 128, 128, 8
    $region17: #{text_generation_forward.3} parent=1 // pred_fallthru
      _
    // Predicated region
    $region18: #{text_generation_forward.3} parent=1 // pred_check
      _
    $region19: #{text_generation_forward.3} parent=1 // pred_check_branch
      %151 = sbr.rel (0) target = $region21
    $region20: #{text_generation_forward.3} parent=1 // pred_region
      %152 = dma.done [#allocation3], 256
    $region21: #{text_generation_forward.3} parent=1 // pred_fallthru
      _
    %153 = vsyncpa [#allocation3], 1

// kernel: text_generation_forward.2
$region0: #{text_generation_forward.2}
  #allocation0 [shape = 'u32[]', space=smem, size = 0x4, offset = 0x4, fixed_abs, tag = 'smem constant byte address 0x4 - core index']
  #allocation1 [shape = 'u32[144,128]{1,0:T(1,128)}', space=vmem, size = 0x12000, scoped, tag = 'internal scratch']
  #allocation2 [shape = 'bf16[8,8,128]{2,1,0:T(8,128)(2,1)}', space=vmem, size = 0x4000, scoped, tag = 'scratch operand']
  #allocation3 [shape = 'f32[8,8,512]{2,1,0:T(8,128)}', space=vmem, size = 0x20000, scoped, tag = 'scratch operand']
  %s0 = inlined_call_operand.vmem [shape: bf16[8,8,128], index: 0, kind: input, shape index: {}]
  %s1 = inlined_call_operand.vmem [shape: f32[2,8,128], index: 1, kind: input, shape index: {}]
  %s2 = inlined_call_operand.vmem [shape: f32[2,8,128], index: 2, kind: input, shape index: {}]
  %s3 = inlined_call_operand.hbm [shape: bf16[2,128,512], index: 3, kind: input, shape index: {}]
  %s4 = inlined_call_operand.hbm [shape: bf16[2,128,512], index: 4, kind: input, shape index: {}]
  %s5 = inlined_call_operand.vmem [shape: f32[2,1,512], index: 5, kind: input, shape index: {}]
  %s6 = inlined_call_operand.vmem [shape: bf16[8,8,128], index: 6, kind: output, shape index: {0}]
  %s7 = inlined_call_operand.vmem [shape: f32[2,8,128], index: 7, kind: output, shape index: {1}]
  %s8 = inlined_call_operand.vmem [shape: f32[2,8,128], index: 8, kind: output, shape index: {2}]
  %9 = xla_tuple %s6, %s7, %s8
  %s10 = sld [smem:[#allocation0]]
  $region62: #{text_generation_forward.2} parent=0
    _
  %s12 = ssub.s32 1, %s10
  %s13 = scalar_select 0, %s12, %s10
  $region1: #{text_generation_forward.2} parent=0
    #allocation4 [shape = 'u8[262144]{0}', space=vmem, size = 0x40000, scoped, tag = 'input window, operand 3, single buffered']
    #allocation5 [shape = 's32[1]{0}', space=sflag, size = 0x4, scoped, tag = 'scoped memory for text_generation_forward.2']
    #allocation6 [shape = 'u8[262144]{0}', space=vmem, size = 0x40000, scoped, tag = 'input window, operand 4, single buffered']
    #allocation7 [shape = 's32[1]{0}', space=sflag, size = 0x4, scoped, tag = 'scoped memory for text_generation_forward.2']
    %14 = vsyncpa [#allocation5], 0
    %15 = vsyncpa [#allocation7], 0
    // Predicated region
    $region2: #{text_generation_forward.2} parent=1 // pred_check
      _
    $region3: #{text_generation_forward.2} parent=1 // pred_check_branch
      %17 = sbr.rel (0) target = $region5
    $region4: #{text_generation_forward.2} parent=1 // pred_region
      _
    $region5: #{text_generation_forward.2} parent=1 // pred_fallthru
      _
    // Predicated region
    $region6: #{text_generation_forward.2} parent=1 // pred_check
      _
    $region7: #{text_generation_forward.2} parent=1 // pred_check_branch
      %19 = sbr.rel (0) target = $region9
    $region8: #{text_generation_forward.2} parent=1 // pred_region
      _
    $region9: #{text_generation_forward.2} parent=1 // pred_fallthru
      _
    // Predicated region
    $region10: #{text_generation_forward.2} parent=1 // pred_check
      _
    $region11: #{text_generation_forward.2} parent=1 // pred_check_branch
      %21 = sbr.rel (0) target = $region13
    $region12: #{text_generation_forward.2} parent=1 // pred_region
      _
    $region13: #{text_generation_forward.2} parent=1 // pred_fallthru
      _
    // Predicated region
    $region14: #{text_generation_forward.2} parent=1 // pred_check
      _
    $region15: #{text_generation_forward.2} parent=1 // pred_check_branch
      %23 = sbr.rel (0) target = $region17
    $region16: #{text_generation_forward.2} parent=1 // pred_region
      %s25 = ssub.s32 8192, 8192
      %26 = vsyncadd [#allocation5], %s25
      %s27 = sshll.u32 [#allocation4], 4
      %s28 = int_to_ptr.vmem [resolvable:$true] %s27
      %33 = dma.hbm_to_vmem [thread:$0]  %s3, 8192, %s28, [#allocation5], 256, 256, 16
    $region17: #{text_generation_forward.2} parent=1 // pred_fallthru
      _
    // Predicated region
    $region18: #{text_generation_forward.2} parent=1 // pred_check
      _
    $region19: #{text_generation_forward.2} parent=1 // pred_check_branch
      %35 = sbr.rel (0) target = $region21
    $region20: #{text_generation_forward.2} parent=1 // pred_region
      %s37 = ssub.s32 8192, 8192
      %38 = vsyncadd [#allocation7], %s37
      %s39 = sshll.u32 [#allocation6], 4
      %s40 = int_to_ptr.vmem [resolvable:$true] %s39
      %45 = dma.hbm_to_vmem [thread:$0]  %s4, 8192, %s40, [#allocation7], 256, 256, 16
    $region21: #{text_generation_forward.2} parent=1 // pred_fallthru
      _
    // Predicated region
    $region22: #{text_generation_forward.2} parent=1 // pred_check
      _
    $region23: #{text_generation_forward.2} parent=1 // pred_check_branch
      %47 = sbr.rel (0) target = $region25
    $region24: #{text_generation_forward.2} parent=1 // pred_region
      _
    $region25: #{text_generation_forward.2} parent=1 // pred_fallthru
      _
    // Predicated region
    $region26: #{text_generation_forward.2} parent=1 // pred_check
      _
    $region27: #{text_generation_forward.2} parent=1 // pred_check_branch
      %49 = sbr.rel (0) target = $region29
    $region28: #{text_generation_forward.2} parent=1 // pred_region
      %50 = dma.done [#allocation5], 8192
    $region29: #{text_generation_forward.2} parent=1 // pred_fallthru
      _
    // Predicated region
    $region30: #{text_generation_forward.2} parent=1 // pred_check
      _
    $region31: #{text_generation_forward.2} parent=1 // pred_check_branch
      %52 = sbr.rel (0) target = $region33
    $region32: #{text_generation_forward.2} parent=1 // pred_region
      %53 = dma.done [#allocation7], 8192
    $region33: #{text_generation_forward.2} parent=1 // pred_fallthru
      _
    %p55 = scmp.eq.s32.totalorder 0, 0
    // Predicated region
    $region34: #{text_generation_forward.2} parent=1 // pred_check
      %p56 = pneg %p55
    $region35: #{text_generation_forward.2} parent=1 // pred_check_branch
      %58 = sbr.rel (%p56) target = $region37
    $region36: #{text_generation_forward.2} parent=1 // pred_region
      %v59 = vld [vmem:[%s1] sm:$0xff]
      %v60 = vld [vmem:[%s1 + $0x8] sm:$0xff]
      %61 = vst [vmem:[%s7] sm:$0xff] %v59
      %62 = vst [vmem:[%s7 + $0x8] sm:$0xff] %v60
      %v63 = vld [vmem:[%s2] sm:$0xff]
      %v64 = vld [vmem:[%s2 + $0x8] sm:$0xff]
      %65 = vst [vmem:[%s8] sm:$0xff] %v63
      %66 = vst [vmem:[%s8 + $0x8] sm:$0xff] %v64
    $region37: #{text_generation_forward.2} parent=1 // pred_fallthru
      _
    %v67 = vld [vmem:[#allocation6] sm:$0xff]
    %v68 = vld [vmem:[#allocation6 + $0x8] sm:$0xff]
    %v69 = vld [vmem:[#allocation6 + $0x10] sm:$0xff]
    %v70 = vld [vmem:[#allocation6 + $0x18] sm:$0xff]
    %v71 = vld [vmem:[#allocation6 + $0x20] sm:$0xff]
    %v72 = vld [vmem:[#allocation6 + $0x28] sm:$0xff]
    %v73 = vld [vmem:[#allocation6 + $0x30] sm:$0xff]
    %v74 = vld [vmem:[#allocation6 + $0x38] sm:$0xff]
    %v75 = vld [vmem:[#allocation6 + $0x40] sm:$0xff]
    %v76 = vld [vmem:[#allocation6 + $0x48] sm:$0xff]
    %v77 = vld [vmem:[#allocation6 + $0x50] sm:$0xff]
    %v78 = vld [vmem:[#allocation6 + $0x58] sm:$0xff]
    %v79 = vld [vmem:[#allocation6 + $0x60] sm:$0xff]
    %v80 = vld [vmem:[#allocation6 + $0x68] sm:$0xff]
    %v81 = vld [vmem:[#allocation6 + $0x70] sm:$0xff]
    %v82 = vld [vmem:[#allocation6 + $0x78] sm:$0xff]
    %v83 = vld [vmem:[#allocation6 + $0x80] sm:$0xff]
    %v84 = vld [vmem:[#allocation6 + $0x88] sm:$0xff]
    %v85 = vld [vmem:[#allocation6 + $0x90] sm:$0xff]
    %v86 = vld [vmem:[#allocation6 + $0x98] sm:$0xff]
    %v87 = vld [vmem:[#allocation6 + $0xa0] sm:$0xff]
    %v88 = vld [vmem:[#allocation6 + $0xa8] sm:$0xff]
    %v89 = vld [vmem:[#allocation6 + $0xb0] sm:$0xff]
    %v90 = vld [vmem:[#allocation6 + $0xb8] sm:$0xff]
    %v91 = vld [vmem:[#allocation6 + $0xc0] sm:$0xff]
    %v92 = vld [vmem:[#allocation6 + $0xc8] sm:$0xff]
    %v93 = vld [vmem:[#allocation6 + $0xd0] sm:$0xff]
    %v94 = vld [vmem:[#allocation6 + $0xd8] sm:$0xff]
    %v95 = vld [vmem:[#allocation6 + $0xe0] sm:$0xff]
    %v96 = vld [vmem:[#allocation6 + $0xe8] sm:$0xff]
    %v97 = vld [vmem:[#allocation6 + $0xf0] sm:$0xff]
    %v98 = vld [vmem:[#allocation6 + $0xf8] sm:$0xff]
    %v99 = vld [vmem:[%s5] sm:$0xf]
    %v100 = vld [vmem:[%s0] sm:$0xf]
    %v101 = vld [vmem:[%s0 + $0x4] sm:$0xf]
    %v102 = vld [vmem:[%s0 + $0x8] sm:$0xf]
    %v103 = vld [vmem:[%s0 + $0xc] sm:$0xf]
    %v104 = vld [vmem:[%s0 + $0x10] sm:$0xf]
    %v105 = vld [vmem:[%s0 + $0x14] sm:$0xf]
    %v106 = vld [vmem:[%s0 + $0x18] sm:$0xf]
    %v107 = vld [vmem:[%s0 + $0x1c] sm:$0xf]
    %v108 = vld [vmem:[#allocation4] sm:$0xff]
    %v109 = vld [vmem:[#allocation4 + $0x8] sm:$0xff]
    %v110 = vld [vmem:[#allocation4 + $0x10] sm:$0xff]
    %v111 = vld [vmem:[#allocation4 + $0x18] sm:$0xff]
    %v112 = vld [vmem:[#allocation4 + $0x20] sm:$0xff]
    %v113 = vld [vmem:[#allocation4 + $0x28] sm:$0xff]
    %v114 = vld [vmem:[#allocation4 + $0x30] sm:$0xff]
    %v115 = vld [vmem:[#allocation4 + $0x38] sm:$0xff]
    %v116 = vld [vmem:[#allocation4 + $0x40] sm:$0xff]
    %v117 = vld [vmem:[#allocation4 + $0x48] sm:$0xff]
    %v118 = vld [vmem:[#allocation4 + $0x50] sm:$0xff]
    %v119 = vld [vmem:[#allocation4 + $0x58] sm:$0xff]
    %v120 = vld [vmem:[#allocation4 + $0x60] sm:$0xff]
    %v121 = vld [vmem:[#allocation4 + $0x68] sm:$0xff]
    %v122 = vld [vmem:[#allocation4 + $0x70] sm:$0xff]
    %v123 = vld [vmem:[#allocation4 + $0x78] sm:$0xff]
    %v124 = vld [vmem:[#allocation4 + $0x80] sm:$0xff]
    %v125 = vld [vmem:[#allocation4 + $0x88] sm:$0xff]
    %v126 = vld [vmem:[#allocation4 + $0x90] sm:$0xff]
    %v127 = vld [vmem:[#allocation4 + $0x98] sm:$0xff]
    %v128 = vld [vmem:[#allocation4 + $0xa0] sm:$0xff]
    %v129 = vld [vmem:[#allocation4 + $0xa8] sm:$0xff]
    %v130 = vld [vmem:[#allocation4 + $0xb0] sm:$0xff]
    %v131 = vld [vmem:[#allocation4 + $0xb8] sm:$0xff]
    %v132 = vld [vmem:[#allocation4 + $0xc0] sm:$0xff]
    %v133 = vld [vmem:[#allocation4 + $0xc8] sm:$0xff]
    %v134 = vld [vmem:[#allocation4 + $0xd0] sm:$0xff]
    %v135 = vld [vmem:[#allocation4 + $0xd8] sm:$0xff]
    %v136 = vld [vmem:[#allocation4 + $0xe0] sm:$0xff]
    %v137 = vld [vmem:[#allocation4 + $0xe8] sm:$0xff]
    %v138 = vld [vmem:[#allocation4 + $0xf0] sm:$0xff]
    %v139 = vld [vmem:[#allocation4 + $0xf8] sm:$0xff]
    %v141 = vlaneseq
    %v142 = vshrl.u32 %v141, 7
    %v143 = vsub.s32 0, %v142
    %v144 = vrot.slane %v99, %v143
    %v145 = vlaneseq
    %v146 = vshrl.u32 %v145, 7
    %v147 = vsub.s32 1, %v146
    %v148 = vrot.slane %v99, %v147
    %v149 = vlaneseq
    %v150 = vshrl.u32 %v149, 7
    %v151 = vsub.s32 2, %v150
    %v152 = vrot.slane %v99, %v151
    %v153 = vlaneseq
    %v154 = vshrl.u32 %v153, 7
    %v155 = vsub.s32 3, %v154
    %v156 = vrot.slane %v99, %v155
    %v169 = vunpack.c.l.b16 %v100
    %v170 = vunpack.c.l.b16 %v101
    %v171 = vunpack.c.l.b16 %v102
    %v172 = vunpack.c.l.b16 %v103
    %v173 = vunpack.c.l.b16 %v104
    %v174 = vunpack.c.l.b16 %v105
    %v175 = vunpack.c.l.b16 %v106
    %v176 = vunpack.c.l.b16 %v107
    %v177 = vpack.c.b16 %v170, %v169
    %v178 = vpack.c.b16 %v172, %v171
    %v179 = vpack.c.b16 %v174, %v173
    %v180 = vpack.c.b16 %v176, %v175
    %v217 = vunpack.c.l.b16 %v108
    %v218 = vunpack.c.h.b16 %v108
    %v219 = vunpack.c.l.b16 %v109
    %v220 = vunpack.c.h.b16 %v109
    %v221 = vunpack.c.l.b16 %v110
    %v222 = vunpack.c.h.b16 %v110
    %v223 = vunpack.c.l.b16 %v111
    %v224 = vunpack.c.h.b16 %v111
    %v225 = vunpack.c.l.b16 %v112
    %v226 = vunpack.c.h.b16 %v112
    %v227 = vunpack.c.l.b16 %v113
    %v228 = vunpack.c.h.b16 %v113
    %v229 = vunpack.c.l.b16 %v114
    %v230 = vunpack.c.h.b16 %v114
    %v231 = vunpack.c.l.b16 %v115
    %v232 = vunpack.c.h.b16 %v115
    %v233 = vunpack.c.l.b16 %v116
    %v234 = vunpack.c.h.b16 %v116
    %v235 = vunpack.c.l.b16 %v117
    %v236 = vunpack.c.h.b16 %v117
    %v237 = vunpack.c.l.b16 %v118
    %v238 = vunpack.c.h.b16 %v118
    %v239 = vunpack.c.l.b16 %v119
    %v240 = vunpack.c.h.b16 %v119
    %v241 = vunpack.c.l.b16 %v120
    %v242 = vunpack.c.h.b16 %v120
    %v243 = vunpack.c.l.b16 %v121
    %v244 = vunpack.c.h.b16 %v121
    %v245 = vunpack.c.l.b16 %v122
    %v246 = vunpack.c.h.b16 %v122
    %v247 = vunpack.c.l.b16 %v123
    %v248 = vunpack.c.h.b16 %v123
    %v249 = vunpack.c.l.b16 %v124
    %v250 = vunpack.c.h.b16 %v124
    %v251 = vunpack.c.l.b16 %v125
    %v252 = vunpack.c.h.b16 %v125
    %v253 = vunpack.c.l.b16 %v126
    %v254 = vunpack.c.h.b16 %v126
    %v255 = vunpack.c.l.b16 %v127
    %v256 = vunpack.c.h.b16 %v127
    %v257 = vunpack.c.l.b16 %v128
    %v258 = vunpack.c.h.b16 %v128
    %v259 = vunpack.c.l.b16 %v129
    %v260 = vunpack.c.h.b16 %v129
    %v261 = vunpack.c.l.b16 %v130
    %v262 = vunpack.c.h.b16 %v130
    %v263 = vunpack.c.l.b16 %v131
    %v264 = vunpack.c.h.b16 %v131
    %v265 = vunpack.c.l.b16 %v132
    %v266 = vunpack.c.h.b16 %v132
    %v267 = vunpack.c.l.b16 %v133
    %v268 = vunpack.c.h.b16 %v133
    %v269 = vunpack.c.l.b16 %v134
    %v270 = vunpack.c.h.b16 %v134
    %v271 = vunpack.c.l.b16 %v135
    %v272 = vunpack.c.h.b16 %v135
    %v273 = vunpack.c.l.b16 %v136
    %v274 = vunpack.c.h.b16 %v136
    %v275 = vunpack.c.l.b16 %v137
    %v276 = vunpack.c.h.b16 %v137
    %v277 = vunpack.c.l.b16 %v138
    %v278 = vunpack.c.h.b16 %v138
    %v279 = vunpack.c.l.b16 %v139
    %v280 = vunpack.c.h.b16 %v139
    %v281 = vpack.c.b16 %v221, %v217
    %v282 = vpack.c.b16 %v222, %v218
    %v283 = vpack.c.b16 %v223, %v219
    %v284 = vpack.c.b16 %v224, %v220
    %v285 = vpack.c.b16 %v229, %v225
    %v286 = vpack.c.b16 %v230, %v226
    %v287 = vpack.c.b16 %v231, %v227
    %v288 = vpack.c.b16 %v232, %v228
    %v289 = vpack.c.b16 %v237, %v233
    %v290 = vpack.c.b16 %v238, %v234
    %v291 = vpack.c.b16 %v239, %v235
    %v292 = vpack.c.b16 %v240, %v236
    %v293 = vpack.c.b16 %v245, %v241
    %v294 = vpack.c.b16 %v246, %v242
    %v295 = vpack.c.b16 %v247, %v243
    %v296 = vpack.c.b16 %v248, %v244
    %v297 = vpack.c.b16 %v253, %v249
    %v298 = vpack.c.b16 %v254, %v250
    %v299 = vpack.c.b16 %v255, %v251
    %v300 = vpack.c.b16 %v256, %v252
    %v301 = vpack.c.b16 %v261, %v257
    %v302 = vpack.c.b16 %v262, %v258
    %v303 = vpack.c.b16 %v263, %v259
    %v304 = vpack.c.b16 %v264, %v260
    %v305 = vpack.c.b16 %v269, %v265
    %v306 = vpack.c.b16 %v270, %v266
    %v307 = vpack.c.b16 %v271, %v267
    %v308 = vpack.c.b16 %v272, %v268
    %v309 = vpack.c.b16 %v277, %v273
    %v310 = vpack.c.b16 %v278, %v274
    %v311 = vpack.c.b16 %v279, %v275
    %v312 = vpack.c.b16 %v280, %v276
    %345 = vmatprep.subr.bf16.mxu0 %v282
    %346 = vmatpush1.bf16.msra.mxu0 %v281
    %347 = vmatprep.subr.bf16.mxu0 %v286
    %348 = vmatpush1.bf16.msra.mxu0 %v285
    %349 = vmatprep.subr.bf16.mxu0 %v290
    %350 = vmatpush1.bf16.msra.mxu0 %v289
    %351 = vmatprep.subr.bf16.mxu0 %v294
    %352 = vmatpush1.bf16.msra.mxu0 %v293
    %353 = vmatprep.subr.bf16.mxu0 %v298
    %354 = vmatpush1.bf16.msra.mxu0 %v297
    %355 = vmatprep.subr.bf16.mxu0 %v302
    %356 = vmatpush1.bf16.msra.mxu0 %v301
    %357 = vmatprep.subr.bf16.mxu0 %v306
    %358 = vmatpush1.bf16.msra.mxu0 %v305
    %359 = vmatprep.subr.bf16.mxu0 %v310
    %360 = vmatpush1.bf16.msra.mxu0 %v309
    %361 = vmatprep.subr.bf16.mxu0 0
    %362 = vmatpush1.bf16.msra.mxu0 0
    %363 = vmatprep.subr.bf16.mxu0 0
    %364 = vmatpush1.bf16.msra.mxu0 0
    %365 = vmatprep.subr.bf16.mxu0 0
    %366 = vmatpush1.bf16.msra.mxu0 0
    %367 = vmatprep.subr.bf16.mxu0 0
    %368 = vmatpush1.bf16.msra.mxu0 0
    %369 = vmatprep.subr.bf16.mxu0 0
    %370 = vmatpush1.bf16.msra.mxu0 0
    %371 = vmatprep.subr.bf16.mxu0 0
    %372 = vmatpush1.bf16.msra.mxu0 0
    %373 = vmatprep.subr.bf16.mxu0 0
    %374 = vmatpush1.bf16.msra.mxu0 0
    %375 = vmatprep.subr.bf16.mxu0 0
    %376 = vmatpush1.bf16.msra.mxu0 0
    %377 = vmatprep.mubr.bf16.mxu0 0
    %378 = vmatmul.mubr.bf16.gmra.mrb[0].mxu0 %v177
    %v379 = vpop.f32.mrb[0].mxu0
    %v380 = vadd.f32 %v144, %v379
    %v381 = vpop.f32.mrb[0].mxu0
    %v382 = vadd.f32 %v148, %v381
    %v383 = vpop.f32.mrb[0].mxu0
    %v384 = vadd.f32 %v144, %v383
    %v385 = vpop.f32.mrb[0].mxu0
    %v386 = vadd.f32 %v148, %v385
    %387 = vmatprep.mubr.bf16.mxu0 0
    %388 = vmatmul.mubr.bf16.gmra.mrb[0].mxu0 %v178
    %v389 = vpop.f32.mrb[0].mxu0
    %v390 = vadd.f32 %v144, %v389
    %v391 = vpop.f32.mrb[0].mxu0
    %v392 = vadd.f32 %v148, %v391
    %v393 = vpop.f32.mrb[0].mxu0
    %v394 = vadd.f32 %v144, %v393
    %v395 = vpop.f32.mrb[0].mxu0
    %v396 = vadd.f32 %v148, %v395
    %397 = vmatprep.mubr.bf16.mxu0 0
    %398 = vmatmul.mubr.bf16.gmra.mrb[0].mxu0 %v179
    %v399 = vpop.f32.mrb[0].mxu0
    %v400 = vadd.f32 %v144, %v399
    %v401 = vpop.f32.mrb[0].mxu0
    %v402 = vadd.f32 %v148, %v401
    %v403 = vpop.f32.mrb[0].mxu0
    %v404 = vadd.f32 %v144, %v403
    %v405 = vpop.f32.mrb[0].mxu0
    %v406 = vadd.f32 %v148, %v405
    %407 = vmatprep.mubr.bf16.mxu0 0
    %408 = vmatmul.mubr.bf16.gmra.mrb[0].mxu0 %v180
    %v409 = vpop.f32.mrb[0].mxu0
    %v410 = vadd.f32 %v144, %v409
    %v411 = vpop.f32.mrb[0].mxu0
    %v412 = vadd.f32 %v148, %v411
    %v413 = vpop.f32.mrb[0].mxu0
    %v414 = vadd.f32 %v144, %v413
    %v415 = vpop.f32.mrb[0].mxu0
    %v416 = vadd.f32 %v148, %v415
    %417 = vdwg.mxu0
    %418 = vmatprep.subr.bf16.mxu0 %v284
    %419 = vmatpush1.bf16.msra.mxu0 %v283
    %420 = vmatprep.subr.bf16.mxu0 %v288
    %421 = vmatpush1.bf16.msra.mxu0 %v287
    %422 = vmatprep.subr.bf16.mxu0 %v292
    %423 = vmatpush1.bf16.msra.mxu0 %v291
    %424 = vmatprep.subr.bf16.mxu0 %v296
    %425 = vmatpush1.bf16.msra.mxu0 %v295
    %426 = vmatprep.subr.bf16.mxu0 %v300
    %427 = vmatpush1.bf16.msra.mxu0 %v299
    %428 = vmatprep.subr.bf16.mxu0 %v304
    %429 = vmatpush1.bf16.msra.mxu0 %v303
    %430 = vmatprep.subr.bf16.mxu0 %v308
    %431 = vmatpush1.bf16.msra.mxu0 %v307
    %432 = vmatprep.subr.bf16.mxu0 %v312
    %433 = vmatpush1.bf16.msra.mxu0 %v311
    %434 = vmatprep.subr.bf16.mxu0 0
    %435 = vmatpush1.bf16.msra.mxu0 0
    %436 = vmatprep.subr.bf16.mxu0 0
    %437 = vmatpush1.bf16.msra.mxu0 0
    %438 = vmatprep.subr.bf16.mxu0 0
    %439 = vmatpush1.bf16.msra.mxu0 0
    %440 = vmatprep.subr.bf16.mxu0 0
    %441 = vmatpush1.bf16.msra.mxu0 0
    %442 = vmatprep.subr.bf16.mxu0 0
    %443 = vmatpush1.bf16.msra.mxu0 0
    %444 = vmatprep.subr.bf16.mxu0 0
    %445 = vmatpush1.bf16.msra.mxu0 0
    %446 = vmatprep.subr.bf16.mxu0 0
    %447 = vmatpush1.bf16.msra.mxu0 0
    %448 = vmatprep.subr.bf16.mxu0 0
    %449 = vmatpush1.bf16.msra.mxu0 0
    %450 = vmatprep.mubr.bf16.mxu0 0
    %451 = vmatmul.mubr.bf16.gmra.mrb[0].mxu0 %v177
    %v452 = vpop.f32.mrb[0].mxu0
    %v453 = vadd.f32 %v152, %v452
    %v454 = vpop.f32.mrb[0].mxu0
    %v455 = vadd.f32 %v156, %v454
    %v456 = vpop.f32.mrb[0].mxu0
    %v457 = vadd.f32 %v152, %v456
    %v458 = vpop.f32.mrb[0].mxu0
    %v459 = vadd.f32 %v156, %v458
    %460 = vmatprep.mubr.bf16.mxu0 0
    %461 = vmatmul.mubr.bf16.gmra.mrb[0].mxu0 %v178
    %v462 = vpop.f32.mrb[0].mxu0
    %v463 = vadd.f32 %v152, %v462
    %v464 = vpop.f32.mrb[0].mxu0
    %v465 = vadd.f32 %v156, %v464
    %v466 = vpop.f32.mrb[0].mxu0
    %v467 = vadd.f32 %v152, %v466
    %v468 = vpop.f32.mrb[0].mxu0
    %v469 = vadd.f32 %v156, %v468
    %470 = vmatprep.mubr.bf16.mxu0 0
    %471 = vmatmul.mubr.bf16.gmra.mrb[0].mxu0 %v179
    %v472 = vpop.f32.mrb[0].mxu0
    %v473 = vadd.f32 %v152, %v472
    %v474 = vpop.f32.mrb[0].mxu0
    %v475 = vadd.f32 %v156, %v474
    %v476 = vpop.f32.mrb[0].mxu0
    %v477 = vadd.f32 %v152, %v476
    %v478 = vpop.f32.mrb[0].mxu0
    %v479 = vadd.f32 %v156, %v478
    %480 = vmatprep.mubr.bf16.mxu0 0
    %481 = vmatmul.mubr.bf16.gmra.mrb[0].mxu0 %v180
    %v482 = vpop.f32.mrb[0].mxu0
    %v483 = vadd.f32 %v152, %v482
    %v484 = vpop.f32.mrb[0].mxu0
    %v485 = vadd.f32 %v156, %v484
    %v486 = vpop.f32.mrb[0].mxu0
    %v487 = vadd.f32 %v152, %v486
    %v488 = vpop.f32.mrb[0].mxu0
    %v489 = vadd.f32 %v156, %v488
    %490 = vdwg.mxu0
    %491 = vst [vmem:[#allocation3] sm:$0xff] %v380
    %492 = vst [vmem:[#allocation3 + $0x8] sm:$0xff] %v382
    %493 = vst [vmem:[#allocation3 + $0x10] sm:$0xff] %v453
    %494 = vst [vmem:[#allocation3 + $0x18] sm:$0xff] %v455
    %495 = vst [vmem:[#allocation3 + $0x20] sm:$0xff] %v384
    %496 = vst [vmem:[#allocation3 + $0x28] sm:$0xff] %v386
    %497 = vst [vmem:[#allocation3 + $0x30] sm:$0xff] %v457
    %498 = vst [vmem:[#allocation3 + $0x38] sm:$0xff] %v459
    %499 = vst [vmem:[#allocation3 + $0x40] sm:$0xff] %v390
    %500 = vst [vmem:[#allocation3 + $0x48] sm:$0xff] %v392
    %501 = vst [vmem:[#allocation3 + $0x50] sm:$0xff] %v463
    %502 = vst [vmem:[#allocation3 + $0x58] sm:$0xff] %v465
    %503 = vst [vmem:[#allocation3 + $0x60] sm:$0xff] %v394
    %504 = vst [vmem:[#allocation3 + $0x68] sm:$0xff] %v396
    %505 = vst [vmem:[#allocation3 + $0x70] sm:$0xff] %v467
    %506 = vst [vmem:[#allocation3 + $0x78] sm:$0xff] %v469
    %507 = vst [vmem:[#allocation3 + $0x80] sm:$0xff] %v400
    %508 = vst [vmem:[#allocation3 + $0x88] sm:$0xff] %v402
    %509 = vst [vmem:[#allocation3 + $0x90] sm:$0xff] %v473
    %510 = vst [vmem:[#allocation3 + $0x98] sm:$0xff] %v475
    %511 = vst [vmem:[#allocation3 + $0xa0] sm:$0xff] %v404
    %512 = vst [vmem:[#allocation3 + $0xa8] sm:$0xff] %v406
    %513 = vst [vmem:[#allocation3 + $0xb0] sm:$0xff] %v477
    %514 = vst [vmem:[#allocation3 + $0xb8] sm:$0xff] %v479
    %515 = vst [vmem:[#allocation3 + $0xc0] sm:$0xff] %v410
    %516 = vst [vmem:[#allocation3 + $0xc8] sm:$0xff] %v412
    %517 = vst [vmem:[#allocation3 + $0xd0] sm:$0xff] %v483
    %518 = vst [vmem:[#allocation3 + $0xd8] sm:$0xff] %v485
    %519 = vst [vmem:[#allocation3 + $0xe0] sm:$0xff] %v414
    %520 = vst [vmem:[#allocation3 + $0xe8] sm:$0xff] %v416
    %521 = vst [vmem:[#allocation3 + $0xf0] sm:$0xff] %v487
    %522 = vst [vmem:[#allocation3 + $0xf8] sm:$0xff] %v489
    %v523 = vld [vmem:[%s7] sm:$0xff]
    %v524 = vld [vmem:[%s8] sm:$0xff]
    %v525 = vld [vmem:[#allocation3] sm:$0xff]
    %v526 = vld [vmem:[#allocation3 + $0x8] sm:$0xff]
    %v527 = vld [vmem:[#allocation3 + $0x10] sm:$0xff]
    %v528 = vld [vmem:[#allocation3 + $0x18] sm:$0xff]
    %v529 = vpack.c.bf16 %v523, %v523
    %v562 = vunpack.c.l.b16 %v67
    %v563 = vunpack.c.h.b16 %v67
    %v564 = vunpack.c.l.b16 %v68
    %v565 = vunpack.c.h.b16 %v68
    %v566 = vunpack.c.l.b16 %v69
    %v567 = vunpack.c.h.b16 %v69
    %v568 = vunpack.c.l.b16 %v70
    %v569 = vunpack.c.h.b16 %v70
    %v570 = vunpack.c.l.b16 %v71
    %v571 = vunpack.c.h.b16 %v71
    %v572 = vunpack.c.l.b16 %v72
    %v573 = vunpack.c.h.b16 %v72
    %v574 = vunpack.c.l.b16 %v73
    %v575 = vunpack.c.h.b16 %v73
    %v576 = vunpack.c.l.b16 %v74
    %v577 = vunpack.c.h.b16 %v74
    %v578 = vunpack.c.l.b16 %v75
    %v579 = vunpack.c.h.b16 %v75
    %v580 = vunpack.c.l.b16 %v76
    %v581 = vunpack.c.h.b16 %v76
    %v582 = vunpack.c.l.b16 %v77
    %v583 = vunpack.c.h.b16 %v77
    %v584 = vunpack.c.l.b16 %v78
    %v585 = vunpack.c.h.b16 %v78
    %v586 = vunpack.c.l.b16 %v79
    %v587 = vunpack.c.h.b16 %v79
    %v588 = vunpack.c.l.b16 %v80
    %v589 = vunpack.c.h.b16 %v80
    %v590 = vunpack.c.l.b16 %v81
    %v591 = vunpack.c.h.b16 %v81
    %v592 = vunpack.c.l.b16 %v82
    %v593 = vunpack.c.h.b16 %v82
    %v594 = vunpack.c.l.b16 %v83
    %v595 = vunpack.c.h.b16 %v83
    %v596 = vunpack.c.l.b16 %v84
    %v597 = vunpack.c.h.b16 %v84
    %v598 = vunpack.c.l.b16 %v85
    %v599 = vunpack.c.h.b16 %v85
    %v600 = vunpack.c.l.b16 %v86
    %v601 = vunpack.c.h.b16 %v86
    %v602 = vunpack.c.l.b16 %v87
    %v603 = vunpack.c.h.b16 %v87
    %v604 = vunpack.c.l.b16 %v88
    %v605 = vunpack.c.h.b16 %v88
    %v606 = vunpack.c.l.b16 %v89
    %v607 = vunpack.c.h.b16 %v89
    %v608 = vunpack.c.l.b16 %v90
    %v609 = vunpack.c.h.b16 %v90
    %v610 = vunpack.c.l.b16 %v91
    %v611 = vunpack.c.h.b16 %v91
    %v612 = vunpack.c.l.b16 %v92
    %v613 = vunpack.c.h.b16 %v92
    %v614 = vunpack.c.l.b16 %v93
    %v615 = vunpack.c.h.b16 %v93
    %v616 = vunpack.c.l.b16 %v94
    %v617 = vunpack.c.h.b16 %v94
    %v618 = vunpack.c.l.b16 %v95
    %v619 = vunpack.c.h.b16 %v95
    %v620 = vunpack.c.l.b16 %v96
    %v621 = vunpack.c.h.b16 %v96
    %v622 = vunpack.c.l.b16 %v97
    %v623 = vunpack.c.h.b16 %v97
    %v624 = vunpack.c.l.b16 %v98
    %v625 = vunpack.c.h.b16 %v98
    %v626 = vpack.c.b16 %v566, %v562
    %v627 = vpack.c.b16 %v567, %v563
    %v628 = vpack.c.b16 %v568, %v564
    %v629 = vpack.c.b16 %v569, %v565
    %v630 = vpack.c.b16 %v574, %v570
    %v631 = vpack.c.b16 %v575, %v571
    %v632 = vpack.c.b16 %v576, %v572
    %v633 = vpack.c.b16 %v577, %v573
    %v634 = vpack.c.b16 %v582, %v578
    %v635 = vpack.c.b16 %v583, %v579
    %v636 = vpack.c.b16 %v584, %v580
    %v637 = vpack.c.b16 %v585, %v581
    %v638 = vpack.c.b16 %v590, %v586
    %v639 = vpack.c.b16 %v591, %v587
    %v640 = vpack.c.b16 %v592, %v588
    %v641 = vpack.c.b16 %v593, %v589
    %v642 = vpack.c.b16 %v598, %v594
    %v643 = vpack.c.b16 %v599, %v595
    %v644 = vpack.c.b16 %v600, %v596
    %v645 = vpack.c.b16 %v601, %v597
    %v646 = vpack.c.b16 %v606, %v602
    %v647 = vpack.c.b16 %v607, %v603
    %v648 = vpack.c.b16 %v608, %v604
    %v649 = vpack.c.b16 %v609, %v605
    %v650 = vpack.c.b16 %v614, %v610
    %v651 = vpack.c.b16 %v615, %v611
    %v652 = vpack.c.b16 %v616, %v612
    %v653 = vpack.c.b16 %v617, %v613
    %v654 = vpack.c.b16 %v622, %v618
    %v655 = vpack.c.b16 %v623, %v619
    %v656 = vpack.c.b16 %v624, %v620
    %v657 = vpack.c.b16 %v625, %v621
    %690 = vmatprep.subr.bf16.mxu0 %v627
    %691 = vmatpush1.bf16.msra.mxu0 %v626
    %692 = vmatprep.subr.bf16.mxu0 %v631
    %693 = vmatpush1.bf16.msra.mxu0 %v630
    %694 = vmatprep.subr.bf16.mxu0 %v635
    %695 = vmatpush1.bf16.msra.mxu0 %v634
    %696 = vmatprep.subr.bf16.mxu0 %v639
    %697 = vmatpush1.bf16.msra.mxu0 %v638
    %698 = vmatprep.subr.bf16.mxu0 %v643
    %699 = vmatpush1.bf16.msra.mxu0 %v642
    %700 = vmatprep.subr.bf16.mxu0 %v647
    %701 = vmatpush1.bf16.msra.mxu0 %v646
    %702 = vmatprep.subr.bf16.mxu0 %v651
    %703 = vmatpush1.bf16.msra.mxu0 %v650
    %704 = vmatprep.subr.bf16.mxu0 %v655
    %705 = vmatpush1.bf16.msra.mxu0 %v654
    %706 = vmatprep.subr.bf16.mxu0 0
    %707 = vmatpush1.bf16.msra.mxu0 0
    %708 = vmatprep.subr.bf16.mxu0 0
    %709 = vmatpush1.bf16.msra.mxu0 0
    %710 = vmatprep.subr.bf16.mxu0 0
    %711 = vmatpush1.bf16.msra.mxu0 0
    %712 = vmatprep.subr.bf16.mxu0 0
    %713 = vmatpush1.bf16.msra.mxu0 0
    %714 = vmatprep.subr.bf16.mxu0 0
    %715 = vmatpush1.bf16.msra.mxu0 0
    %716 = vmatprep.subr.bf16.mxu0 0
    %717 = vmatpush1.bf16.msra.mxu0 0
    %718 = vmatprep.subr.bf16.mxu0 0
    %719 = vmatpush1.bf16.msra.mxu0 0
    %720 = vmatprep.subr.bf16.mxu0 0
    %721 = vmatpush1.bf16.msra.mxu0 0
    %722 = vmatprep.mubr.bf16.mxu0 0
    %723 = vmatmul.mubr.bf16.gmra.mrb[0].mxu0 %v529
    %v724 = vpop.f32.mrb[0].mxu0
    %v725 = vadd.f32 0.0, %v724
    %v726 = vpop.f32.mrb[0].mxu0
    %v727 = vadd.f32 0.0, %v726
    %v728 = vpop.f32.mrb[0].mxu0
    %v729 = vpop.f32.mrb[0].mxu0
    %730 = vdwg.mxu0
    %731 = vmatprep.subr.bf16.mxu0 %v629
    %732 = vmatpush1.bf16.msra.mxu0 %v628
    %733 = vmatprep.subr.bf16.mxu0 %v633
    %734 = vmatpush1.bf16.msra.mxu0 %v632
    %735 = vmatprep.subr.bf16.mxu0 %v637
    %736 = vmatpush1.bf16.msra.mxu0 %v636
    %737 = vmatprep.subr.bf16.mxu0 %v641
    %738 = vmatpush1.bf16.msra.mxu0 %v640
    %739 = vmatprep.subr.bf16.mxu0 %v645
    %740 = vmatpush1.bf16.msra.mxu0 %v644
    %741 = vmatprep.subr.bf16.mxu0 %v649
    %742 = vmatpush1.bf16.msra.mxu0 %v648
    %743 = vmatprep.subr.bf16.mxu0 %v653
    %744 = vmatpush1.bf16.msra.mxu0 %v652
    %745 = vmatprep.subr.bf16.mxu0 %v657
    %746 = vmatpush1.bf16.msra.mxu0 %v656
    %747 = vmatprep.subr.bf16.mxu0 0
    %748 = vmatpush1.bf16.msra.mxu0 0
    %749 = vmatprep.subr.bf16.mxu0 0
    %750 = vmatpush1.bf16.msra.mxu0 0
    %751 = vmatprep.subr.bf16.mxu0 0
    %752 = vmatpush1.bf16.msra.mxu0 0
    %753 = vmatprep.subr.bf16.mxu0 0
    %754 = vmatpush1.bf16.msra.mxu0 0
    %755 = vmatprep.subr.bf16.mxu0 0
    %756 = vmatpush1.bf16.msra.mxu0 0
    %757 = vmatprep.subr.bf16.mxu0 0
    %758 = vmatpush1.bf16.msra.mxu0 0
    %759 = vmatprep.subr.bf16.mxu0 0
    %760 = vmatpush1.bf16.msra.mxu0 0
    %761 = vmatprep.subr.bf16.mxu0 0
    %762 = vmatpush1.bf16.msra.mxu0 0
    %763 = vmatprep.mubr.bf16.mxu0 0
    %764 = vmatmul.mubr.bf16.gmra.mrb[0].mxu0 %v529
    %v765 = vpop.f32.mrb[0].mxu0
    %v766 = vadd.f32 0.0, %v765
    %v767 = vpop.f32.mrb[0].mxu0
    %v768 = vadd.f32 0.0, %v767
    %v769 = vpop.f32.mrb[0].mxu0
    %v770 = vpop.f32.mrb[0].mxu0
    %771 = vdwg.mxu0
    %v772 = vadd.f32 %v525, %v725
    %v773 = vadd.f32 %v526, %v727
    %v774 = vadd.f32 %v527, %v766
    %v775 = vadd.f32 %v528, %v768
    %v776 = vxor.u32 %v772, 2147483648
    %v777 = vmul.f32 %v776, 1.442695
    %v778 = vpow.pop %v777
    %v779 = vadd.f32 %v778, 1.0
    %v780 = vrcp.pop %v779
    %v781 = vmul.f32 1.0, %v780
    %v782 = vxor.u32 %v773, 2147483648
    %v783 = vmul.f32 %v782, 1.442695
    %v784 = vpow.pop %v783
    %v785 = vadd.f32 %v784, 1.0
    %v786 = vrcp.pop %v785
    %v787 = vmul.f32 1.0, %v786
    %v788 = vtanh.pop %v774
    %v789 = vxor.u32 %v775, 2147483648
    %v790 = vmul.f32 %v789, 1.442695
    %v791 = vpow.pop %v790
    %v792 = vadd.f32 %v791, 1.0
    %v793 = vrcp.pop %v792
    %v794 = vmul.f32 1.0, %v793
    %v795 = vmul.f32 %v787, %v524
    %v796 = vmul.f32 %v781, %v788
    %v797 = vadd.f32 %v795, %v796
    %v798 = vtanh.pop %v797
    %v799 = vmul.f32 %v794, %v798
    %v800 = vpack.c.bf16 %v799, %v799
    %801 = vst [vmem:[#allocation2] sm:$0xf] %v800
    %s802 = scalar_lea.vmem [#allocation3], 32
    %v803 = vld [vmem:[%s802] sm:$0xff]
    %v804 = vld [vmem:[%s802 + $0x8] sm:$0xff]
    %v805 = vld [vmem:[%s802 + $0x10] sm:$0xff]
    %v806 = vld [vmem:[%s802 + $0x18] sm:$0xff]
    %807 = vmatprep.subr.bf16.mxu0 %v627
    %808 = vmatpush1.bf16.msra.mxu0 %v626
    %809 = vmatprep.subr.bf16.mxu0 %v631
    %810 = vmatpush1.bf16.msra.mxu0 %v630
    %811 = vmatprep.subr.bf16.mxu0 %v635
    %812 = vmatpush1.bf16.msra.mxu0 %v634
    %813 = vmatprep.subr.bf16.mxu0 %v639
    %814 = vmatpush1.bf16.msra.mxu0 %v638
    %815 = vmatprep.subr.bf16.mxu0 %v643
    %816 = vmatpush1.bf16.msra.mxu0 %v642
    %817 = vmatprep.subr.bf16.mxu0 %v647
    %818 = vmatpush1.bf16.msra.mxu0 %v646
    %819 = vmatprep.subr.bf16.mxu0 %v651
    %820 = vmatpush1.bf16.msra.mxu0 %v650
    %821 = vmatprep.subr.bf16.mxu0 %v655
    %822 = vmatpush1.bf16.msra.mxu0 %v654
    %823 = vmatprep.subr.bf16.mxu0 0
    %824 = vmatpush1.bf16.msra.mxu0 0
    %825 = vmatprep.subr.bf16.mxu0 0
    %826 = vmatpush1.bf16.msra.mxu0 0
    %827 = vmatprep.subr.bf16.mxu0 0
    %828 = vmatpush1.bf16.msra.mxu0 0
    %829 = vmatprep.subr.bf16.mxu0 0
    %830 = vmatpush1.bf16.msra.mxu0 0
    %831 = vmatprep.subr.bf16.mxu0 0
    %832 = vmatpush1.bf16.msra.mxu0 0
    %833 = vmatprep.subr.bf16.mxu0 0
    %834 = vmatpush1.bf16.msra.mxu0 0
    %835 = vmatprep.subr.bf16.mxu0 0
    %836 = vmatpush1.bf16.msra.mxu0 0
    %837 = vmatprep.subr.bf16.mxu0 0
    %838 = vmatpush1.bf16.msra.mxu0 0
    %839 = vmatprep.mubr.bf16.mxu0 0
    %840 = vmatmul.mubr.bf16.gmra.mrb[0].mxu0 %v800
    %v841 = vpop.f32.mrb[0].mxu0
    %v842 = vadd.f32 0.0, %v841
    %v843 = vpop.f32.mrb[0].mxu0
    %v844 = vadd.f32 0.0, %v843
    %v845 = vpop.f32.mrb[0].mxu0
    %v846 = vpop.f32.mrb[0].mxu0
    %847 = vdwg.mxu0
    %848 = vmatprep.subr.bf16.mxu0 %v629
    %849 = vmatpush1.bf16.msra.mxu0 %v628
    %850 = vmatprep.subr.bf16.mxu0 %v633
    %851 = vmatpush1.bf16.msra.mxu0 %v632
    %852 = vmatprep.subr.bf16.mxu0 %v637
    %853 = vmatpush1.bf16.msra.mxu0 %v636
    %854 = vmatprep.subr.bf16.mxu0 %v641
    %855 = vmatpush1.bf16.msra.mxu0 %v640
    %856 = vmatprep.subr.bf16.mxu0 %v645
    %857 = vmatpush1.bf16.msra.mxu0 %v644
    %858 = vmatprep.subr.bf16.mxu0 %v649
    %859 = vmatpush1.bf16.msra.mxu0 %v648
    %860 = vmatprep.subr.bf16.mxu0 %v653
    %861 = vmatpush1.bf16.msra.mxu0 %v652
    %862 = vmatprep.subr.bf16.mxu0 %v657
    %863 = vmatpush1.bf16.msra.mxu0 %v656
    %864 = vmatprep.subr.bf16.mxu0 0
    %865 = vmatpush1.bf16.msra.mxu0 0
    %866 = vmatprep.subr.bf16.mxu0 0
    %867 = vmatpush1.bf16.msra.mxu0 0
    %868 = vmatprep.subr.bf16.mxu0 0
    %869 = vmatpush1.bf16.msra.mxu0 0
    %870 = vmatprep.subr.bf16.mxu0 0
    %871 = vmatpush1.bf16.msra.mxu0 0
    %872 = vmatprep.subr.bf16.mxu0 0
    %873 = vmatpush1.bf16.msra.mxu0 0
    %874 = vmatprep.subr.bf16.mxu0 0
    %875 = vmatpush1.bf16.msra.mxu0 0
    %876 = vmatprep.subr.bf16.mxu0 0
    %877 = vmatpush1.bf16.msra.mxu0 0
    %878 = vmatprep.subr.bf16.mxu0 0
    %879 = vmatpush1.bf16.msra.mxu0 0
    %880 = vmatprep.mubr.bf16.mxu0 0
    %881 = vmatmul.mubr.bf16.gmra.mrb[0].mxu0 %v800
    %v882 = vpop.f32.mrb[0].mxu0
    %v883 = vadd.f32 0.0, %v882
    %v884 = vpop.f32.mrb[0].mxu0
    %v885 = vadd.f32 0.0, %v884
    %v886 = vpop.f32.mrb[0].mxu0
    %v887 = vpop.f32.mrb[0].mxu0
    %888 = vdwg.mxu0
    %v889 = vadd.f32 %v803, %v842
    %v890 = vadd.f32 %v804, %v844
    %v891 = vadd.f32 %v805, %v883
    %v892 = vadd.f32 %v806, %v885
    %v893 = vxor.u32 %v889, 2147483648
    %v894 = vmul.f32 %v893, 1.442695
    %v895 = vpow.pop %v894
    %v896 = vadd.f32 %v895, 1.0
    %v897 = vrcp.pop %v896
    %v898 = vmul.f32 1.0, %v897
    %v899 = vxor.u32 %v890, 2147483648
    %v900 = vmul.f32 %v899, 1.442695
    %v901 = vpow.pop %v900
    %v902 = vadd.f32 %v901, 1.0
    %v903 = vrcp.pop %v902
    %v904 = vmul.f32 1.0, %v903
    %v905 = vtanh.pop %v891
    %v906 = vxor.u32 %v892, 2147483648
    %v907 = vmul.f32 %v906, 1.442695
    %v908 = vpow.pop %v907
    %v909 = vadd.f32 %v908, 1.0
    %v910 = vrcp.pop %v909
    %v911 = vmul.f32 1.0, %v910
    %v912 = vmul.f32 %v904, %v797
    %v913 = vmul.f32 %v898, %v905
    %v914 = vadd.f32 %v912, %v913
    %v915 = vtanh.pop %v914
    %v916 = vmul.f32 %v911, %v915
    %v917 = vpack.c.bf16 %v916, %v916
    %s918 = scalar_lea.vmem [#allocation2], 4
    %919 = vst [vmem:[%s918] sm:$0xf] %v917
    %s920 = scalar_lea.vmem [#allocation3], 64
    %v921 = vld [vmem:[%s920] sm:$0xff]
    %v922 = vld [vmem:[%s920 + $0x8] sm:$0xff]
    %v923 = vld [vmem:[%s920 + $0x10] sm:$0xff]
    %v924 = vld [vmem:[%s920 + $0x18] sm:$0xff]
    %925 = vmatprep.subr.bf16.mxu0 %v627
    %926 = vmatpush1.bf16.msra.mxu0 %v626
    %927 = vmatprep.subr.bf16.mxu0 %v631
    %928 = vmatpush1.bf16.msra.mxu0 %v630
    %929 = vmatprep.subr.bf16.mxu0 %v635
    %930 = vmatpush1.bf16.msra.mxu0 %v634
    %931 = vmatprep.subr.bf16.mxu0 %v639
    %932 = vmatpush1.bf16.msra.mxu0 %v638
    %933 = vmatprep.subr.bf16.mxu0 %v643
    %934 = vmatpush1.bf16.msra.mxu0 %v642
    %935 = vmatprep.subr.bf16.mxu0 %v647
    %936 = vmatpush1.bf16.msra.mxu0 %v646
    %937 = vmatprep.subr.bf16.mxu0 %v651
    %938 = vmatpush1.bf16.msra.mxu0 %v650
    %939 = vmatprep.subr.bf16.mxu0 %v655
    %940 = vmatpush1.bf16.msra.mxu0 %v654
    %941 = vmatprep.subr.bf16.mxu0 0
    %942 = vmatpush1.bf16.msra.mxu0 0
    %943 = vmatprep.subr.bf16.mxu0 0
    %944 = vmatpush1.bf16.msra.mxu0 0
    %945 = vmatprep.subr.bf16.mxu0 0
    %946 = vmatpush1.bf16.msra.mxu0 0
    %947 = vmatprep.subr.bf16.mxu0 0
    %948 = vmatpush1.bf16.msra.mxu0 0
    %949 = vmatprep.subr.bf16.mxu0 0
    %950 = vmatpush1.bf16.msra.mxu0 0
    %951 = vmatprep.subr.bf16.mxu0 0
    %952 = vmatpush1.bf16.msra.mxu0 0
    %953 = vmatprep.subr.bf16.mxu0 0
    %954 = vmatpush1.bf16.msra.mxu0 0
    %955 = vmatprep.subr.bf16.mxu0 0
    %956 = vmatpush1.bf16.msra.mxu0 0
    %957 = vmatprep.mubr.bf16.mxu0 0
    %958 = vmatmul.mubr.bf16.gmra.mrb[0].mxu0 %v917
    %v959 = vpop.f32.mrb[0].mxu0
    %v960 = vadd.f32 0.0, %v959
    %v961 = vpop.f32.mrb[0].mxu0
    %v962 = vadd.f32 0.0, %v961
    %v963 = vpop.f32.mrb[0].mxu0
    %v964 = vpop.f32.mrb[0].mxu0
    %965 = vdwg.mxu0
    %966 = vmatprep.subr.bf16.mxu0 %v629
    %967 = vmatpush1.bf16.msra.mxu0 %v628
    %968 = vmatprep.subr.bf16.mxu0 %v633
    %969 = vmatpush1.bf16.msra.mxu0 %v632
    %970 = vmatprep.subr.bf16.mxu0 %v637
    %971 = vmatpush1.bf16.msra.mxu0 %v636
    %972 = vmatprep.subr.bf16.mxu0 %v641
    %973 = vmatpush1.bf16.msra.mxu0 %v640
    %974 = vmatprep.subr.bf16.mxu0 %v645
    %975 = vmatpush1.bf16.msra.mxu0 %v644
    %976 = vmatprep.subr.bf16.mxu0 %v649
    %977 = vmatpush1.bf16.msra.mxu0 %v648
    %978 = vmatprep.subr.bf16.mxu0 %v653
    %979 = vmatpush1.bf16.msra.mxu0 %v652
    %980 = vmatprep.subr.bf16.mxu0 %v657
    %981 = vmatpush1.bf16.msra.mxu0 %v656
    %982 = vmatprep.subr.bf16.mxu0 0
    %983 = vmatpush1.bf16.msra.mxu0 0
    %984 = vmatprep.subr.bf16.mxu0 0
    %985 = vmatpush1.bf16.msra.mxu0 0
    %986 = vmatprep.subr.bf16.mxu0 0
    %987 = vmatpush1.bf16.msra.mxu0 0
    %988 = vmatprep.subr.bf16.mxu0 0
    %989 = vmatpush1.bf16.msra.mxu0 0
    %990 = vmatprep.subr.bf16.mxu0 0
    %991 = vmatpush1.bf16.msra.mxu0 0
    %992 = vmatprep.subr.bf16.mxu0 0
    %993 = vmatpush1.bf16.msra.mxu0 0
    %994 = vmatprep.subr.bf16.mxu0 0
    %995 = vmatpush1.bf16.msra.mxu0 0
    %996 = vmatprep.subr.bf16.mxu0 0
    %997 = vmatpush1.bf16.msra.mxu0 0
    %998 = vmatprep.mubr.bf16.mxu0 0
    %999 = vmatmul.mubr.bf16.gmra.mrb[0].mxu0 %v917
    %v1000 = vpop.f32.mrb[0].mxu0
    %v1001 = vadd.f32 0.0, %v1000
    %v1002 = vpop.f32.mrb[0].mxu0
    %v1003 = vadd.f32 0.0, %v1002
    %v1004 = vpop.f32.mrb[0].mxu0
    %v1005 = vpop.f32.mrb[0].mxu0
    %1006 = vdwg.mxu0
    %v1007 = vadd.f32 %v921, %v960
    %v1008 = vadd.f32 %v922, %v962
    %v1009 = vadd.f32 %v923, %v1001
    %v1010 = vadd.f32 %v924, %v1003
    %v1011 = vxor.u32 %v1007, 2147483648
    %v1012 = vmul.f32 %v1011, 1.442695
    %v1013 = vpow.pop %v1012
    %v1014 = vadd.f32 %v1013, 1.0
    %v1015 = vrcp.pop %v1014
    %v1016 = vmul.f32 1.0, %v1015
    %v1017 = vxor.u32 %v1008, 2147483648
    %v1018 = vmul.f32 %v1017, 1.442695
    %v1019 = vpow.pop %v1018
    %v1020 = vadd.f32 %v1019, 1.0
    %v1021 = vrcp.pop %v1020
    %v1022 = vmul.f32 1.0, %v1021
    %v1023 = vtanh.pop %v1009
    %v1024 = vxor.u32 %v1010, 2147483648
    %v1025 = vmul.f32 %v1024, 1.442695
    %v1026 = vpow.pop %v1025
    %v1027 = vadd.f32 %v1026, 1.0
    %v1028 = vrcp.pop %v1027
    %v1029 = vmul.f32 1.0, %v1028
    %v1030 = vmul.f32 %v1022, %v914
    %v1031 = vmul.f32 %v1016, %v1023
    %v1032 = vadd.f32 %v1030, %v1031
    %v1033 = vtanh.pop %v1032
    %v1034 = vmul.f32 %v1029, %v1033
    %v1035 = vpack.c.bf16 %v1034, %v1034
    %s1036 = scalar_lea.vmem [#allocation2], 8
    %1037 = vst [vmem:[%s1036] sm:$0xf] %v1035
    %s1038 = scalar_lea.vmem [#allocation3], 96
    %v1039 = vld [vmem:[%s1038] sm:$0xff]
    %v1040 = vld [vmem:[%s1038 + $0x8] sm:$0xff]
    %v1041 = vld [vmem:[%s1038 + $0x10] sm:$0xff]
    %v1042 = vld [vmem:[%s1038 + $0x18] sm:$0xff]
    %1043 = vmatprep.subr.bf16.mxu0 %v627
    %1044 = vmatpush1.bf16.msra.mxu0 %v626
    %1045 = vmatprep.subr.bf16.mxu0 %v631
    %1046 = vmatpush1.bf16.msra.mxu0 %v630
    %1047 = vmatprep.subr.bf16.mxu0 %v635
    %1048 = vmatpush1.bf16.msra.mxu0 %v634
    %1049 = vmatprep.subr.bf16.mxu0 %v639
    %1050 = vmatpush1.bf16.msra.mxu0 %v638
    %1051 = vmatprep.subr.bf16.mxu0 %v643
    %1052 = vmatpush1.bf16.msra.mxu0 %v642
    %1053 = vmatprep.subr.bf16.mxu0 %v647
    %1054 = vmatpush1.bf16.msra.mxu0 %v646
    %1055 = vmatprep.subr.bf16.mxu0 %v651
    %1056 = vmatpush1.bf16.msra.mxu0 %v650
    %1057 = vmatprep.subr.bf16.mxu0 %v655
    %1058 = vmatpush1.bf16.msra.mxu0 %v654
    %1059 = vmatprep.subr.bf16.mxu0 0
    %1060 = vmatpush1.bf16.msra.mxu0 0
    %1061 = vmatprep.subr.bf16.mxu0 0
    %1062 = vmatpush1.bf16.msra.mxu0 0
    %1063 = vmatprep.subr.bf16.mxu0 0
    %1064 = vmatpush1.bf16.msra.mxu0 0
    %1065 = vmatprep.subr.bf16.mxu0 0
    %1066 = vmatpush1.bf16.msra.mxu0 0
    %1067 = vmatprep.subr.bf16.mxu0 0
    %1068 = vmatpush1.bf16.msra.mxu0 0
    %1069 = vmatprep.subr.bf16.mxu0 0
    %1070 = vmatpush1.bf16.msra.mxu0 0
    %1071 = vmatprep.subr.bf16.mxu0 0
    %1072 = vmatpush1.bf16.msra.mxu0 0
    %1073 = vmatprep.subr.bf16.mxu0 0
    %1074 = vmatpush1.bf16.msra.mxu0 0
    %1075 = vmatprep.mubr.bf16.mxu0 0
    %1076 = vmatmul.mubr.bf16.gmra.mrb[0].mxu0 %v1035
    %v1077 = vpop.f32.mrb[0].mxu0
    %v1078 = vadd.f32 0.0, %v1077
    %v1079 = vpop.f32.mrb[0].mxu0
    %v1080 = vadd.f32 0.0, %v1079
    %v1081 = vpop.f32.mrb[0].mxu0
    %v1082 = vpop.f32.mrb[0].mxu0
    %1083 = vdwg.mxu0
    %1084 = vmatprep.subr.bf16.mxu0 %v629
    %1085 = vmatpush1.bf16.msra.mxu0 %v628
    %1086 = vmatprep.subr.bf16.mxu0 %v633
    %1087 = vmatpush1.bf16.msra.mxu0 %v632
    %1088 = vmatprep.subr.bf16.mxu0 %v637
    %1089 = vmatpush1.bf16.msra.mxu0 %v636
    %1090 = vmatprep.subr.bf16.mxu0 %v641
    %1091 = vmatpush1.bf16.msra.mxu0 %v640
    %1092 = vmatprep.subr.bf16.mxu0 %v645
    %1093 = vmatpush1.bf16.msra.mxu0 %v644
    %1094 = vmatprep.subr.bf16.mxu0 %v649
    %1095 = vmatpush1.bf16.msra.mxu0 %v648
    %1096 = vmatprep.subr.bf16.mxu0 %v653
    %1097 = vmatpush1.bf16.msra.mxu0 %v652
    %1098 = vmatprep.subr.bf16.mxu0 %v657
    %1099 = vmatpush1.bf16.msra.mxu0 %v656
    %1100 = vmatprep.subr.bf16.mxu0 0
    %1101 = vmatpush1.bf16.msra.mxu0 0
    %1102 = vmatprep.subr.bf16.mxu0 0
    %1103 = vmatpush1.bf16.msra.mxu0 0
    %1104 = vmatprep.subr.bf16.mxu0 0
    %1105 = vmatpush1.bf16.msra.mxu0 0
    %1106 = vmatprep.subr.bf16.mxu0 0
    %1107 = vmatpush1.bf16.msra.mxu0 0
    %1108 = vmatprep.subr.bf16.mxu0 0
    %1109 = vmatpush1.bf16.msra.mxu0 0
    %1110 = vmatprep.subr.bf16.mxu0 0
    %1111 = vmatpush1.bf16.msra.mxu0 0
    %1112 = vmatprep.subr.bf16.mxu0 0
    %1113 = vmatpush1.bf16.msra.mxu0 0
    %1114 = vmatprep.subr.bf16.mxu0 0
    %1115 = vmatpush1.bf16.msra.mxu0 0
    %1116 = vmatprep.mubr.bf16.mxu0 0
    %1117 = vmatmul.mubr.bf16.gmra.mrb[0].mxu0 %v1035
    %v1118 = vpop.f32.mrb[0].mxu0
    %v1119 = vadd.f32 0.0, %v1118
    %v1120 = vpop.f32.mrb[0].mxu0
    %v1121 = vadd.f32 0.0, %v1120
    %v1122 = vpop.f32.mrb[0].mxu0
    %v1123 = vpop.f32.mrb[0].mxu0
    %1124 = vdwg.mxu0
    %v1125 = vadd.f32 %v1039, %v1078
    %v1126 = vadd.f32 %v1040, %v1080
    %v1127 = vadd.f32 %v1041, %v1119
    %v1128 = vadd.f32 %v1042, %v1121
    %v1129 = vxor.u32 %v1125, 2147483648
    %v1130 = vmul.f32 %v1129, 1.442695
    %v1131 = vpow.pop %v1130
    %v1132 = vadd.f32 %v1131, 1.0
    %v1133 = vrcp.pop %v1132
    %v1134 = vmul.f32 1.0, %v1133
    %v1135 = vxor.u32 %v1126, 2147483648
    %v1136 = vmul.f32 %v1135, 1.442695
    %v1137 = vpow.pop %v1136
    %v1138 = vadd.f32 %v1137, 1.0
    %v1139 = vrcp.pop %v1138
    %v1140 = vmul.f32 1.0, %v1139
    %v1141 = vtanh.pop %v1127
    %v1142 = vxor.u32 %v1128, 2147483648
    %v1143 = vmul.f32 %v1142, 1.442695
    %v1144 = vpow.pop %v1143
    %v1145 = vadd.f32 %v1144, 1.0
    %v1146 = vrcp.pop %v1145
    %v1147 = vmul.f32 1.0, %v1146
    %v1148 = vmul.f32 %v1140, %v1032
    %v1149 = vmul.f32 %v1134, %v1141
    %v1150 = vadd.f32 %v1148, %v1149
    %v1151 = vtanh.pop %v1150
    %v1152 = vmul.f32 %v1147, %v1151
    %v1153 = vpack.c.bf16 %v1152, %v1152
    %s1154 = scalar_lea.vmem [#allocation2], 12
    %1155 = vst [vmem:[%s1154] sm:$0xf] %v1153
    %s1156 = scalar_lea.vmem [#allocation3], 128
    %v1157 = vld [vmem:[%s1156] sm:$0xff]
    %v1158 = vld [vmem:[%s1156 + $0x8] sm:$0xff]
    %v1159 = vld [vmem:[%s1156 + $0x10] sm:$0xff]
    %v1160 = vld [vmem:[%s1156 + $0x18] sm:$0xff]
    %1161 = vmatprep.subr.bf16.mxu0 %v627
    %1162 = vmatpush1.bf16.msra.mxu0 %v626
    %1163 = vmatprep.subr.bf16.mxu0 %v631
    %1164 = vmatpush1.bf16.msra.mxu0 %v630
    %1165 = vmatprep.subr.bf16.mxu0 %v635
    %1166 = vmatpush1.bf16.msra.mxu0 %v634
    %1167 = vmatprep.subr.bf16.mxu0 %v639
    %1168 = vmatpush1.bf16.msra.mxu0 %v638
    %1169 = vmatprep.subr.bf16.mxu0 %v643
    %1170 = vmatpush1.bf16.msra.mxu0 %v642
    %1171 = vmatprep.subr.bf16.mxu0 %v647
    %1172 = vmatpush1.bf16.msra.mxu0 %v646
    %1173 = vmatprep.subr.bf16.mxu0 %v651
    %1174 = vmatpush1.bf16.msra.mxu0 %v650
    %1175 = vmatprep.subr.bf16.mxu0 %v655
    %1176 = vmatpush1.bf16.msra.mxu0 %v654
    %1177 = vmatprep.subr.bf16.mxu0 0
    %1178 = vmatpush1.bf16.msra.mxu0 0
    %1179 = vmatprep.subr.bf16.mxu0 0
    %1180 = vmatpush1.bf16.msra.mxu0 0
    %1181 = vmatprep.subr.bf16.mxu0 0
    %1182 = vmatpush1.bf16.msra.mxu0 0
    %1183 = vmatprep.subr.bf16.mxu0 0
    %1184 = vmatpush1.bf16.msra.mxu0 0
    %1185 = vmatprep.subr.bf16.mxu0 0
    %1186 = vmatpush1.bf16.msra.mxu0 0
    %1187 = vmatprep.subr.bf16.mxu0 0
    %1188 = vmatpush1.bf16.msra.mxu0 0
    %1189 = vmatprep.subr.bf16.mxu0 0
    %1190 = vmatpush1.bf16.msra.mxu0 0
    %1191 = vmatprep.subr.bf16.mxu0 0
    %1192 = vmatpush1.bf16.msra.mxu0 0
    %1193 = vmatprep.mubr.bf16.mxu0 0
    %1194 = vmatmul.mubr.bf16.gmra.mrb[0].mxu0 %v1153
    %v1195 = vpop.f32.mrb[0].mxu0
    %v1196 = vadd.f32 0.0, %v1195
    %v1197 = vpop.f32.mrb[0].mxu0
    %v1198 = vadd.f32 0.0, %v1197
    %v1199 = vpop.f32.mrb[0].mxu0
    %v1200 = vpop.f32.mrb[0].mxu0
    %1201 = vdwg.mxu0
    %1202 = vmatprep.subr.bf16.mxu0 %v629
    %1203 = vmatpush1.bf16.msra.mxu0 %v628
    %1204 = vmatprep.subr.bf16.mxu0 %v633
    %1205 = vmatpush1.bf16.msra.mxu0 %v632
    %1206 = vmatprep.subr.bf16.mxu0 %v637
    %1207 = vmatpush1.bf16.msra.mxu0 %v636
    %1208 = vmatprep.subr.bf16.mxu0 %v641
    %1209 = vmatpush1.bf16.msra.mxu0 %v640
    %1210 = vmatprep.subr.bf16.mxu0 %v645
    %1211 = vmatpush1.bf16.msra.mxu0 %v644
    %1212 = vmatprep.subr.bf16.mxu0 %v649
    %1213 = vmatpush1.bf16.msra.mxu0 %v648
    %1214 = vmatprep.subr.bf16.mxu0 %v653
    %1215 = vmatpush1.bf16.msra.mxu0 %v652
    %1216 = vmatprep.subr.bf16.mxu0 %v657
    %1217 = vmatpush1.bf16.msra.mxu0 %v656
    %1218 = vmatprep.subr.bf16.mxu0 0
    %1219 = vmatpush1.bf16.msra.mxu0 0
    %1220 = vmatprep.subr.bf16.mxu0 0
    %1221 = vmatpush1.bf16.msra.mxu0 0
    %1222 = vmatprep.subr.bf16.mxu0 0
    %1223 = vmatpush1.bf16.msra.mxu0 0
    %1224 = vmatprep.subr.bf16.mxu0 0
    %1225 = vmatpush1.bf16.msra.mxu0 0
    %1226 = vmatprep.subr.bf16.mxu0 0
    %1227 = vmatpush1.bf16.msra.mxu0 0
    %1228 = vmatprep.subr.bf16.mxu0 0
    %1229 = vmatpush1.bf16.msra.mxu0 0
    %1230 = vmatprep.subr.bf16.mxu0 0
    %1231 = vmatpush1.bf16.msra.mxu0 0
    %1232 = vmatprep.subr.bf16.mxu0 0
    %1233 = vmatpush1.bf16.msra.mxu0 0
    %1234 = vmatprep.mubr.bf16.mxu0 0
    %1235 = vmatmul.mubr.bf16.gmra.mrb[0].mxu0 %v1153
    %v1236 = vpop.f32.mrb[0].mxu0
    %v1237 = vadd.f32 0.0, %v1236
    %v1238 = vpop.f32.mrb[0].mxu0
    %v1239 = vadd.f32 0.0, %v1238
    %v1240 = vpop.f32.mrb[0].mxu0
    %v1241 = vpop.f32.mrb[0].mxu0
    %1242 = vdwg.mxu0
    %v1243 = vadd.f32 %v1157, %v1196
    %v1244 = vadd.f32 %v1158, %v1198
    %v1245 = vadd.f32 %v1159, %v1237
    %v1246 = vadd.f32 %v1160, %v1239
    %v1247 = vxor.u32 %v1243, 2147483648
    %v1248 = vmul.f32 %v1247, 1.442695
    %v1249 = vpow.pop %v1248
    %v1250 = vadd.f32 %v1249, 1.0
    %v1251 = vrcp.pop %v1250
    %v1252 = vmul.f32 1.0, %v1251
    %v1253 = vxor.u32 %v1244, 2147483648
    %v1254 = vmul.f32 %v1253, 1.442695
    %v1255 = vpow.pop %v1254
    %v1256 = vadd.f32 %v1255, 1.0
    %v1257 = vrcp.pop %v1256
    %v1258 = vmul.f32 1.0, %v1257
    %v1259 = vtanh.pop %v1245
    %v1260 = vxor.u32 %v1246, 2147483648
    %v1261 = vmul.f32 %v1260, 1.442695
    %v1262 = vpow.pop %v1261
    %v1263 = vadd.f32 %v1262, 1.0
    %v1264 = vrcp.pop %v1263
    %v1265 = vmul.f32 1.0, %v1264
    %v1266 = vmul.f32 %v1258, %v1150
    %v1267 = vmul.f32 %v1252, %v1259
    %v1268 = vadd.f32 %v1266, %v1267
    %v1269 = vtanh.pop %v1268
    %v1270 = vmul.f32 %v1265, %v1269
    %v1271 = vpack.c.bf16 %v1270, %v1270
    %s1272 = scalar_lea.vmem [#allocation2], 16
    %1273 = vst [vmem:[%s1272] sm:$0xf] %v1271
    %s1274 = scalar_lea.vmem [#allocation3], 160
    %v1275 = vld [vmem:[%s1274] sm:$0xff]
    %v1276 = vld [vmem:[%s1274 + $0x8] sm:$0xff]
    %v1277 = vld [vmem:[%s1274 + $0x10] sm:$0xff]
    %v1278 = vld [vmem:[%s1274 + $0x18] sm:$0xff]
    %1279 = vmatprep.subr.bf16.mxu0 %v627
    %1280 = vmatpush1.bf16.msra.mxu0 %v626
    %1281 = vmatprep.subr.bf16.mxu0 %v631
    %1282 = vmatpush1.bf16.msra.mxu0 %v630
    %1283 = vmatprep.subr.bf16.mxu0 %v635
    %1284 = vmatpush1.bf16.msra.mxu0 %v634
    %1285 = vmatprep.subr.bf16.mxu0 %v639
    %1286 = vmatpush1.bf16.msra.mxu0 %v638
    %1287 = vmatprep.subr.bf16.mxu0 %v643
    %1288 = vmatpush1.bf16.msra.mxu0 %v642
    %1289 = vmatprep.subr.bf16.mxu0 %v647
    %1290 = vmatpush1.bf16.msra.mxu0 %v646
    %1291 = vmatprep.subr.bf16.mxu0 %v651
    %1292 = vmatpush1.bf16.msra.mxu0 %v650
    %1293 = vmatprep.subr.bf16.mxu0 %v655
    %1294 = vmatpush1.bf16.msra.mxu0 %v654
    %1295 = vmatprep.subr.bf16.mxu0 0
    %1296 = vmatpush1.bf16.msra.mxu0 0
    %1297 = vmatprep.subr.bf16.mxu0 0
    %1298 = vmatpush1.bf16.msra.mxu0 0
    %1299 = vmatprep.subr.bf16.mxu0 0
    %1300 = vmatpush1.bf16.msra.mxu0 0
    %1301 = vmatprep.subr.bf16.mxu0 0
    %1302 = vmatpush1.bf16.msra.mxu0 0
    %1303 = vmatprep.subr.bf16.mxu0 0
    %1304 = vmatpush1.bf16.msra.mxu0 0
    %1305 = vmatprep.subr.bf16.mxu0 0
    %1306 = vmatpush1.bf16.msra.mxu0 0
    %1307 = vmatprep.subr.bf16.mxu0 0
    %1308 = vmatpush1.bf16.msra.mxu0 0
    %1309 = vmatprep.subr.bf16.mxu0 0
    %1310 = vmatpush1.bf16.msra.mxu0 0
    %1311 = vmatprep.mubr.bf16.mxu0 0
    %1312 = vmatmul.mubr.bf16.gmra.mrb[0].mxu0 %v1271
    %v1313 = vpop.f32.mrb[0].mxu0
    %v1314 = vadd.f32 0.0, %v1313
    %v1315 = vpop.f32.mrb[0].mxu0
    %v1316 = vadd.f32 0.0, %v1315
    %v1317 = vpop.f32.mrb[0].mxu0
    %v1318 = vpop.f32.mrb[0].mxu0
    %1319 = vdwg.mxu0
    %1320 = vmatprep.subr.bf16.mxu0 %v629
    %1321 = vmatpush1.bf16.msra.mxu0 %v628
    %1322 = vmatprep.subr.bf16.mxu0 %v633
    %1323 = vmatpush1.bf16.msra.mxu0 %v632
    %1324 = vmatprep.subr.bf16.mxu0 %v637
    %1325 = vmatpush1.bf16.msra.mxu0 %v636
    %1326 = vmatprep.subr.bf16.mxu0 %v641
    %1327 = vmatpush1.bf16.msra.mxu0 %v640
    %1328 = vmatprep.subr.bf16.mxu0 %v645
    %1329 = vmatpush1.bf16.msra.mxu0 %v644
    %1330 = vmatprep.subr.bf16.mxu0 %v649
    %1331 = vmatpush1.bf16.msra.mxu0 %v648
    %1332 = vmatprep.subr.bf16.mxu0 %v653
    %1333 = vmatpush1.bf16.msra.mxu0 %v652
    %1334 = vmatprep.subr.bf16.mxu0 %v657
    %1335 = vmatpush1.bf16.msra.mxu0 %v656
    %1336 = vmatprep.subr.bf16.mxu0 0
    %1337 = vmatpush1.bf16.msra.mxu0 0
    %1338 = vmatprep.subr.bf16.mxu0 0
    %1339 = vmatpush1.bf16.msra.mxu0 0
    %1340 = vmatprep.subr.bf16.mxu0 0
    %1341 = vmatpush1.bf16.msra.mxu0 0
    %1342 = vmatprep.subr.bf16.mxu0 0
    %1343 = vmatpush1.bf16.msra.mxu0 0
    %1344 = vmatprep.subr.bf16.mxu0 0
    %1345 = vmatpush1.bf16.msra.mxu0 0
    %1346 = vmatprep.subr.bf16.mxu0 0
    %1347 = vmatpush1.bf16.msra.mxu0 0
    %1348 = vmatprep.subr.bf16.mxu0 0
    %1349 = vmatpush1.bf16.msra.mxu0 0
    %1350 = vmatprep.subr.bf16.mxu0 0
    %1351 = vmatpush1.bf16.msra.mxu0 0
    %1352 = vmatprep.mubr.bf16.mxu0 0
    %1353 = vmatmul.mubr.bf16.gmra.mrb[0].mxu0 %v1271
    %v1354 = vpop.f32.mrb[0].mxu0
    %v1355 = vadd.f32 0.0, %v1354
    %v1356 = vpop.f32.mrb[0].mxu0
    %v1357 = vadd.f32 0.0, %v1356
    %v1358 = vpop.f32.mrb[0].mxu0
    %v1359 = vpop.f32.mrb[0].mxu0
    %1360 = vdwg.mxu0
    %v1361 = vadd.f32 %v1275, %v1314
    %v1362 = vadd.f32 %v1276, %v1316
    %v1363 = vadd.f32 %v1277, %v1355
    %v1364 = vadd.f32 %v1278, %v1357
    %v1365 = vxor.u32 %v1361, 2147483648
    %v1366 = vmul.f32 %v1365, 1.442695
    %v1367 = vpow.pop %v1366
    %v1368 = vadd.f32 %v1367, 1.0
    %v1369 = vrcp.pop %v1368
    %v1370 = vmul.f32 1.0, %v1369
    %v1371 = vxor.u32 %v1362, 2147483648
    %v1372 = vmul.f32 %v1371, 1.442695
    %v1373 = vpow.pop %v1372
    %v1374 = vadd.f32 %v1373, 1.0
    %v1375 = vrcp.pop %v1374
    %v1376 = vmul.f32 1.0, %v1375
    %v1377 = vtanh.pop %v1363
    %v1378 = vxor.u32 %v1364, 2147483648
    %v1379 = vmul.f32 %v1378, 1.442695
    %v1380 = vpow.pop %v1379
    %v1381 = vadd.f32 %v1380, 1.0
    %v1382 = vrcp.pop %v1381
    %v1383 = vmul.f32 1.0, %v1382
    %v1384 = vmul.f32 %v1376, %v1268
    %v1385 = vmul.f32 %v1370, %v1377
    %v1386 = vadd.f32 %v1384, %v1385
    %v1387 = vtanh.pop %v1386
    %v1388 = vmul.f32 %v1383, %v1387
    %v1389 = vpack.c.bf16 %v1388, %v1388
    %s1390 = scalar_lea.vmem [#allocation2], 20
    %1391 = vst [vmem:[%s1390] sm:$0xf] %v1389
    %s1392 = scalar_lea.vmem [#allocation3], 192
    %v1393 = vld [vmem:[%s1392] sm:$0xff]
    %v1394 = vld [vmem:[%s1392 + $0x8] sm:$0xff]
    %v1395 = vld [vmem:[%s1392 + $0x10] sm:$0xff]
    %v1396 = vld [vmem:[%s1392 + $0x18] sm:$0xff]
    %1397 = vmatprep.subr.bf16.mxu0 %v627
    %1398 = vmatpush1.bf16.msra.mxu0 %v626
    %1399 = vmatprep.subr.bf16.mxu0 %v631
    %1400 = vmatpush1.bf16.msra.mxu0 %v630
    %1401 = vmatprep.subr.bf16.mxu0 %v635
    %1402 = vmatpush1.bf16.msra.mxu0 %v634
    %1403 = vmatprep.subr.bf16.mxu0 %v639
    %1404 = vmatpush1.bf16.msra.mxu0 %v638
    %1405 = vmatprep.subr.bf16.mxu0 %v643
    %1406 = vmatpush1.bf16.msra.mxu0 %v642
    %1407 = vmatprep.subr.bf16.mxu0 %v647
    %1408 = vmatpush1.bf16.msra.mxu0 %v646
    %1409 = vmatprep.subr.bf16.mxu0 %v651
    %1410 = vmatpush1.bf16.msra.mxu0 %v650
    %1411 = vmatprep.subr.bf16.mxu0 %v655
    %1412 = vmatpush1.bf16.msra.mxu0 %v654
    %1413 = vmatprep.subr.bf16.mxu0 0
    %1414 = vmatpush1.bf16.msra.mxu0 0
    %1415 = vmatprep.subr.bf16.mxu0 0
    %1416 = vmatpush1.bf16.msra.mxu0 0
    %1417 = vmatprep.subr.bf16.mxu0 0
    %1418 = vmatpush1.bf16.msra.mxu0 0
    %1419 = vmatprep.subr.bf16.mxu0 0
    %1420 = vmatpush1.bf16.msra.mxu0 0
    %1421 = vmatprep.subr.bf16.mxu0 0
    %1422 = vmatpush1.bf16.msra.mxu0 0
    %1423 = vmatprep.subr.bf16.mxu0 0
    %1424 = vmatpush1.bf16.msra.mxu0 0
    %1425 = vmatprep.subr.bf16.mxu0 0
    %1426 = vmatpush1.bf16.msra.mxu0 0
    %1427 = vmatprep.subr.bf16.mxu0 0
    %1428 = vmatpush1.bf16.msra.mxu0 0
    %1429 = vmatprep.mubr.bf16.mxu0 0
    %1430 = vmatmul.mubr.bf16.gmra.mrb[0].mxu0 %v1389
    %v1431 = vpop.f32.mrb[0].mxu0
    %v1432 = vadd.f32 0.0, %v1431
    %v1433 = vpop.f32.mrb[0].mxu0
    %v1434 = vadd.f32 0.0, %v1433
    %v1435 = vpop.f32.mrb[0].mxu0
    %v1436 = vpop.f32.mrb[0].mxu0
    %1437 = vdwg.mxu0
    %1438 = vmatprep.subr.bf16.mxu0 %v629
    %1439 = vmatpush1.bf16.msra.mxu0 %v628
    %1440 = vmatprep.subr.bf16.mxu0 %v633
    %1441 = vmatpush1.bf16.msra.mxu0 %v632
    %1442 = vmatprep.subr.bf16.mxu0 %v637
    %1443 = vmatpush1.bf16.msra.mxu0 %v636
    %1444 = vmatprep.subr.bf16.mxu0 %v641
    %1445 = vmatpush1.bf16.msra.mxu0 %v640
    %1446 = vmatprep.subr.bf16.mxu0 %v645
    %1447 = vmatpush1.bf16.msra.mxu0 %v644
    %1448 = vmatprep.subr.bf16.mxu0 %v649
    %1449 = vmatpush1.bf16.msra.mxu0 %v648
    %1450 = vmatprep.subr.bf16.mxu0 %v653
    %1451 = vmatpush1.bf16.msra.mxu0 %v652
    %1452 = vmatprep.subr.bf16.mxu0 %v657
    %1453 = vmatpush1.bf16.msra.mxu0 %v656
    %1454 = vmatprep.subr.bf16.mxu0 0
    %1455 = vmatpush1.bf16.msra.mxu0 0
    %1456 = vmatprep.subr.bf16.mxu0 0
    %1457 = vmatpush1.bf16.msra.mxu0 0
    %1458 = vmatprep.subr.bf16.mxu0 0
    %1459 = vmatpush1.bf16.msra.mxu0 0
    %1460 = vmatprep.subr.bf16.mxu0 0
    %1461 = vmatpush1.bf16.msra.mxu0 0
    %1462 = vmatprep.subr.bf16.mxu0 0
    %1463 = vmatpush1.bf16.msra.mxu0 0
    %1464 = vmatprep.subr.bf16.mxu0 0
    %1465 = vmatpush1.bf16.msra.mxu0 0
    %1466 = vmatprep.subr.bf16.mxu0 0
    %1467 = vmatpush1.bf16.msra.mxu0 0
    %1468 = vmatprep.subr.bf16.mxu0 0
    %1469 = vmatpush1.bf16.msra.mxu0 0
    %1470 = vmatprep.mubr.bf16.mxu0 0
    %1471 = vmatmul.mubr.bf16.gmra.mrb[0].mxu0 %v1389
    %v1472 = vpop.f32.mrb[0].mxu0
    %v1473 = vadd.f32 0.0, %v1472
    %v1474 = vpop.f32.mrb[0].mxu0
    %v1475 = vadd.f32 0.0, %v1474
    %v1476 = vpop.f32.mrb[0].mxu0
    %v1477 = vpop.f32.mrb[0].mxu0
    %1478 = vdwg.mxu0
    %v1479 = vadd.f32 %v1393, %v1432
    %v1480 = vadd.f32 %v1394, %v1434
    %v1481 = vadd.f32 %v1395, %v1473
    %v1482 = vadd.f32 %v1396, %v1475
    %v1483 = vxor.u32 %v1479, 2147483648
    %v1484 = vmul.f32 %v1483, 1.442695
    %v1485 = vpow.pop %v1484
    %v1486 = vadd.f32 %v1485, 1.0
    %v1487 = vrcp.pop %v1486
    %v1488 = vmul.f32 1.0, %v1487
    %v1489 = vxor.u32 %v1480, 2147483648
    %v1490 = vmul.f32 %v1489, 1.442695
    %v1491 = vpow.pop %v1490
    %v1492 = vadd.f32 %v1491, 1.0
    %v1493 = vrcp.pop %v1492
    %v1494 = vmul.f32 1.0, %v1493
    %v1495 = vtanh.pop %v1481
    %v1496 = vxor.u32 %v1482, 2147483648
    %v1497 = vmul.f32 %v1496, 1.442695
    %v1498 = vpow.pop %v1497
    %v1499 = vadd.f32 %v1498, 1.0
    %v1500 = vrcp.pop %v1499
    %v1501 = vmul.f32 1.0, %v1500
    %v1502 = vmul.f32 %v1494, %v1386
    %v1503 = vmul.f32 %v1488, %v1495
    %v1504 = vadd.f32 %v1502, %v1503
    %v1505 = vtanh.pop %v1504
    %v1506 = vmul.f32 %v1501, %v1505
    %v1507 = vpack.c.bf16 %v1506, %v1506
    %s1508 = scalar_lea.vmem [#allocation2], 24
    %1509 = vst [vmem:[%s1508] sm:$0xf] %v1507
    %s1510 = scalar_lea.vmem [#allocation3], 224
    %v1511 = vld [vmem:[%s1510] sm:$0xff]
    %v1512 = vld [vmem:[%s1510 + $0x8] sm:$0xff]
    %v1513 = vld [vmem:[%s1510 + $0x10] sm:$0xff]
    %v1514 = vld [vmem:[%s1510 + $0x18] sm:$0xff]
    %1515 = vmatprep.subr.bf16.mxu0 %v627
    %1516 = vmatpush1.bf16.msra.mxu0 %v626
    %1517 = vmatprep.subr.bf16.mxu0 %v631
    %1518 = vmatpush1.bf16.msra.mxu0 %v630
    %1519 = vmatprep.subr.bf16.mxu0 %v635
    %1520 = vmatpush1.bf16.msra.mxu0 %v634
    %1521 = vmatprep.subr.bf16.mxu0 %v639
    %1522 = vmatpush1.bf16.msra.mxu0 %v638
    %1523 = vmatprep.subr.bf16.mxu0 %v643
    %1524 = vmatpush1.bf16.msra.mxu0 %v642
    %1525 = vmatprep.subr.bf16.mxu0 %v647
    %1526 = vmatpush1.bf16.msra.mxu0 %v646
    %1527 = vmatprep.subr.bf16.mxu0 %v651
    %1528 = vmatpush1.bf16.msra.mxu0 %v650
    %1529 = vmatprep.subr.bf16.mxu0 %v655
    %1530 = vmatpush1.bf16.msra.mxu0 %v654
    %1531 = vmatprep.subr.bf16.mxu0 0
    %1532 = vmatpush1.bf16.msra.mxu0 0
    %1533 = vmatprep.subr.bf16.mxu0 0
    %1534 = vmatpush1.bf16.msra.mxu0 0
    %1535 = vmatprep.subr.bf16.mxu0 0
    %1536 = vmatpush1.bf16.msra.mxu0 0
    %1537 = vmatprep.subr.bf16.mxu0 0
    %1538 = vmatpush1.bf16.msra.mxu0 0
    %1539 = vmatprep.subr.bf16.mxu0 0
    %1540 = vmatpush1.bf16.msra.mxu0 0
    %1541 = vmatprep.subr.bf16.mxu0 0
    %1542 = vmatpush1.bf16.msra.mxu0 0
    %1543 = vmatprep.subr.bf16.mxu0 0
    %1544 = vmatpush1.bf16.msra.mxu0 0
    %1545 = vmatprep.subr.bf16.mxu0 0
    %1546 = vmatpush1.bf16.msra.mxu0 0
    %1547 = vmatprep.mubr.bf16.mxu0 0
    %1548 = vmatmul.mubr.bf16.gmra.mrb[0].mxu0 %v1507
    %v1549 = vpop.f32.mrb[0].mxu0
    %v1550 = vadd.f32 0.0, %v1549
    %v1551 = vpop.f32.mrb[0].mxu0
    %v1552 = vadd.f32 0.0, %v1551
    %v1553 = vpop.f32.mrb[0].mxu0
    %v1554 = vpop.f32.mrb[0].mxu0
    %1555 = vdwg.mxu0
    %1556 = vmatprep.subr.bf16.mxu0 %v629
    %1557 = vmatpush1.bf16.msra.mxu0 %v628
    %1558 = vmatprep.subr.bf16.mxu0 %v633
    %1559 = vmatpush1.bf16.msra.mxu0 %v632
    %1560 = vmatprep.subr.bf16.mxu0 %v637
    %1561 = vmatpush1.bf16.msra.mxu0 %v636
    %1562 = vmatprep.subr.bf16.mxu0 %v641
    %1563 = vmatpush1.bf16.msra.mxu0 %v640
    %1564 = vmatprep.subr.bf16.mxu0 %v645
    %1565 = vmatpush1.bf16.msra.mxu0 %v644
    %1566 = vmatprep.subr.bf16.mxu0 %v649
    %1567 = vmatpush1.bf16.msra.mxu0 %v648
    %1568 = vmatprep.subr.bf16.mxu0 %v653
    %1569 = vmatpush1.bf16.msra.mxu0 %v652
    %1570 = vmatprep.subr.bf16.mxu0 %v657
    %1571 = vmatpush1.bf16.msra.mxu0 %v656
    %1572 = vmatprep.subr.bf16.mxu0 0
    %1573 = vmatpush1.bf16.msra.mxu0 0
    %1574 = vmatprep.subr.bf16.mxu0 0
    %1575 = vmatpush1.bf16.msra.mxu0 0
    %1576 = vmatprep.subr.bf16.mxu0 0
    %1577 = vmatpush1.bf16.msra.mxu0 0
    %1578 = vmatprep.subr.bf16.mxu0 0
    %1579 = vmatpush1.bf16.msra.mxu0 0
    %1580 = vmatprep.subr.bf16.mxu0 0
    %1581 = vmatpush1.bf16.msra.mxu0 0
    %1582 = vmatprep.subr.bf16.mxu0 0
    %1583 = vmatpush1.bf16.msra.mxu0 0
    %1584 = vmatprep.subr.bf16.mxu0 0
    %1585 = vmatpush1.bf16.msra.mxu0 0
    %1586 = vmatprep.subr.bf16.mxu0 0
    %1587 = vmatpush1.bf16.msra.mxu0 0
    %1588 = vmatprep.mubr.bf16.mxu0 0
    %1589 = vmatmul.mubr.bf16.gmra.mrb[0].mxu0 %v1507
    %v1590 = vpop.f32.mrb[0].mxu0
    %v1591 = vadd.f32 0.0, %v1590
    %v1592 = vpop.f32.mrb[0].mxu0
    %v1593 = vadd.f32 0.0, %v1592
    %v1594 = vpop.f32.mrb[0].mxu0
    %v1595 = vpop.f32.mrb[0].mxu0
    %1596 = vdwg.mxu0
    %v1597 = vadd.f32 %v1511, %v1550
    %v1598 = vadd.f32 %v1512, %v1552
    %v1599 = vadd.f32 %v1513, %v1591
    %v1600 = vadd.f32 %v1514, %v1593
    %v1601 = vxor.u32 %v1597, 2147483648
    %v1602 = vmul.f32 %v1601, 1.442695
    %v1603 = vpow.pop %v1602
    %v1604 = vadd.f32 %v1603, 1.0
    %v1605 = vrcp.pop %v1604
    %v1606 = vmul.f32 1.0, %v1605
    %v1607 = vxor.u32 %v1598, 2147483648
    %v1608 = vmul.f32 %v1607, 1.442695
    %v1609 = vpow.pop %v1608
    %v1610 = vadd.f32 %v1609, 1.0
    %v1611 = vrcp.pop %v1610
    %v1612 = vmul.f32 1.0, %v1611
    %v1613 = vtanh.pop %v1599
    %v1614 = vxor.u32 %v1600, 2147483648
    %v1615 = vmul.f32 %v1614, 1.442695
    %v1616 = vpow.pop %v1615
    %v1617 = vadd.f32 %v1616, 1.0
    %v1618 = vrcp.pop %v1617
    %v1619 = vmul.f32 1.0, %v1618
    %v1620 = vmul.f32 %v1612, %v1504
    %v1621 = vmul.f32 %v1606, %v1613
    %v1622 = vadd.f32 %v1620, %v1621
    %v1623 = vtanh.pop %v1622
    %v1624 = vmul.f32 %v1619, %v1623
    %v1625 = vpack.c.bf16 %v1624, %v1624
    %s1626 = scalar_lea.vmem [#allocation2], 28
    %1627 = vst [vmem:[%s1626] sm:$0xf] %v1625
    %1628 = vst [vmem:[%s7] sm:$0xff] %v1624
    %1629 = vst [vmem:[%s8] sm:$0xff] %v1622
    %s1630 = scalar_lea.vmem [#allocation6], 256
    %v1631 = vld [vmem:[%s1630] sm:$0xff]
    %v1632 = vld [vmem:[%s1630 + $0x8] sm:$0xff]
    %v1633 = vld [vmem:[%s1630 + $0x10] sm:$0xff]
    %v1634 = vld [vmem:[%s1630 + $0x18] sm:$0xff]
    %v1635 = vld [vmem:[%s1630 + $0x20] sm:$0xff]
    %v1636 = vld [vmem:[%s1630 + $0x28] sm:$0xff]
    %v1637 = vld [vmem:[%s1630 + $0x30] sm:$0xff]
    %v1638 = vld [vmem:[%s1630 + $0x38] sm:$0xff]
    %v1639 = vld [vmem:[%s1630 + $0x40] sm:$0xff]
    %v1640 = vld [vmem:[%s1630 + $0x48] sm:$0xff]
    %v1641 = vld [vmem:[%s1630 + $0x50] sm:$0xff]
    %v1642 = vld [vmem:[%s1630 + $0x58] sm:$0xff]
    %v1643 = vld [vmem:[%s1630 + $0x60] sm:$0xff]
    %v1644 = vld [vmem:[%s1630 + $0x68] sm:$0xff]
    %v1645 = vld [vmem:[%s1630 + $0x70] sm:$0xff]
    %v1646 = vld [vmem:[%s1630 + $0x78] sm:$0xff]
    %v1647 = vld [vmem:[%s1630 + $0x80] sm:$0xff]
    %v1648 = vld [vmem:[%s1630 + $0x88] sm:$0xff]
    %v1649 = vld [vmem:[%s1630 + $0x90] sm:$0xff]
    %v1650 = vld [vmem:[%s1630 + $0x98] sm:$0xff]
    %v1651 = vld [vmem:[%s1630 + $0xa0] sm:$0xff]
    %v1652 = vld [vmem:[%s1630 + $0xa8] sm:$0xff]
    %v1653 = vld [vmem:[%s1630 + $0xb0] sm:$0xff]
    %v1654 = vld [vmem:[%s1630 + $0xb8] sm:$0xff]
    %v1655 = vld [vmem:[%s1630 + $0xc0] sm:$0xff]
    %v1656 = vld [vmem:[%s1630 + $0xc8] sm:$0xff]
    %v1657 = vld [vmem:[%s1630 + $0xd0] sm:$0xff]
    %v1658 = vld [vmem:[%s1630 + $0xd8] sm:$0xff]
    %v1659 = vld [vmem:[%s1630 + $0xe0] sm:$0xff]
    %v1660 = vld [vmem:[%s1630 + $0xe8] sm:$0xff]
    %v1661 = vld [vmem:[%s1630 + $0xf0] sm:$0xff]
    %v1662 = vld [vmem:[%s1630 + $0xf8] sm:$0xff]
    %s1663 = scalar_lea.vmem %s5, 4
    %v1664 = vld [vmem:[%s1663] sm:$0xf]
    %v1665 = vld [vmem:[#allocation2] sm:$0xf]
    %v1666 = vld [vmem:[#allocation2 + $0x4] sm:$0xf]
    %v1667 = vld [vmem:[#allocation2 + $0x8] sm:$0xf]
    %v1668 = vld [vmem:[#allocation2 + $0xc] sm:$0xf]
    %v1669 = vld [vmem:[#allocation2 + $0x10] sm:$0xf]
    %v1670 = vld [vmem:[#allocation2 + $0x14] sm:$0xf]
    %v1671 = vld [vmem:[#allocation2 + $0x18] sm:$0xf]
    %v1672 = vld [vmem:[#allocation2 + $0x1c] sm:$0xf]
    %s1673 = scalar_lea.vmem [#allocation4], 256
    %v1674 = vld [vmem:[%s1673] sm:$0xff]
    %v1675 = vld [vmem:[%s1673 + $0x8] sm:$0xff]
    %v1676 = vld [vmem:[%s1673 + $0x10] sm:$0xff]
    %v1677 = vld [vmem:[%s1673 + $0x18] sm:$0xff]
    %v1678 = vld [vmem:[%s1673 + $0x20] sm:$0xff]
    %v1679 = vld [vmem:[%s1673 + $0x28] sm:$0xff]
    %v1680 = vld [vmem:[%s1673 + $0x30] sm:$0xff]
    %v1681 = vld [vmem:[%s1673 + $0x38] sm:$0xff]
    %v1682 = vld [vmem:[%s1673 + $0x40] sm:$0xff]
    %v1683 = vld [vmem:[%s1673 + $0x48] sm:$0xff]
    %v1684 = vld [vmem:[%s1673 + $0x50] sm:$0xff]
    %v1685 = vld [vmem:[%s1673 + $0x58] sm:$0xff]
    %v1686 = vld [vmem:[%s1673 + $0x60] sm:$0xff]
    %v1687 = vld [vmem:[%s1673 + $0x68] sm:$0xff]
    %v1688 = vld [vmem:[%s1673 + $0x70] sm:$0xff]
    %v1689 = vld [vmem:[%s1673 + $0x78] sm:$0xff]
    %v1690 = vld [vmem:[%s1673 + $0x80] sm:$0xff]
    %v1691 = vld [vmem:[%s1673 + $0x88] sm:$0xff]
    %v1692 = vld [vmem:[%s1673 + $0x90] sm:$0xff]
    %v1693 = vld [vmem:[%s1673 + $0x98] sm:$0xff]
    %v1694 = vld [vmem:[%s1673 + $0xa0] sm:$0xff]
    %v1695 = vld [vmem:[%s1673 + $0xa8] sm:$0xff]
    %v1696 = vld [vmem:[%s1673 + $0xb0] sm:$0xff]
    %v1697 = vld [vmem:[%s1673 + $0xb8] sm:$0xff]
    %v1698 = vld [vmem:[%s1673 + $0xc0] sm:$0xff]
    %v1699 = vld [vmem:[%s1673 + $0xc8] sm:$0xff]
    %v1700 = vld [vmem:[%s1673 + $0xd0] sm:$0xff]
    %v1701 = vld [vmem:[%s1673 + $0xd8] sm:$0xff]
    %v1702 = vld [vmem:[%s1673 + $0xe0] sm:$0xff]
    %v1703 = vld [vmem:[%s1673 + $0xe8] sm:$0xff]
    %v1704 = vld [vmem:[%s1673 + $0xf0] sm:$0xff]
    %v1705 = vld [vmem:[%s1673 + $0xf8] sm:$0xff]
    %v1707 = vlaneseq
    %v1708 = vshrl.u32 %v1707, 7
    %v1709 = vsub.s32 0, %v1708
    %v1710 = vrot.slane %v1664, %v1709
    %v1711 = vlaneseq
    %v1712 = vshrl.u32 %v1711, 7
    %v1713 = vsub.s32 1, %v1712
    %v1714 = vrot.slane %v1664, %v1713
    %v1715 = vlaneseq
    %v1716 = vshrl.u32 %v1715, 7
    %v1717 = vsub.s32 2, %v1716
    %v1718 = vrot.slane %v1664, %v1717
    %v1719 = vlaneseq
    %v1720 = vshrl.u32 %v1719, 7
    %v1721 = vsub.s32 3, %v1720
    %v1722 = vrot.slane %v1664, %v1721
    %v1735 = vunpack.c.l.b16 %v1665
    %v1736 = vunpack.c.l.b16 %v1666
    %v1737 = vunpack.c.l.b16 %v1667
    %v1738 = vunpack.c.l.b16 %v1668
    %v1739 = vunpack.c.l.b16 %v1669
    %v1740 = vunpack.c.l.b16 %v1670
    %v1741 = vunpack.c.l.b16 %v1671
    %v1742 = vunpack.c.l.b16 %v1672
    %v1743 = vpack.c.b16 %v1736, %v1735
    %v1744 = vpack.c.b16 %v1738, %v1737
    %v1745 = vpack.c.b16 %v1740, %v1739
    %v1746 = vpack.c.b16 %v1742, %v1741
    %v1783 = vunpack.c.l.b16 %v1674
    %v1784 = vunpack.c.h.b16 %v1674
    %v1785 = vunpack.c.l.b16 %v1675
    %v1786 = vunpack.c.h.b16 %v1675
    %v1787 = vunpack.c.l.b16 %v1676
    %v1788 = vunpack.c.h.b16 %v1676
    %v1789 = vunpack.c.l.b16 %v1677
    %v1790 = vunpack.c.h.b16 %v1677
    %v1791 = vunpack.c.l.b16 %v1678
    %v1792 = vunpack.c.h.b16 %v1678
    %v1793 = vunpack.c.l.b16 %v1679
    %v1794 = vunpack.c.h.b16 %v1679
    %v1795 = vunpack.c.l.b16 %v1680
    %v1796 = vunpack.c.h.b16 %v1680
    %v1797 = vunpack.c.l.b16 %v1681
    %v1798 = vunpack.c.h.b16 %v1681
    %v1799 = vunpack.c.l.b16 %v1682
    %v1800 = vunpack.c.h.b16 %v1682
    %v1801 = vunpack.c.l.b16 %v1683
    %v1802 = vunpack.c.h.b16 %v1683
    %v1803 = vunpack.c.l.b16 %v1684
    %v1804 = vunpack.c.h.b16 %v1684
    %v1805 = vunpack.c.l.b16 %v1685
    %v1806 = vunpack.c.h.b16 %v1685
    %v1807 = vunpack.c.l.b16 %v1686
    %v1808 = vunpack.c.h.b16 %v1686
    %v1809 = vunpack.c.l.b16 %v1687
    %v1810 = vunpack.c.h.b16 %v1687
    %v1811 = vunpack.c.l.b16 %v1688
    %v1812 = vunpack.c.h.b16 %v1688
    %v1813 = vunpack.c.l.b16 %v1689
    %v1814 = vunpack.c.h.b16 %v1689
    %v1815 = vunpack.c.l.b16 %v1690
    %v1816 = vunpack.c.h.b16 %v1690
    %v1817 = vunpack.c.l.b16 %v1691
    %v1818 = vunpack.c.h.b16 %v1691
    %v1819 = vunpack.c.l.b16 %v1692
    %v1820 = vunpack.c.h.b16 %v1692
    %v1821 = vunpack.c.l.b16 %v1693
    %v1822 = vunpack.c.h.b16 %v1693
    %v1823 = vunpack.c.l.b16 %v1694
    %v1824 = vunpack.c.h.b16 %v1694
    %v1825 = vunpack.c.l.b16 %v1695
    %v1826 = vunpack.c.h.b16 %v1695
    %v1827 = vunpack.c.l.b16 %v1696
    %v1828 = vunpack.c.h.b16 %v1696
    %v1829 = vunpack.c.l.b16 %v1697
    %v1830 = vunpack.c.h.b16 %v1697
    %v1831 = vunpack.c.l.b16 %v1698
    %v1832 = vunpack.c.h.b16 %v1698
    %v1833 = vunpack.c.l.b16 %v1699
    %v1834 = vunpack.c.h.b16 %v1699
    %v1835 = vunpack.c.l.b16 %v1700
    %v1836 = vunpack.c.h.b16 %v1700
    %v1837 = vunpack.c.l.b16 %v1701
    %v1838 = vunpack.c.h.b16 %v1701
    %v1839 = vunpack.c.l.b16 %v1702
    %v1840 = vunpack.c.h.b16 %v1702
    %v1841 = vunpack.c.l.b16 %v1703
    %v1842 = vunpack.c.h.b16 %v1703
    %v1843 = vunpack.c.l.b16 %v1704
    %v1844 = vunpack.c.h.b16 %v1704
    %v1845 = vunpack.c.l.b16 %v1705
    %v1846 = vunpack.c.h.b16 %v1705
    %v1847 = vpack.c.b16 %v1787, %v1783
    %v1848 = vpack.c.b16 %v1788, %v1784
    %v1849 = vpack.c.b16 %v1789, %v1785
    %v1850 = vpack.c.b16 %v1790, %v1786
    %v1851 = vpack.c.b16 %v1795, %v1791
    %v1852 = vpack.c.b16 %v1796, %v1792
    %v1853 = vpack.c.b16 %v1797, %v1793
    %v1854 = vpack.c.b16 %v1798, %v1794
    %v1855 = vpack.c.b16 %v1803, %v1799
    %v1856 = vpack.c.b16 %v1804, %v1800
    %v1857 = vpack.c.b16 %v1805, %v1801
    %v1858 = vpack.c.b16 %v1806, %v1802
    %v1859 = vpack.c.b16 %v1811, %v1807
    %v1860 = vpack.c.b16 %v1812, %v1808
    %v1861 = vpack.c.b16 %v1813, %v1809
    %v1862 = vpack.c.b16 %v1814, %v1810
    %v1863 = vpack.c.b16 %v1819, %v1815
    %v1864 = vpack.c.b16 %v1820, %v1816
    %v1865 = vpack.c.b16 %v1821, %v1817
    %v1866 = vpack.c.b16 %v1822, %v1818
    %v1867 = vpack.c.b16 %v1827, %v1823
    %v1868 = vpack.c.b16 %v1828, %v1824
    %v1869 = vpack.c.b16 %v1829, %v1825
    %v1870 = vpack.c.b16 %v1830, %v1826
    %v1871 = vpack.c.b16 %v1835, %v1831
    %v1872 = vpack.c.b16 %v1836, %v1832
    %v1873 = vpack.c.b16 %v1837, %v1833
    %v1874 = vpack.c.b16 %v1838, %v1834
    %v1875 = vpack.c.b16 %v1843, %v1839
    %v1876 = vpack.c.b16 %v1844, %v1840
    %v1877 = vpack.c.b16 %v1845, %v1841
    %v1878 = vpack.c.b16 %v1846, %v1842
    %1911 = vmatprep.subr.bf16.mxu0 %v1848
    %1912 = vmatpush1.bf16.msra.mxu0 %v1847
    %1913 = vmatprep.subr.bf16.mxu0 %v1852
    %1914 = vmatpush1.bf16.msra.mxu0 %v1851
    %1915 = vmatprep.subr.bf16.mxu0 %v1856
    %1916 = vmatpush1.bf16.msra.mxu0 %v1855
    %1917 = vmatprep.subr.bf16.mxu0 %v1860
    %1918 = vmatpush1.bf16.msra.mxu0 %v1859
    %1919 = vmatprep.subr.bf16.mxu0 %v1864
    %1920 = vmatpush1.bf16.msra.mxu0 %v1863
    %1921 = vmatprep.subr.bf16.mxu0 %v1868
    %1922 = vmatpush1.bf16.msra.mxu0 %v1867
    %1923 = vmatprep.subr.bf16.mxu0 %v1872
    %1924 = vmatpush1.bf16.msra.mxu0 %v1871
    %1925 = vmatprep.subr.bf16.mxu0 %v1876
    %1926 = vmatpush1.bf16.msra.mxu0 %v1875
    %1927 = vmatprep.subr.bf16.mxu0 0
    %1928 = vmatpush1.bf16.msra.mxu0 0
    %1929 = vmatprep.subr.bf16.mxu0 0
    %1930 = vmatpush1.bf16.msra.mxu0 0
    %1931 = vmatprep.subr.bf16.mxu0 0
    %1932 = vmatpush1.bf16.msra.mxu0 0
    %1933 = vmatprep.subr.bf16.mxu0 0
    %1934 = vmatpush1.bf16.msra.mxu0 0
    %1935 = vmatprep.subr.bf16.mxu0 0
    %1936 = vmatpush1.bf16.msra.mxu0 0
    %1937 = vmatprep.subr.bf16.mxu0 0
    %1938 = vmatpush1.bf16.msra.mxu0 0
    %1939 = vmatprep.subr.bf16.mxu0 0
    %1940 = vmatpush1.bf16.msra.mxu0 0
    %1941 = vmatprep.subr.bf16.mxu0 0
    %1942 = vmatpush1.bf16.msra.mxu0 0
    %1943 = vmatprep.mubr.bf16.mxu0 0
    %1944 = vmatmul.mubr.bf16.gmra.mrb[0].mxu0 %v1743
    %v1945 = vpop.f32.mrb[0].mxu0
    %v1946 = vadd.f32 %v1710, %v1945
    %v1947 = vpop.f32.mrb[0].mxu0
    %v1948 = vadd.f32 %v1714, %v1947
    %v1949 = vpop.f32.mrb[0].mxu0
    %v1950 = vadd.f32 %v1710, %v1949
    %v1951 = vpop.f32.mrb[0].mxu0
    %v1952 = vadd.f32 %v1714, %v1951
    %1953 = vmatprep.mubr.bf16.mxu0 0
    %1954 = vmatmul.mubr.bf16.gmra.mrb[0].mxu0 %v1744
    %v1955 = vpop.f32.mrb[0].mxu0
    %v1956 = vadd.f32 %v1710, %v1955
    %v1957 = vpop.f32.mrb[0].mxu0
    %v1958 = vadd.f32 %v1714, %v1957
    %v1959 = vpop.f32.mrb[0].mxu0
    %v1960 = vadd.f32 %v1710, %v1959
    %v1961 = vpop.f32.mrb[0].mxu0
    %v1962 = vadd.f32 %v1714, %v1961
    %1963 = vmatprep.mubr.bf16.mxu0 0
    %1964 = vmatmul.mubr.bf16.gmra.mrb[0].mxu0 %v1745
    %v1965 = vpop.f32.mrb[0].mxu0
    %v1966 = vadd.f32 %v1710, %v1965
    %v1967 = vpop.f32.mrb[0].mxu0
    %v1968 = vadd.f32 %v1714, %v1967
    %v1969 = vpop.f32.mrb[0].mxu0
    %v1970 = vadd.f32 %v1710, %v1969
    %v1971 = vpop.f32.mrb[0].mxu0
    %v1972 = vadd.f32 %v1714, %v1971
    %1973 = vmatprep.mubr.bf16.mxu0 0
    %1974 = vmatmul.mubr.bf16.gmra.mrb[0].mxu0 %v1746
    %v1975 = vpop.f32.mrb[0].mxu0
    %v1976 = vadd.f32 %v1710, %v1975
    %v1977 = vpop.f32.mrb[0].mxu0
    %v1978 = vadd.f32 %v1714, %v1977
    %v1979 = vpop.f32.mrb[0].mxu0
    %v1980 = vadd.f32 %v1710, %v1979
    %v1981 = vpop.f32.mrb[0].mxu0
    %v1982 = vadd.f32 %v1714, %v1981
    %1983 = vdwg.mxu0
    %1984 = vmatprep.subr.bf16.mxu0 %v1850
    %1985 = vmatpush1.bf16.msra.mxu0 %v1849
    %1986 = vmatprep.subr.bf16.mxu0 %v1854
    %1987 = vmatpush1.bf16.msra.mxu0 %v1853
    %1988 = vmatprep.subr.bf16.mxu0 %v1858
    %1989 = vmatpush1.bf16.msra.mxu0 %v1857
    %1990 = vmatprep.subr.bf16.mxu0 %v1862
    %1991 = vmatpush1.bf16.msra.mxu0 %v1861
    %1992 = vmatprep.subr.bf16.mxu0 %v1866
    %1993 = vmatpush1.bf16.msra.mxu0 %v1865
    %1994 = vmatprep.subr.bf16.mxu0 %v1870
    %1995 = vmatpush1.bf16.msra.mxu0 %v1869
    %1996 = vmatprep.subr.bf16.mxu0 %v1874
    %1997 = vmatpush1.bf16.msra.mxu0 %v1873
    %1998 = vmatprep.subr.bf16.mxu0 %v1878
    %1999 = vmatpush1.bf16.msra.mxu0 %v1877
    %2000 = vmatprep.subr.bf16.mxu0 0
    %2001 = vmatpush1.bf16.msra.mxu0 0
    %2002 = vmatprep.subr.bf16.mxu0 0
    %2003 = vmatpush1.bf16.msra.mxu0 0
    %2004 = vmatprep.subr.bf16.mxu0 0
    %2005 = vmatpush1.bf16.msra.mxu0 0
    %2006 = vmatprep.subr.bf16.mxu0 0
    %2007 = vmatpush1.bf16.msra.mxu0 0
    %2008 = vmatprep.subr.bf16.mxu0 0
    %2009 = vmatpush1.bf16.msra.mxu0 0
    %2010 = vmatprep.subr.bf16.mxu0 0
    %2011 = vmatpush1.bf16.msra.mxu0 0
    %2012 = vmatprep.subr.bf16.mxu0 0
    %2013 = vmatpush1.bf16.msra.mxu0 0
    %2014 = vmatprep.subr.bf16.mxu0 0
    %2015 = vmatpush1.bf16.msra.mxu0 0
    %2016 = vmatprep.mubr.bf16.mxu0 0
    %2017 = vmatmul.mubr.bf16.gmra.mrb[0].mxu0 %v1743
    %v2018 = vpop.f32.mrb[0].mxu0
    %v2019 = vadd.f32 %v1718, %v2018
    %v2020 = vpop.f32.mrb[0].mxu0
    %v2021 = vadd.f32 %v1722, %v2020
    %v2022 = vpop.f32.mrb[0].mxu0
    %v2023 = vadd.f32 %v1718, %v2022
    %v2024 = vpop.f32.mrb[0].mxu0
    %v2025 = vadd.f32 %v1722, %v2024
    %2026 = vmatprep.mubr.bf16.mxu0 0
    %2027 = vmatmul.mubr.bf16.gmra.mrb[0].mxu0 %v1744
    %v2028 = vpop.f32.mrb[0].mxu0
    %v2029 = vadd.f32 %v1718, %v2028
    %v2030 = vpop.f32.mrb[0].mxu0
    %v2031 = vadd.f32 %v1722, %v2030
    %v2032 = vpop.f32.mrb[0].mxu0
    %v2033 = vadd.f32 %v1718, %v2032
    %v2034 = vpop.f32.mrb[0].mxu0
    %v2035 = vadd.f32 %v1722, %v2034
    %2036 = vmatprep.mubr.bf16.mxu0 0
    %2037 = vmatmul.mubr.bf16.gmra.mrb[0].mxu0 %v1745
    %v2038 = vpop.f32.mrb[0].mxu0
    %v2039 = vadd.f32 %v1718, %v2038
    %v2040 = vpop.f32.mrb[0].mxu0
    %v2041 = vadd.f32 %v1722, %v2040
    %v2042 = vpop.f32.mrb[0].mxu0
    %v2043 = vadd.f32 %v1718, %v2042
    %v2044 = vpop.f32.mrb[0].mxu0
    %v2045 = vadd.f32 %v1722, %v2044
    %2046 = vmatprep.mubr.bf16.mxu0 0
    %2047 = vmatmul.mubr.bf16.gmra.mrb[0].mxu0 %v1746
    %v2048 = vpop.f32.mrb[0].mxu0
    %v2049 = vadd.f32 %v1718, %v2048
    %v2050 = vpop.f32.mrb[0].mxu0
    %v2051 = vadd.f32 %v1722, %v2050
    %v2052 = vpop.f32.mrb[0].mxu0
    %v2053 = vadd.f32 %v1718, %v2052
    %v2054 = vpop.f32.mrb[0].mxu0
    %v2055 = vadd.f32 %v1722, %v2054
    %2056 = vdwg.mxu0
    %2057 = vst [vmem:[#allocation3] sm:$0xff] %v1946
    %2058 = vst [vmem:[#allocation3 + $0x8] sm:$0xff] %v1948
    %2059 = vst [vmem:[#allocation3 + $0x10] sm:$0xff] %v2019
    %2060 = vst [vmem:[#allocation3 + $0x18] sm:$0xff] %v2021
    %2061 = vst [vmem:[#allocation3 + $0x20] sm:$0xff] %v1950
    %2062 = vst [vmem:[#allocation3 + $0x28] sm:$0xff] %v1952
    %2063 = vst [vmem:[#allocation3 + $0x30] sm:$0xff] %v2023
    %2064 = vst [vmem:[#allocation3 + $0x38] sm:$0xff] %v2025
    %2065 = vst [vmem:[#allocation3 + $0x40] sm:$0xff] %v1956
    %2066 = vst [vmem:[#allocation3 + $0x48] sm:$0xff] %v1958
    %2067 = vst [vmem:[#allocation3 + $0x50] sm:$0xff] %v2029
    %2068 = vst [vmem:[#allocation3 + $0x58] sm:$0xff] %v2031
    %2069 = vst [vmem:[#allocation3 + $0x60] sm:$0xff] %v1960
    %2070 = vst [vmem:[#allocation3 + $0x68] sm:$0xff] %v1962
    %2071 = vst [vmem:[#allocation3 + $0x70] sm:$0xff] %v2033
    %2072 = vst [vmem:[#allocation3 + $0x78] sm:$0xff] %v2035
    %2073 = vst [vmem:[#allocation3 + $0x80] sm:$0xff] %v1966
    %2074 = vst [vmem:[#allocation3 + $0x88] sm:$0xff] %v1968
    %2075 = vst [vmem:[#allocation3 + $0x90] sm:$0xff] %v2039
    %2076 = vst [vmem:[#allocation3 + $0x98] sm:$0xff] %v2041
    %2077 = vst [vmem:[#allocation3 + $0xa0] sm:$0xff] %v1970
    %2078 = vst [vmem:[#allocation3 + $0xa8] sm:$0xff] %v1972
    %2079 = vst [vmem:[#allocation3 + $0xb0] sm:$0xff] %v2043
    %2080 = vst [vmem:[#allocation3 + $0xb8] sm:$0xff] %v2045
    %2081 = vst [vmem:[#allocation3 + $0xc0] sm:$0xff] %v1976
    %2082 = vst [vmem:[#allocation3 + $0xc8] sm:$0xff] %v1978
    %2083 = vst [vmem:[#allocation3 + $0xd0] sm:$0xff] %v2049
    %2084 = vst [vmem:[#allocation3 + $0xd8] sm:$0xff] %v2051
    %2085 = vst [vmem:[#allocation3 + $0xe0] sm:$0xff] %v1980
    %2086 = vst [vmem:[#allocation3 + $0xe8] sm:$0xff] %v1982
    %2087 = vst [vmem:[#allocation3 + $0xf0] sm:$0xff] %v2053
    %2088 = vst [vmem:[#allocation3 + $0xf8] sm:$0xff] %v2055
    %s2089 = scalar_lea.vmem %s7, 8
    %v2090 = vld [vmem:[%s2089] sm:$0xff]
    %s2091 = scalar_lea.vmem %s8, 8
    %v2092 = vld [vmem:[%s2091] sm:$0xff]
    %v2093 = vld [vmem:[#allocation3] sm:$0xff]
    %v2094 = vld [vmem:[#allocation3 + $0x8] sm:$0xff]
    %v2095 = vld [vmem:[#allocation3 + $0x10] sm:$0xff]
    %v2096 = vld [vmem:[#allocation3 + $0x18] sm:$0xff]
    %v2097 = vpack.c.bf16 %v2090, %v2090
    %v2130 = vunpack.c.l.b16 %v1631
    %v2131 = vunpack.c.h.b16 %v1631
    %v2132 = vunpack.c.l.b16 %v1632
    %v2133 = vunpack.c.h.b16 %v1632
    %v2134 = vunpack.c.l.b16 %v1633
    %v2135 = vunpack.c.h.b16 %v1633
    %v2136 = vunpack.c.l.b16 %v1634
    %v2137 = vunpack.c.h.b16 %v1634
    %v2138 = vunpack.c.l.b16 %v1635
    %v2139 = vunpack.c.h.b16 %v1635
    %v2140 = vunpack.c.l.b16 %v1636
    %v2141 = vunpack.c.h.b16 %v1636
    %v2142 = vunpack.c.l.b16 %v1637
    %v2143 = vunpack.c.h.b16 %v1637
    %v2144 = vunpack.c.l.b16 %v1638
    %v2145 = vunpack.c.h.b16 %v1638
    %v2146 = vunpack.c.l.b16 %v1639
    %v2147 = vunpack.c.h.b16 %v1639
    %v2148 = vunpack.c.l.b16 %v1640
    %v2149 = vunpack.c.h.b16 %v1640
    %v2150 = vunpack.c.l.b16 %v1641
    %v2151 = vunpack.c.h.b16 %v1641
    %v2152 = vunpack.c.l.b16 %v1642
    %v2153 = vunpack.c.h.b16 %v1642
    %v2154 = vunpack.c.l.b16 %v1643
    %v2155 = vunpack.c.h.b16 %v1643
    %v2156 = vunpack.c.l.b16 %v1644
    %v2157 = vunpack.c.h.b16 %v1644
    %v2158 = vunpack.c.l.b16 %v1645
    %v2159 = vunpack.c.h.b16 %v1645
    %v2160 = vunpack.c.l.b16 %v1646
    %v2161 = vunpack.c.h.b16 %v1646
    %v2162 = vunpack.c.l.b16 %v1647
    %v2163 = vunpack.c.h.b16 %v1647
    %v2164 = vunpack.c.l.b16 %v1648
    %v2165 = vunpack.c.h.b16 %v1648
    %v2166 = vunpack.c.l.b16 %v1649
    %v2167 = vunpack.c.h.b16 %v1649
    %v2168 = vunpack.c.l.b16 %v1650
    %v2169 = vunpack.c.h.b16 %v1650
    %v2170 = vunpack.c.l.b16 %v1651
    %v2171 = vunpack.c.h.b16 %v1651
    %v2172 = vunpack.c.l.b16 %v1652
    %v2173 = vunpack.c.h.b16 %v1652
    %v2174 = vunpack.c.l.b16 %v1653
    %v2175 = vunpack.c.h.b16 %v1653
    %v2176 = vunpack.c.l.b16 %v1654
    %v2177 = vunpack.c.h.b16 %v1654
    %v2178 = vunpack.c.l.b16 %v1655
    %v2179 = vunpack.c.h.b16 %v1655
    %v2180 = vunpack.c.l.b16 %v1656
    %v2181 = vunpack.c.h.b16 %v1656
    %v2182 = vunpack.c.l.b16 %v1657
    %v2183 = vunpack.c.h.b16 %v1657
    %v2184 = vunpack.c.l.b16 %v1658
    %v2185 = vunpack.c.h.b16 %v1658
    %v2186 = vunpack.c.l.b16 %v1659
    %v2187 = vunpack.c.h.b16 %v1659
    %v2188 = vunpack.c.l.b16 %v1660
    %v2189 = vunpack.c.h.b16 %v1660
    %v2190 = vunpack.c.l.b16 %v1661
    %v2191 = vunpack.c.h.b16 %v1661
    %v2192 = vunpack.c.l.b16 %v1662
    %v2193 = vunpack.c.h.b16 %v1662
    %v2194 = vpack.c.b16 %v2134, %v2130
    %v2195 = vpack.c.b16 %v2135, %v2131
    %v2196 = vpack.c.b16 %v2136, %v2132
    %v2197 = vpack.c.b16 %v2137, %v2133
    %v2198 = vpack.c.b16 %v2142, %v2138
    %v2199 = vpack.c.b16 %v2143, %v2139
    %v2200 = vpack.c.b16 %v2144, %v2140
    %v2201 = vpack.c.b16 %v2145, %v2141
    %v2202 = vpack.c.b16 %v2150, %v2146
    %v2203 = vpack.c.b16 %v2151, %v2147
    %v2204 = vpack.c.b16 %v2152, %v2148
    %v2205 = vpack.c.b16 %v2153, %v2149
    %v2206 = vpack.c.b16 %v2158, %v2154
    %v2207 = vpack.c.b16 %v2159, %v2155
    %v2208 = vpack.c.b16 %v2160, %v2156
    %v2209 = vpack.c.b16 %v2161, %v2157
    %v2210 = vpack.c.b16 %v2166, %v2162
    %v2211 = vpack.c.b16 %v2167, %v2163
    %v2212 = vpack.c.b16 %v2168, %v2164
    %v2213 = vpack.c.b16 %v2169, %v2165
    %v2214 = vpack.c.b16 %v2174, %v2170
    %v2215 = vpack.c.b16 %v2175, %v2171
    %v2216 = vpack.c.b16 %v2176, %v2172
    %v2217 = vpack.c.b16 %v2177, %v2173
    %v2218 = vpack.c.b16 %v2182, %v2178
    %v2219 = vpack.c.b16 %v2183, %v2179
    %v2220 = vpack.c.b16 %v2184, %v2180
    %v2221 = vpack.c.b16 %v2185, %v2181
    %v2222 = vpack.c.b16 %v2190, %v2186
    %v2223 = vpack.c.b16 %v2191, %v2187
    %v2224 = vpack.c.b16 %v2192, %v2188
    %v2225 = vpack.c.b16 %v2193, %v2189
    %2258 = vmatprep.subr.bf16.mxu0 %v2195
    %2259 = vmatpush1.bf16.msra.mxu0 %v2194
    %2260 = vmatprep.subr.bf16.mxu0 %v2199
    %2261 = vmatpush1.bf16.msra.mxu0 %v2198
    %2262 = vmatprep.subr.bf16.mxu0 %v2203
    %2263 = vmatpush1.bf16.msra.mxu0 %v2202
    %2264 = vmatprep.subr.bf16.mxu0 %v2207
    %2265 = vmatpush1.bf16.msra.mxu0 %v2206
    %2266 = vmatprep.subr.bf16.mxu0 %v2211
    %2267 = vmatpush1.bf16.msra.mxu0 %v2210
    %2268 = vmatprep.subr.bf16.mxu0 %v2215
    %2269 = vmatpush1.bf16.msra.mxu0 %v2214
    %2270 = vmatprep.subr.bf16.mxu0 %v2219
    %2271 = vmatpush1.bf16.msra.mxu0 %v2218
    %2272 = vmatprep.subr.bf16.mxu0 %v2223
    %2273 = vmatpush1.bf16.msra.mxu0 %v2222
    %2274 = vmatprep.subr.bf16.mxu0 0
    %2275 = vmatpush1.bf16.msra.mxu0 0
    %2276 = vmatprep.subr.bf16.mxu0 0
    %2277 = vmatpush1.bf16.msra.mxu0 0
    %2278 = vmatprep.subr.bf16.mxu0 0
    %2279 = vmatpush1.bf16.msra.mxu0 0
    %2280 = vmatprep.subr.bf16.mxu0 0
    %2281 = vmatpush1.bf16.msra.mxu0 0
    %2282 = vmatprep.subr.bf16.mxu0 0
    %2283 = vmatpush1.bf16.msra.mxu0 0
    %2284 = vmatprep.subr.bf16.mxu0 0
    %2285 = vmatpush1.bf16.msra.mxu0 0
    %2286 = vmatprep.subr.bf16.mxu0 0
    %2287 = vmatpush1.bf16.msra.mxu0 0
    %2288 = vmatprep.subr.bf16.mxu0 0
    %2289 = vmatpush1.bf16.msra.mxu0 0
    %2290 = vmatprep.mubr.bf16.mxu0 0
    %2291 = vmatmul.mubr.bf16.gmra.mrb[0].mxu0 %v2097
    %v2292 = vpop.f32.mrb[0].mxu0
    %v2293 = vadd.f32 0.0, %v2292
    %v2294 = vpop.f32.mrb[0].mxu0
    %v2295 = vadd.f32 0.0, %v2294
    %v2296 = vpop.f32.mrb[0].mxu0
    %v2297 = vpop.f32.mrb[0].mxu0
    %2298 = vdwg.mxu0
    %2299 = vmatprep.subr.bf16.mxu0 %v2197
    %2300 = vmatpush1.bf16.msra.mxu0 %v2196
    %2301 = vmatprep.subr.bf16.mxu0 %v2201
    %2302 = vmatpush1.bf16.msra.mxu0 %v2200
    %2303 = vmatprep.subr.bf16.mxu0 %v2205
    %2304 = vmatpush1.bf16.msra.mxu0 %v2204
    %2305 = vmatprep.subr.bf16.mxu0 %v2209
    %2306 = vmatpush1.bf16.msra.mxu0 %v2208
    %2307 = vmatprep.subr.bf16.mxu0 %v2213
    %2308 = vmatpush1.bf16.msra.mxu0 %v2212
    %2309 = vmatprep.subr.bf16.mxu0 %v2217
    %2310 = vmatpush1.bf16.msra.mxu0 %v2216
    %2311 = vmatprep.subr.bf16.mxu0 %v2221
    %2312 = vmatpush1.bf16.msra.mxu0 %v2220
    %2313 = vmatprep.subr.bf16.mxu0 %v2225
    %2314 = vmatpush1.bf16.msra.mxu0 %v2224
    %2315 = vmatprep.subr.bf16.mxu0 0
    %2316 = vmatpush1.bf16.msra.mxu0 0
    %2317 = vmatprep.subr.bf16.mxu0 0
    %2318 = vmatpush1.bf16.msra.mxu0 0
    %2319 = vmatprep.subr.bf16.mxu0 0
    %2320 = vmatpush1.bf16.msra.mxu0 0
    %2321 = vmatprep.subr.bf16.mxu0 0
    %2322 = vmatpush1.bf16.msra.mxu0 0
    %2323 = vmatprep.subr.bf16.mxu0 0
    %2324 = vmatpush1.bf16.msra.mxu0 0
    %2325 = vmatprep.subr.bf16.mxu0 0
    %2326 = vmatpush1.bf16.msra.mxu0 0
    %2327 = vmatprep.subr.bf16.mxu0 0
    %2328 = vmatpush1.bf16.msra.mxu0 0
    %2329 = vmatprep.subr.bf16.mxu0 0
    %2330 = vmatpush1.bf16.msra.mxu0 0
    %2331 = vmatprep.mubr.bf16.mxu0 0
    %2332 = vmatmul.mubr.bf16.gmra.mrb[0].mxu0 %v2097
    %v2333 = vpop.f32.mrb[0].mxu0
    %v2334 = vadd.f32 0.0, %v2333
    %v2335 = vpop.f32.mrb[0].mxu0
    %v2336 = vadd.f32 0.0, %v2335
    %v2337 = vpop.f32.mrb[0].mxu0
    %v2338 = vpop.f32.mrb[0].mxu0
    %2339 = vdwg.mxu0
    %v2340 = vadd.f32 %v2093, %v2293
    %v2341 = vadd.f32 %v2094, %v2295
    %v2342 = vadd.f32 %v2095, %v2334
    %v2343 = vadd.f32 %v2096, %v2336
    %v2344 = vxor.u32 %v2340, 2147483648
    %v2345 = vmul.f32 %v2344, 1.442695
    %v2346 = vpow.pop %v2345
    %v2347 = vadd.f32 %v2346, 1.0
    %v2348 = vrcp.pop %v2347
    %v2349 = vmul.f32 1.0, %v2348
    %v2350 = vxor.u32 %v2341, 2147483648
    %v2351 = vmul.f32 %v2350, 1.442695
    %v2352 = vpow.pop %v2351
    %v2353 = vadd.f32 %v2352, 1.0
    %v2354 = vrcp.pop %v2353
    %v2355 = vmul.f32 1.0, %v2354
    %v2356 = vtanh.pop %v2342
    %v2357 = vxor.u32 %v2343, 2147483648
    %v2358 = vmul.f32 %v2357, 1.442695
    %v2359 = vpow.pop %v2358
    %v2360 = vadd.f32 %v2359, 1.0
    %v2361 = vrcp.pop %v2360
    %v2362 = vmul.f32 1.0, %v2361
    %v2363 = vmul.f32 %v2355, %v2092
    %v2364 = vmul.f32 %v2349, %v2356
    %v2365 = vadd.f32 %v2363, %v2364
    %v2366 = vtanh.pop %v2365
    %v2367 = vmul.f32 %v2362, %v2366
    %v2368 = vpack.c.bf16 %v2367, %v2367
    %2369 = vst [vmem:[%s6] sm:$0xf] %v2368
    %v2370 = vld [vmem:[%s802] sm:$0xff]
    %v2371 = vld [vmem:[%s802 + $0x8] sm:$0xff]
    %v2372 = vld [vmem:[%s802 + $0x10] sm:$0xff]
    %v2373 = vld [vmem:[%s802 + $0x18] sm:$0xff]
    %2374 = vmatprep.subr.bf16.mxu0 %v2195
    %2375 = vmatpush1.bf16.msra.mxu0 %v2194
    %2376 = vmatprep.subr.bf16.mxu0 %v2199
    %2377 = vmatpush1.bf16.msra.mxu0 %v2198
    %2378 = vmatprep.subr.bf16.mxu0 %v2203
    %2379 = vmatpush1.bf16.msra.mxu0 %v2202
    %2380 = vmatprep.subr.bf16.mxu0 %v2207
    %2381 = vmatpush1.bf16.msra.mxu0 %v2206
    %2382 = vmatprep.subr.bf16.mxu0 %v2211
    %2383 = vmatpush1.bf16.msra.mxu0 %v2210
    %2384 = vmatprep.subr.bf16.mxu0 %v2215
    %2385 = vmatpush1.bf16.msra.mxu0 %v2214
    %2386 = vmatprep.subr.bf16.mxu0 %v2219
    %2387 = vmatpush1.bf16.msra.mxu0 %v2218
    %2388 = vmatprep.subr.bf16.mxu0 %v2223
    %2389 = vmatpush1.bf16.msra.mxu0 %v2222
    %2390 = vmatprep.subr.bf16.mxu0 0
    %2391 = vmatpush1.bf16.msra.mxu0 0
    %2392 = vmatprep.subr.bf16.mxu0 0
    %2393 = vmatpush1.bf16.msra.mxu0 0
    %2394 = vmatprep.subr.bf16.mxu0 0
    %2395 = vmatpush1.bf16.msra.mxu0 0
    %2396 = vmatprep.subr.bf16.mxu0 0
    %2397 = vmatpush1.bf16.msra.mxu0 0
    %2398 = vmatprep.subr.bf16.mxu0 0
    %2399 = vmatpush1.bf16.msra.mxu0 0
    %2400 = vmatprep.subr.bf16.mxu0 0
    %2401 = vmatpush1.bf16.msra.mxu0 0
    %2402 = vmatprep.subr.bf16.mxu0 0
    %2403 = vmatpush1.bf16.msra.mxu0 0
    %2404 = vmatprep.subr.bf16.mxu0 0
    %2405 = vmatpush1.bf16.msra.mxu0 0
    %2406 = vmatprep.mubr.bf16.mxu0 0
    %2407 = vmatmul.mubr.bf16.gmra.mrb[0].mxu0 %v2368
    %v2408 = vpop.f32.mrb[0].mxu0
    %v2409 = vadd.f32 0.0, %v2408
    %v2410 = vpop.f32.mrb[0].mxu0
    %v2411 = vadd.f32 0.0, %v2410
    %v2412 = vpop.f32.mrb[0].mxu0
    %v2413 = vpop.f32.mrb[0].mxu0
    %2414 = vdwg.mxu0
    %2415 = vmatprep.subr.bf16.mxu0 %v2197
    %2416 = vmatpush1.bf16.msra.mxu0 %v2196
    %2417 = vmatprep.subr.bf16.mxu0 %v2201
    %2418 = vmatpush1.bf16.msra.mxu0 %v2200
    %2419 = vmatprep.subr.bf16.mxu0 %v2205
    %2420 = vmatpush1.bf16.msra.mxu0 %v2204
    %2421 = vmatprep.subr.bf16.mxu0 %v2209
    %2422 = vmatpush1.bf16.msra.mxu0 %v2208
    %2423 = vmatprep.subr.bf16.mxu0 %v2213
    %2424 = vmatpush1.bf16.msra.mxu0 %v2212
    %2425 = vmatprep.subr.bf16.mxu0 %v2217
    %2426 = vmatpush1.bf16.msra.mxu0 %v2216
    %2427 = vmatprep.subr.bf16.mxu0 %v2221
    %2428 = vmatpush1.bf16.msra.mxu0 %v2220
    %2429 = vmatprep.subr.bf16.mxu0 %v2225
    %2430 = vmatpush1.bf16.msra.mxu0 %v2224
    %2431 = vmatprep.subr.bf16.mxu0 0
    %2432 = vmatpush1.bf16.msra.mxu0 0
    %2433 = vmatprep.subr.bf16.mxu0 0
    %2434 = vmatpush1.bf16.msra.mxu0 0
    %2435 = vmatprep.subr.bf16.mxu0 0
    %2436 = vmatpush1.bf16.msra.mxu0 0
    %2437 = vmatprep.subr.bf16.mxu0 0
    %2438 = vmatpush1.bf16.msra.mxu0 0
    %2439 = vmatprep.subr.bf16.mxu0 0
    %2440 = vmatpush1.bf16.msra.mxu0 0
    %2441 = vmatprep.subr.bf16.mxu0 0
    %2442 = vmatpush1.bf16.msra.mxu0 0
    %2443 = vmatprep.subr.bf16.mxu0 0
    %2444 = vmatpush1.bf16.msra.mxu0 0
    %2445 = vmatprep.subr.bf16.mxu0 0
    %2446 = vmatpush1.bf16.msra.mxu0 0
    %2447 = vmatprep.mubr.bf16.mxu0 0
    %2448 = vmatmul.mubr.bf16.gmra.mrb[0].mxu0 %v2368
    %v2449 = vpop.f32.mrb[0].mxu0
    %v2450 = vadd.f32 0.0, %v2449
    %v2451 = vpop.f32.mrb[0].mxu0
    %v2452 = vadd.f32 0.0, %v2451
    %v2453 = vpop.f32.mrb[0].mxu0
    %v2454 = vpop.f32.mrb[0].mxu0
    %2455 = vdwg.mxu0
    %v2456 = vadd.f32 %v2370, %v2409
    %v2457 = vadd.f32 %v2371, %v2411
    %v2458 = vadd.f32 %v2372, %v2450
    %v2459 = vadd.f32 %v2373, %v2452
    %v2460 = vxor.u32 %v2456, 2147483648
    %v2461 = vmul.f32 %v2460, 1.442695
    %v2462 = vpow.pop %v2461
    %v2463 = vadd.f32 %v2462, 1.0
    %v2464 = vrcp.pop %v2463
    %v2465 = vmul.f32 1.0, %v2464
    %v2466 = vxor.u32 %v2457, 2147483648
    %v2467 = vmul.f32 %v2466, 1.442695
    %v2468 = vpow.pop %v2467
    %v2469 = vadd.f32 %v2468, 1.0
    %v2470 = vrcp.pop %v2469
    %v2471 = vmul.f32 1.0, %v2470
    %v2472 = vtanh.pop %v2458
    %v2473 = vxor.u32 %v2459, 2147483648
    %v2474 = vmul.f32 %v2473, 1.442695
    %v2475 = vpow.pop %v2474
    %v2476 = vadd.f32 %v2475, 1.0
    %v2477 = vrcp.pop %v2476
    %v2478 = vmul.f32 1.0, %v2477
    %v2479 = vmul.f32 %v2471, %v2365
    %v2480 = vmul.f32 %v2465, %v2472
    %v2481 = vadd.f32 %v2479, %v2480
    %v2482 = vtanh.pop %v2481
    %v2483 = vmul.f32 %v2478, %v2482
    %v2484 = vpack.c.bf16 %v2483, %v2483
    %s2485 = scalar_lea.vmem %s6, 4
    %2486 = vst [vmem:[%s2485] sm:$0xf] %v2484
    %v2487 = vld [vmem:[%s920] sm:$0xff]
    %v2488 = vld [vmem:[%s920 + $0x8] sm:$0xff]
    %v2489 = vld [vmem:[%s920 + $0x10] sm:$0xff]
    %v2490 = vld [vmem:[%s920 + $0x18] sm:$0xff]
    %2491 = vmatprep.subr.bf16.mxu0 %v2195
    %2492 = vmatpush1.bf16.msra.mxu0 %v2194
    %2493 = vmatprep.subr.bf16.mxu0 %v2199
    %2494 = vmatpush1.bf16.msra.mxu0 %v2198
    %2495 = vmatprep.subr.bf16.mxu0 %v2203
    %2496 = vmatpush1.bf16.msra.mxu0 %v2202
    %2497 = vmatprep.subr.bf16.mxu0 %v2207
    %2498 = vmatpush1.bf16.msra.mxu0 %v2206
    %2499 = vmatprep.subr.bf16.mxu0 %v2211
    %2500 = vmatpush1.bf16.msra.mxu0 %v2210
    %2501 = vmatprep.subr.bf16.mxu0 %v2215
    %2502 = vmatpush1.bf16.msra.mxu0 %v2214
    %2503 = vmatprep.subr.bf16.mxu0 %v2219
    %2504 = vmatpush1.bf16.msra.mxu0 %v2218
    %2505 = vmatprep.subr.bf16.mxu0 %v2223
    %2506 = vmatpush1.bf16.msra.mxu0 %v2222
    %2507 = vmatprep.subr.bf16.mxu0 0
    %2508 = vmatpush1.bf16.msra.mxu0 0
    %2509 = vmatprep.subr.bf16.mxu0 0
    %2510 = vmatpush1.bf16.msra.mxu0 0
    %2511 = vmatprep.subr.bf16.mxu0 0
    %2512 = vmatpush1.bf16.msra.mxu0 0
    %2513 = vmatprep.subr.bf16.mxu0 0
    %2514 = vmatpush1.bf16.msra.mxu0 0
    %2515 = vmatprep.subr.bf16.mxu0 0
    %2516 = vmatpush1.bf16.msra.mxu0 0
    %2517 = vmatprep.subr.bf16.mxu0 0
    %2518 = vmatpush1.bf16.msra.mxu0 0
    %2519 = vmatprep.subr.bf16.mxu0 0
    %2520 = vmatpush1.bf16.msra.mxu0 0
    %2521 = vmatprep.subr.bf16.mxu0 0
    %2522 = vmatpush1.bf16.msra.mxu0 0
    %2523 = vmatprep.mubr.bf16.mxu0 0
    %2524 = vmatmul.mubr.bf16.gmra.mrb[0].mxu0 %v2484
    %v2525 = vpop.f32.mrb[0].mxu0
    %v2526 = vadd.f32 0.0, %v2525
    %v2527 = vpop.f32.mrb[0].mxu0
    %v2528 = vadd.f32 0.0, %v2527
    %v2529 = vpop.f32.mrb[0].mxu0
    %v2530 = vpop.f32.mrb[0].mxu0
    %2531 = vdwg.mxu0
    %2532 = vmatprep.subr.bf16.mxu0 %v2197
    %2533 = vmatpush1.bf16.msra.mxu0 %v2196
    %2534 = vmatprep.subr.bf16.mxu0 %v2201
    %2535 = vmatpush1.bf16.msra.mxu0 %v2200
    %2536 = vmatprep.subr.bf16.mxu0 %v2205
    %2537 = vmatpush1.bf16.msra.mxu0 %v2204
    %2538 = vmatprep.subr.bf16.mxu0 %v2209
    %2539 = vmatpush1.bf16.msra.mxu0 %v2208
    %2540 = vmatprep.subr.bf16.mxu0 %v2213
    %2541 = vmatpush1.bf16.msra.mxu0 %v2212
    %2542 = vmatprep.subr.bf16.mxu0 %v2217
    %2543 = vmatpush1.bf16.msra.mxu0 %v2216
    %2544 = vmatprep.subr.bf16.mxu0 %v2221
    %2545 = vmatpush1.bf16.msra.mxu0 %v2220
    %2546 = vmatprep.subr.bf16.mxu0 %v2225
    %2547 = vmatpush1.bf16.msra.mxu0 %v2224
    %2548 = vmatprep.subr.bf16.mxu0 0
    %2549 = vmatpush1.bf16.msra.mxu0 0
    %2550 = vmatprep.subr.bf16.mxu0 0
    %2551 = vmatpush1.bf16.msra.mxu0 0
    %2552 = vmatprep.subr.bf16.mxu0 0
    %2553 = vmatpush1.bf16.msra.mxu0 0
    %2554 = vmatprep.subr.bf16.mxu0 0
    %2555 = vmatpush1.bf16.msra.mxu0 0
    %2556 = vmatprep.subr.bf16.mxu0 0
    %2557 = vmatpush1.bf16.msra.mxu0 0
    %2558 = vmatprep.subr.bf16.mxu0 0
    %2559 = vmatpush1.bf16.msra.mxu0 0
    %2560 = vmatprep.subr.bf16.mxu0 0
    %2561 = vmatpush1.bf16.msra.mxu0 0
    %2562 = vmatprep.subr.bf16.mxu0 0
    %2563 = vmatpush1.bf16.msra.mxu0 0
    %2564 = vmatprep.mubr.bf16.mxu0 0
    %2565 = vmatmul.mubr.bf16.gmra.mrb[0].mxu0 %v2484
    %v2566 = vpop.f32.mrb[0].mxu0
    %v2567 = vadd.f32 0.0, %v2566
    %v2568 = vpop.f32.mrb[0].mxu0
    %v2569 = vadd.f32 0.0, %v2568
    %v2570 = vpop.f32.mrb[0].mxu0
    %v2571 = vpop.f32.mrb[0].mxu0
    %2572 = vdwg.mxu0
    %v2573 = vadd.f32 %v2487, %v2526
    %v2574 = vadd.f32 %v2488, %v2528
    %v2575 = vadd.f32 %v2489, %v2567
    %v2576 = vadd.f32 %v2490, %v2569
    %v2577 = vxor.u32 %v2573, 2147483648
    %v2578 = vmul.f32 %v2577, 1.442695
    %v2579 = vpow.pop %v2578
    %v2580 = vadd.f32 %v2579, 1.0
    %v2581 = vrcp.pop %v2580
    %v2582 = vmul.f32 1.0, %v2581
    %v2583 = vxor.u32 %v2574, 2147483648
    %v2584 = vmul.f32 %v2583, 1.442695
    %v2585 = vpow.pop %v2584
    %v2586 = vadd.f32 %v2585, 1.0
    %v2587 = vrcp.pop %v2586
    %v2588 = vmul.f32 1.0, %v2587
    %v2589 = vtanh.pop %v2575
    %v2590 = vxor.u32 %v2576, 2147483648
    %v2591 = vmul.f32 %v2590, 1.442695
    %v2592 = vpow.pop %v2591
    %v2593 = vadd.f32 %v2592, 1.0
    %v2594 = vrcp.pop %v2593
    %v2595 = vmul.f32 1.0, %v2594
    %v2596 = vmul.f32 %v2588, %v2481
    %v2597 = vmul.f32 %v2582, %v2589
    %v2598 = vadd.f32 %v2596, %v2597
    %v2599 = vtanh.pop %v2598
    %v2600 = vmul.f32 %v2595, %v2599
    %v2601 = vpack.c.bf16 %v2600, %v2600
    %s2602 = scalar_lea.vmem %s6, 8
    %2603 = vst [vmem:[%s2602] sm:$0xf] %v2601
    %v2604 = vld [vmem:[%s1038] sm:$0xff]
    %v2605 = vld [vmem:[%s1038 + $0x8] sm:$0xff]
    %v2606 = vld [vmem:[%s1038 + $0x10] sm:$0xff]
    %v2607 = vld [vmem:[%s1038 + $0x18] sm:$0xff]
    %2608 = vmatprep.subr.bf16.mxu0 %v2195
    %2609 = vmatpush1.bf16.msra.mxu0 %v2194
    %2610 = vmatprep.subr.bf16.mxu0 %v2199
    %2611 = vmatpush1.bf16.msra.mxu0 %v2198
    %2612 = vmatprep.subr.bf16.mxu0 %v2203
    %2613 = vmatpush1.bf16.msra.mxu0 %v2202
    %2614 = vmatprep.subr.bf16.mxu0 %v2207
    %2615 = vmatpush1.bf16.msra.mxu0 %v2206
    %2616 = vmatprep.subr.bf16.mxu0 %v2211
    %2617 = vmatpush1.bf16.msra.mxu0 %v2210
    %2618 = vmatprep.subr.bf16.mxu0 %v2215
    %2619 = vmatpush1.bf16.msra.mxu0 %v2214
    %2620 = vmatprep.subr.bf16.mxu0 %v2219
    %2621 = vmatpush1.bf16.msra.mxu0 %v2218
    %2622 = vmatprep.subr.bf16.mxu0 %v2223
    %2623 = vmatpush1.bf16.msra.mxu0 %v2222
    %2624 = vmatprep.subr.bf16.mxu0 0
    %2625 = vmatpush1.bf16.msra.mxu0 0
    %2626 = vmatprep.subr.bf16.mxu0 0
    %2627 = vmatpush1.bf16.msra.mxu0 0
    %2628 = vmatprep.subr.bf16.mxu0 0
    %2629 = vmatpush1.bf16.msra.mxu0 0
    %2630 = vmatprep.subr.bf16.mxu0 0
    %2631 = vmatpush1.bf16.msra.mxu0 0
    %2632 = vmatprep.subr.bf16.mxu0 0
    %2633 = vmatpush1.bf16.msra.mxu0 0
    %2634 = vmatprep.subr.bf16.mxu0 0
    %2635 = vmatpush1.bf16.msra.mxu0 0
    %2636 = vmatprep.subr.bf16.mxu0 0
    %2637 = vmatpush1.bf16.msra.mxu0 0
    %2638 = vmatprep.subr.bf16.mxu0 0
    %2639 = vmatpush1.bf16.msra.mxu0 0
    %2640 = vmatprep.mubr.bf16.mxu0 0
    %2641 = vmatmul.mubr.bf16.gmra.mrb[0].mxu0 %v2601
    %v2642 = vpop.f32.mrb[0].mxu0
    %v2643 = vadd.f32 0.0, %v2642
    %v2644 = vpop.f32.mrb[0].mxu0
    %v2645 = vadd.f32 0.0, %v2644
    %v2646 = vpop.f32.mrb[0].mxu0
    %v2647 = vpop.f32.mrb[0].mxu0
    %2648 = vdwg.mxu0
    %2649 = vmatprep.subr.bf16.mxu0 %v2197
    %2650 = vmatpush1.bf16.msra.mxu0 %v2196
    %2651 = vmatprep.subr.bf16.mxu0 %v2201
    %2652 = vmatpush1.bf16.msra.mxu0 %v2200
    %2653 = vmatprep.subr.bf16.mxu0 %v2205
    %2654 = vmatpush1.bf16.msra.mxu0 %v2204
    %2655 = vmatprep.subr.bf16.mxu0 %v2209
    %2656 = vmatpush1.bf16.msra.mxu0 %v2208
    %2657 = vmatprep.subr.bf16.mxu0 %v2213
    %2658 = vmatpush1.bf16.msra.mxu0 %v2212
    %2659 = vmatprep.subr.bf16.mxu0 %v2217
    %2660 = vmatpush1.bf16.msra.mxu0 %v2216
    %2661 = vmatprep.subr.bf16.mxu0 %v2221
    %2662 = vmatpush1.bf16.msra.mxu0 %v2220
    %2663 = vmatprep.subr.bf16.mxu0 %v2225
    %2664 = vmatpush1.bf16.msra.mxu0 %v2224
    %2665 = vmatprep.subr.bf16.mxu0 0
    %2666 = vmatpush1.bf16.msra.mxu0 0
    %2667 = vmatprep.subr.bf16.mxu0 0
    %2668 = vmatpush1.bf16.msra.mxu0 0
    %2669 = vmatprep.subr.bf16.mxu0 0
    %2670 = vmatpush1.bf16.msra.mxu0 0
    %2671 = vmatprep.subr.bf16.mxu0 0
    %2672 = vmatpush1.bf16.msra.mxu0 0
    %2673 = vmatprep.subr.bf16.mxu0 0
    %2674 = vmatpush1.bf16.msra.mxu0 0
    %2675 = vmatprep.subr.bf16.mxu0 0
    %2676 = vmatpush1.bf16.msra.mxu0 0
    %2677 = vmatprep.subr.bf16.mxu0 0
    %2678 = vmatpush1.bf16.msra.mxu0 0
    %2679 = vmatprep.subr.bf16.mxu0 0
    %2680 = vmatpush1.bf16.msra.mxu0 0
    %2681 = vmatprep.mubr.bf16.mxu0 0
    %2682 = vmatmul.mubr.bf16.gmra.mrb[0].mxu0 %v2601
    %v2683 = vpop.f32.mrb[0].mxu0
    %v2684 = vadd.f32 0.0, %v2683
    %v2685 = vpop.f32.mrb[0].mxu0
    %v2686 = vadd.f32 0.0, %v2685
    %v2687 = vpop.f32.mrb[0].mxu0
    %v2688 = vpop.f32.mrb[0].mxu0
    %2689 = vdwg.mxu0
    %v2690 = vadd.f32 %v2604, %v2643
    %v2691 = vadd.f32 %v2605, %v2645
    %v2692 = vadd.f32 %v2606, %v2684
    %v2693 = vadd.f32 %v2607, %v2686
    %v2694 = vxor.u32 %v2690, 2147483648
    %v2695 = vmul.f32 %v2694, 1.442695
    %v2696 = vpow.pop %v2695
    %v2697 = vadd.f32 %v2696, 1.0
    %v2698 = vrcp.pop %v2697
    %v2699 = vmul.f32 1.0, %v2698
    %v2700 = vxor.u32 %v2691, 2147483648
    %v2701 = vmul.f32 %v2700, 1.442695
    %v2702 = vpow.pop %v2701
    %v2703 = vadd.f32 %v2702, 1.0
    %v2704 = vrcp.pop %v2703
    %v2705 = vmul.f32 1.0, %v2704
    %v2706 = vtanh.pop %v2692
    %v2707 = vxor.u32 %v2693, 2147483648
    %v2708 = vmul.f32 %v2707, 1.442695
    %v2709 = vpow.pop %v2708
    %v2710 = vadd.f32 %v2709, 1.0
    %v2711 = vrcp.pop %v2710
    %v2712 = vmul.f32 1.0, %v2711
    %v2713 = vmul.f32 %v2705, %v2598
    %v2714 = vmul.f32 %v2699, %v2706
    %v2715 = vadd.f32 %v2713, %v2714
    %v2716 = vtanh.pop %v2715
    %v2717 = vmul.f32 %v2712, %v2716
    %v2718 = vpack.c.bf16 %v2717, %v2717
    %s2719 = scalar_lea.vmem %s6, 12
    %2720 = vst [vmem:[%s2719] sm:$0xf] %v2718
    %v2721 = vld [vmem:[%s1156] sm:$0xff]
    %v2722 = vld [vmem:[%s1156 + $0x8] sm:$0xff]
    %v2723 = vld [vmem:[%s1156 + $0x10] sm:$0xff]
    %v2724 = vld [vmem:[%s1156 + $0x18] sm:$0xff]
    %2725 = vmatprep.subr.bf16.mxu0 %v2195
    %2726 = vmatpush1.bf16.msra.mxu0 %v2194
    %2727 = vmatprep.subr.bf16.mxu0 %v2199
    %2728 = vmatpush1.bf16.msra.mxu0 %v2198
    %2729 = vmatprep.subr.bf16.mxu0 %v2203
    %2730 = vmatpush1.bf16.msra.mxu0 %v2202
    %2731 = vmatprep.subr.bf16.mxu0 %v2207
    %2732 = vmatpush1.bf16.msra.mxu0 %v2206
    %2733 = vmatprep.subr.bf16.mxu0 %v2211
    %2734 = vmatpush1.bf16.msra.mxu0 %v2210
    %2735 = vmatprep.subr.bf16.mxu0 %v2215
    %2736 = vmatpush1.bf16.msra.mxu0 %v2214
    %2737 = vmatprep.subr.bf16.mxu0 %v2219
    %2738 = vmatpush1.bf16.msra.mxu0 %v2218
    %2739 = vmatprep.subr.bf16.mxu0 %v2223
    %2740 = vmatpush1.bf16.msra.mxu0 %v2222
    %2741 = vmatprep.subr.bf16.mxu0 0
    %2742 = vmatpush1.bf16.msra.mxu0 0
    %2743 = vmatprep.subr.bf16.mxu0 0
    %2744 = vmatpush1.bf16.msra.mxu0 0
    %2745 = vmatprep.subr.bf16.mxu0 0
    %2746 = vmatpush1.bf16.msra.mxu0 0
    %2747 = vmatprep.subr.bf16.mxu0 0
    %2748 = vmatpush1.bf16.msra.mxu0 0
    %2749 = vmatprep.subr.bf16.mxu0 0
    %2750 = vmatpush1.bf16.msra.mxu0 0
    %2751 = vmatprep.subr.bf16.mxu0 0
    %2752 = vmatpush1.bf16.msra.mxu0 0
    %2753 = vmatprep.subr.bf16.mxu0 0
    %2754 = vmatpush1.bf16.msra.mxu0 0
    %2755 = vmatprep.subr.bf16.mxu0 0
    %2756 = vmatpush1.bf16.msra.mxu0 0
    %2757 = vmatprep.mubr.bf16.mxu0 0
    %2758 = vmatmul.mubr.bf16.gmra.mrb[0].mxu0 %v2718
    %v2759 = vpop.f32.mrb[0].mxu0
    %v2760 = vadd.f32 0.0, %v2759
    %v2761 = vpop.f32.mrb[0].mxu0
    %v2762 = vadd.f32 0.0, %v2761
    %v2763 = vpop.f32.mrb[0].mxu0
    %v2764 = vpop.f32.mrb[0].mxu0
    %2765 = vdwg.mxu0
    %2766 = vmatprep.subr.bf16.mxu0 %v2197
    %2767 = vmatpush1.bf16.msra.mxu0 %v2196
    %2768 = vmatprep.subr.bf16.mxu0 %v2201
    %2769 = vmatpush1.bf16.msra.mxu0 %v2200
    %2770 = vmatprep.subr.bf16.mxu0 %v2205
    %2771 = vmatpush1.bf16.msra.mxu0 %v2204
    %2772 = vmatprep.subr.bf16.mxu0 %v2209
    %2773 = vmatpush1.bf16.msra.mxu0 %v2208
    %2774 = vmatprep.subr.bf16.mxu0 %v2213
    %2775 = vmatpush1.bf16.msra.mxu0 %v2212
    %2776 = vmatprep.subr.bf16.mxu0 %v2217
    %2777 = vmatpush1.bf16.msra.mxu0 %v2216
    %2778 = vmatprep.subr.bf16.mxu0 %v2221
    %2779 = vmatpush1.bf16.msra.mxu0 %v2220
    %2780 = vmatprep.subr.bf16.mxu0 %v2225
    %2781 = vmatpush1.bf16.msra.mxu0 %v2224
    %2782 = vmatprep.subr.bf16.mxu0 0
    %2783 = vmatpush1.bf16.msra.mxu0 0
    %2784 = vmatprep.subr.bf16.mxu0 0
    %2785 = vmatpush1.bf16.msra.mxu0 0
    %2786 = vmatprep.subr.bf16.mxu0 0
    %2787 = vmatpush1.bf16.msra.mxu0 0
    %2788 = vmatprep.subr.bf16.mxu0 0
    %2789 = vmatpush1.bf16.msra.mxu0 0
    %2790 = vmatprep.subr.bf16.mxu0 0
    %2791 = vmatpush1.bf16.msra.mxu0 0
    %2792 = vmatprep.subr.bf16.mxu0 0
    %2793 = vmatpush1.bf16.msra.mxu0 0
    %2794 = vmatprep.subr.bf16.mxu0 0
    %2795 = vmatpush1.bf16.msra.mxu0 0
    %2796 = vmatprep.subr.bf16.mxu0 0
    %2797 = vmatpush1.bf16.msra.mxu0 0
    %2798 = vmatprep.mubr.bf16.mxu0 0
    %2799 = vmatmul.mubr.bf16.gmra.mrb[0].mxu0 %v2718
    %v2800 = vpop.f32.mrb[0].mxu0
    %v2801 = vadd.f32 0.0, %v2800
    %v2802 = vpop.f32.mrb[0].mxu0
    %v2803 = vadd.f32 0.0, %v2802
    %v2804 = vpop.f32.mrb[0].mxu0
    %v2805 = vpop.f32.mrb[0].mxu0
    %2806 = vdwg.mxu0
    %v2807 = vadd.f32 %v2721, %v2760
    %v2808 = vadd.f32 %v2722, %v2762
    %v2809 = vadd.f32 %v2723, %v2801
    %v2810 = vadd.f32 %v2724, %v2803
    %v2811 = vxor.u32 %v2807, 2147483648
    %v2812 = vmul.f32 %v2811, 1.442695
    %v2813 = vpow.pop %v2812
    %v2814 = vadd.f32 %v2813, 1.0
    %v2815 = vrcp.pop %v2814
    %v2816 = vmul.f32 1.0, %v2815
    %v2817 = vxor.u32 %v2808, 2147483648
    %v2818 = vmul.f32 %v2817, 1.442695
    %v2819 = vpow.pop %v2818
    %v2820 = vadd.f32 %v2819, 1.0
    %v2821 = vrcp.pop %v2820
    %v2822 = vmul.f32 1.0, %v2821
    %v2823 = vtanh.pop %v2809
    %v2824 = vxor.u32 %v2810, 2147483648
    %v2825 = vmul.f32 %v2824, 1.442695
    %v2826 = vpow.pop %v2825
    %v2827 = vadd.f32 %v2826, 1.0
    %v2828 = vrcp.pop %v2827
    %v2829 = vmul.f32 1.0, %v2828
    %v2830 = vmul.f32 %v2822, %v2715
    %v2831 = vmul.f32 %v2816, %v2823
    %v2832 = vadd.f32 %v2830, %v2831
    %v2833 = vtanh.pop %v2832
    %v2834 = vmul.f32 %v2829, %v2833
    %v2835 = vpack.c.bf16 %v2834, %v2834
    %s2836 = scalar_lea.vmem %s6, 16
    %2837 = vst [vmem:[%s2836] sm:$0xf] %v2835
    %v2838 = vld [vmem:[%s1274] sm:$0xff]
    %v2839 = vld [vmem:[%s1274 + $0x8] sm:$0xff]
    %v2840 = vld [vmem:[%s1274 + $0x10] sm:$0xff]
    %v2841 = vld [vmem:[%s1274 + $0x18] sm:$0xff]
    %2842 = vmatprep.subr.bf16.mxu0 %v2195
    %2843 = vmatpush1.bf16.msra.mxu0 %v2194
    %2844 = vmatprep.subr.bf16.mxu0 %v2199
    %2845 = vmatpush1.bf16.msra.mxu0 %v2198
    %2846 = vmatprep.subr.bf16.mxu0 %v2203
    %2847 = vmatpush1.bf16.msra.mxu0 %v2202
    %2848 = vmatprep.subr.bf16.mxu0 %v2207
    %2849 = vmatpush1.bf16.msra.mxu0 %v2206
    %2850 = vmatprep.subr.bf16.mxu0 %v2211
    %2851 = vmatpush1.bf16.msra.mxu0 %v2210
    %2852 = vmatprep.subr.bf16.mxu0 %v2215
    %2853 = vmatpush1.bf16.msra.mxu0 %v2214
    %2854 = vmatprep.subr.bf16.mxu0 %v2219
    %2855 = vmatpush1.bf16.msra.mxu0 %v2218
    %2856 = vmatprep.subr.bf16.mxu0 %v2223
    %2857 = vmatpush1.bf16.msra.mxu0 %v2222
    %2858 = vmatprep.subr.bf16.mxu0 0
    %2859 = vmatpush1.bf16.msra.mxu0 0
    %2860 = vmatprep.subr.bf16.mxu0 0
    %2861 = vmatpush1.bf16.msra.mxu0 0
    %2862 = vmatprep.subr.bf16.mxu0 0
    %2863 = vmatpush1.bf16.msra.mxu0 0
    %2864 = vmatprep.subr.bf16.mxu0 0
    %2865 = vmatpush1.bf16.msra.mxu0 0
    %2866 = vmatprep.subr.bf16.mxu0 0
    %2867 = vmatpush1.bf16.msra.mxu0 0
    %2868 = vmatprep.subr.bf16.mxu0 0
    %2869 = vmatpush1.bf16.msra.mxu0 0
    %2870 = vmatprep.subr.bf16.mxu0 0
    %2871 = vmatpush1.bf16.msra.mxu0 0
    %2872 = vmatprep.subr.bf16.mxu0 0
    %2873 = vmatpush1.bf16.msra.mxu0 0
    %2874 = vmatprep.mubr.bf16.mxu0 0
    %2875 = vmatmul.mubr.bf16.gmra.mrb[0].mxu0 %v2835
    %v2876 = vpop.f32.mrb[0].mxu0
    %v2877 = vadd.f32 0.0, %v2876
    %v2878 = vpop.f32.mrb[0].mxu0
    %v2879 = vadd.f32 0.0, %v2878
    %v2880 = vpop.f32.mrb[0].mxu0
    %v2881 = vpop.f32.mrb[0].mxu0
    %2882 = vdwg.mxu0
    %2883 = vmatprep.subr.bf16.mxu0 %v2197
    %2884 = vmatpush1.bf16.msra.mxu0 %v2196
    %2885 = vmatprep.subr.bf16.mxu0 %v2201
    %2886 = vmatpush1.bf16.msra.mxu0 %v2200
    %2887 = vmatprep.subr.bf16.mxu0 %v2205
    %2888 = vmatpush1.bf16.msra.mxu0 %v2204
    %2889 = vmatprep.subr.bf16.mxu0 %v2209
    %2890 = vmatpush1.bf16.msra.mxu0 %v2208
    %2891 = vmatprep.subr.bf16.mxu0 %v2213
    %2892 = vmatpush1.bf16.msra.mxu0 %v2212
    %2893 = vmatprep.subr.bf16.mxu0 %v2217
    %2894 = vmatpush1.bf16.msra.mxu0 %v2216
    %2895 = vmatprep.subr.bf16.mxu0 %v2221
    %2896 = vmatpush1.bf16.msra.mxu0 %v2220
    %2897 = vmatprep.subr.bf16.mxu0 %v2225
    %2898 = vmatpush1.bf16.msra.mxu0 %v2224
    %2899 = vmatprep.subr.bf16.mxu0 0
    %2900 = vmatpush1.bf16.msra.mxu0 0
    %2901 = vmatprep.subr.bf16.mxu0 0
    %2902 = vmatpush1.bf16.msra.mxu0 0
    %2903 = vmatprep.subr.bf16.mxu0 0
    %2904 = vmatpush1.bf16.msra.mxu0 0
    %2905 = vmatprep.subr.bf16.mxu0 0
    %2906 = vmatpush1.bf16.msra.mxu0 0
    %2907 = vmatprep.subr.bf16.mxu0 0
    %2908 = vmatpush1.bf16.msra.mxu0 0
    %2909 = vmatprep.subr.bf16.mxu0 0
    %2910 = vmatpush1.bf16.msra.mxu0 0
    %2911 = vmatprep.subr.bf16.mxu0 0
    %2912 = vmatpush1.bf16.msra.mxu0 0
    %2913 = vmatprep.subr.bf16.mxu0 0
    %2914 = vmatpush1.bf16.msra.mxu0 0
    %2915 = vmatprep.mubr.bf16.mxu0 0
    %2916 = vmatmul.mubr.bf16.gmra.mrb[0].mxu0 %v2835
    %v2917 = vpop.f32.mrb[0].mxu0
    %v2918 = vadd.f32 0.0, %v2917
    %v2919 = vpop.f32.mrb[0].mxu0
    %v2920 = vadd.f32 0.0, %v2919
    %v2921 = vpop.f32.mrb[0].mxu0
    %v2922 = vpop.f32.mrb[0].mxu0
    %2923 = vdwg.mxu0
    %v2924 = vadd.f32 %v2838, %v2877
    %v2925 = vadd.f32 %v2839, %v2879
    %v2926 = vadd.f32 %v2840, %v2918
    %v2927 = vadd.f32 %v2841, %v2920
    %v2928 = vxor.u32 %v2924, 2147483648
    %v2929 = vmul.f32 %v2928, 1.442695
    %v2930 = vpow.pop %v2929
    %v2931 = vadd.f32 %v2930, 1.0
    %v2932 = vrcp.pop %v2931
    %v2933 = vmul.f32 1.0, %v2932
    %v2934 = vxor.u32 %v2925, 2147483648
    %v2935 = vmul.f32 %v2934, 1.442695
    %v2936 = vpow.pop %v2935
    %v2937 = vadd.f32 %v2936, 1.0
    %v2938 = vrcp.pop %v2937
    %v2939 = vmul.f32 1.0, %v2938
    %v2940 = vtanh.pop %v2926
    %v2941 = vxor.u32 %v2927, 2147483648
    %v2942 = vmul.f32 %v2941, 1.442695
    %v2943 = vpow.pop %v2942
    %v2944 = vadd.f32 %v2943, 1.0
    %v2945 = vrcp.pop %v2944
    %v2946 = vmul.f32 1.0, %v2945
    %v2947 = vmul.f32 %v2939, %v2832
    %v2948 = vmul.f32 %v2933, %v2940
    %v2949 = vadd.f32 %v2947, %v2948
    %v2950 = vtanh.pop %v2949
    %v2951 = vmul.f32 %v2946, %v2950
    %v2952 = vpack.c.bf16 %v2951, %v2951
    %s2953 = scalar_lea.vmem %s6, 20
    %2954 = vst [vmem:[%s2953] sm:$0xf] %v2952
    %v2955 = vld [vmem:[%s1392] sm:$0xff]
    %v2956 = vld [vmem:[%s1392 + $0x8] sm:$0xff]
    %v2957 = vld [vmem:[%s1392 + $0x10] sm:$0xff]
    %v2958 = vld [vmem:[%s1392 + $0x18] sm:$0xff]
    %2959 = vmatprep.subr.bf16.mxu0 %v2195
    %2960 = vmatpush1.bf16.msra.mxu0 %v2194
    %2961 = vmatprep.subr.bf16.mxu0 %v2199
    %2962 = vmatpush1.bf16.msra.mxu0 %v2198
    %2963 = vmatprep.subr.bf16.mxu0 %v2203
    %2964 = vmatpush1.bf16.msra.mxu0 %v2202
    %2965 = vmatprep.subr.bf16.mxu0 %v2207
    %2966 = vmatpush1.bf16.msra.mxu0 %v2206
    %2967 = vmatprep.subr.bf16.mxu0 %v2211
    %2968 = vmatpush1.bf16.msra.mxu0 %v2210
    %2969 = vmatprep.subr.bf16.mxu0 %v2215
    %2970 = vmatpush1.bf16.msra.mxu0 %v2214
    %2971 = vmatprep.subr.bf16.mxu0 %v2219
    %2972 = vmatpush1.bf16.msra.mxu0 %v2218
    %2973 = vmatprep.subr.bf16.mxu0 %v2223
    %2974 = vmatpush1.bf16.msra.mxu0 %v2222
    %2975 = vmatprep.subr.bf16.mxu0 0
    %2976 = vmatpush1.bf16.msra.mxu0 0
    %2977 = vmatprep.subr.bf16.mxu0 0
    %2978 = vmatpush1.bf16.msra.mxu0 0
    %2979 = vmatprep.subr.bf16.mxu0 0
    %2980 = vmatpush1.bf16.msra.mxu0 0
    %2981 = vmatprep.subr.bf16.mxu0 0
    %2982 = vmatpush1.bf16.msra.mxu0 0
    %2983 = vmatprep.subr.bf16.mxu0 0
    %2984 = vmatpush1.bf16.msra.mxu0 0
    %2985 = vmatprep.subr.bf16.mxu0 0
    %2986 = vmatpush1.bf16.msra.mxu0 0
    %2987 = vmatprep.subr.bf16.mxu0 0
    %2988 = vmatpush1.bf16.msra.mxu0 0
    %2989 = vmatprep.subr.bf16.mxu0 0
    %2990 = vmatpush1.bf16.msra.mxu0 0
    %2991 = vmatprep.mubr.bf16.mxu0 0
    %2992 = vmatmul.mubr.bf16.gmra.mrb[0].mxu0 %v2952
    %v2993 = vpop.f32.mrb[0].mxu0
    %v2994 = vadd.f32 0.0, %v2993
    %v2995 = vpop.f32.mrb[0].mxu0
    %v2996 = vadd.f32 0.0, %v2995
    %v2997 = vpop.f32.mrb[0].mxu0
    %v2998 = vpop.f32.mrb[0].mxu0
    %2999 = vdwg.mxu0
    %3000 = vmatprep.subr.bf16.mxu0 %v2197
    %3001 = vmatpush1.bf16.msra.mxu0 %v2196
    %3002 = vmatprep.subr.bf16.mxu0 %v2201
    %3003 = vmatpush1.bf16.msra.mxu0 %v2200
    %3004 = vmatprep.subr.bf16.mxu0 %v2205
    %3005 = vmatpush1.bf16.msra.mxu0 %v2204
    %3006 = vmatprep.subr.bf16.mxu0 %v2209
    %3007 = vmatpush1.bf16.msra.mxu0 %v2208
    %3008 = vmatprep.subr.bf16.mxu0 %v2213
    %3009 = vmatpush1.bf16.msra.mxu0 %v2212
    %3010 = vmatprep.subr.bf16.mxu0 %v2217
    %3011 = vmatpush1.bf16.msra.mxu0 %v2216
    %3012 = vmatprep.subr.bf16.mxu0 %v2221
    %3013 = vmatpush1.bf16.msra.mxu0 %v2220
    %3014 = vmatprep.subr.bf16.mxu0 %v2225
    %3015 = vmatpush1.bf16.msra.mxu0 %v2224
    %3016 = vmatprep.subr.bf16.mxu0 0
    %3017 = vmatpush1.bf16.msra.mxu0 0
    %3018 = vmatprep.subr.bf16.mxu0 0
    %3019 = vmatpush1.bf16.msra.mxu0 0
    %3020 = vmatprep.subr.bf16.mxu0 0
    %3021 = vmatpush1.bf16.msra.mxu0 0
    %3022 = vmatprep.subr.bf16.mxu0 0
    %3023 = vmatpush1.bf16.msra.mxu0 0
    %3024 = vmatprep.subr.bf16.mxu0 0
    %3025 = vmatpush1.bf16.msra.mxu0 0
    %3026 = vmatprep.subr.bf16.mxu0 0
    %3027 = vmatpush1.bf16.msra.mxu0 0
    %3028 = vmatprep.subr.bf16.mxu0 0
    %3029 = vmatpush1.bf16.msra.mxu0 0
    %3030 = vmatprep.subr.bf16.mxu0 0
    %3031 = vmatpush1.bf16.msra.mxu0 0
    %3032 = vmatprep.mubr.bf16.mxu0 0
    %3033 = vmatmul.mubr.bf16.gmra.mrb[0].mxu0 %v2952
    %v3034 = vpop.f32.mrb[0].mxu0
    %v3035 = vadd.f32 0.0, %v3034
    %v3036 = vpop.f32.mrb[0].mxu0
    %v3037 = vadd.f32 0.0, %v3036
    %v3038 = vpop.f32.mrb[0].mxu0
    %v3039 = vpop.f32.mrb[0].mxu0
    %3040 = vdwg.mxu0
    %v3041 = vadd.f32 %v2955, %v2994
    %v3042 = vadd.f32 %v2956, %v2996
    %v3043 = vadd.f32 %v2957, %v3035
    %v3044 = vadd.f32 %v2958, %v3037
    %v3045 = vxor.u32 %v3041, 2147483648
    %v3046 = vmul.f32 %v3045, 1.442695
    %v3047 = vpow.pop %v3046
    %v3048 = vadd.f32 %v3047, 1.0
    %v3049 = vrcp.pop %v3048
    %v3050 = vmul.f32 1.0, %v3049
    %v3051 = vxor.u32 %v3042, 2147483648
    %v3052 = vmul.f32 %v3051, 1.442695
    %v3053 = vpow.pop %v3052
    %v3054 = vadd.f32 %v3053, 1.0
    %v3055 = vrcp.pop %v3054
    %v3056 = vmul.f32 1.0, %v3055
    %v3057 = vtanh.pop %v3043
    %v3058 = vxor.u32 %v3044, 2147483648
    %v3059 = vmul.f32 %v3058, 1.442695
    %v3060 = vpow.pop %v3059
    %v3061 = vadd.f32 %v3060, 1.0
    %v3062 = vrcp.pop %v3061
    %v3063 = vmul.f32 1.0, %v3062
    %v3064 = vmul.f32 %v3056, %v2949
    %v3065 = vmul.f32 %v3050, %v3057
    %v3066 = vadd.f32 %v3064, %v3065
    %v3067 = vtanh.pop %v3066
    %v3068 = vmul.f32 %v3063, %v3067
    %v3069 = vpack.c.bf16 %v3068, %v3068
    %s3070 = scalar_lea.vmem %s6, 24
    %3071 = vst [vmem:[%s3070] sm:$0xf] %v3069
    %v3072 = vld [vmem:[%s1510] sm:$0xff]
    %v3073 = vld [vmem:[%s1510 + $0x8] sm:$0xff]
    %v3074 = vld [vmem:[%s1510 + $0x10] sm:$0xff]
    %v3075 = vld [vmem:[%s1510 + $0x18] sm:$0xff]
    %3076 = vmatprep.subr.bf16.mxu0 %v2195
    %3077 = vmatpush1.bf16.msra.mxu0 %v2194
    %3078 = vmatprep.subr.bf16.mxu0 %v2199
    %3079 = vmatpush1.bf16.msra.mxu0 %v2198
    %3080 = vmatprep.subr.bf16.mxu0 %v2203
    %3081 = vmatpush1.bf16.msra.mxu0 %v2202
    %3082 = vmatprep.subr.bf16.mxu0 %v2207
    %3083 = vmatpush1.bf16.msra.mxu0 %v2206
    %3084 = vmatprep.subr.bf16.mxu0 %v2211
    %3085 = vmatpush1.bf16.msra.mxu0 %v2210
    %3086 = vmatprep.subr.bf16.mxu0 %v2215
    %3087 = vmatpush1.bf16.msra.mxu0 %v2214
    %3088 = vmatprep.subr.bf16.mxu0 %v2219
    %3089 = vmatpush1.bf16.msra.mxu0 %v2218
    %3090 = vmatprep.subr.bf16.mxu0 %v2223
    %3091 = vmatpush1.bf16.msra.mxu0 %v2222
    %3092 = vmatprep.subr.bf16.mxu0 0
    %3093 = vmatpush1.bf16.msra.mxu0 0
    %3094 = vmatprep.subr.bf16.mxu0 0
    %3095 = vmatpush1.bf16.msra.mxu0 0
    %3096 = vmatprep.subr.bf16.mxu0 0
    %3097 = vmatpush1.bf16.msra.mxu0 0
    %3098 = vmatprep.subr.bf16.mxu0 0
    %3099 = vmatpush1.bf16.msra.mxu0 0
    %3100 = vmatprep.subr.bf16.mxu0 0
    %3101 = vmatpush1.bf16.msra.mxu0 0
    %3102 = vmatprep.subr.bf16.mxu0 0
    %3103 = vmatpush1.bf16.msra.mxu0 0
    %3104 = vmatprep.subr.bf16.mxu0 0
    %3105 = vmatpush1.bf16.msra.mxu0 0
    %3106 = vmatprep.subr.bf16.mxu0 0
    %3107 = vmatpush1.bf16.msra.mxu0 0
    %3108 = vmatprep.mubr.bf16.mxu0 0
    %3109 = vmatmul.mubr.bf16.gmra.mrb[0].mxu0 %v3069
    %v3110 = vpop.f32.mrb[0].mxu0
    %v3111 = vadd.f32 0.0, %v3110
    %v3112 = vpop.f32.mrb[0].mxu0
    %v3113 = vadd.f32 0.0, %v3112
    %v3114 = vpop.f32.mrb[0].mxu0
    %v3115 = vpop.f32.mrb[0].mxu0
    %3116 = vdwg.mxu0
    %3117 = vmatprep.subr.bf16.mxu0 %v2197
    %3118 = vmatpush1.bf16.msra.mxu0 %v2196
    %3119 = vmatprep.subr.bf16.mxu0 %v2201
    %3120 = vmatpush1.bf16.msra.mxu0 %v2200
    %3121 = vmatprep.subr.bf16.mxu0 %v2205
    %3122 = vmatpush1.bf16.msra.mxu0 %v2204
    %3123 = vmatprep.subr.bf16.mxu0 %v2209
    %3124 = vmatpush1.bf16.msra.mxu0 %v2208
    %3125 = vmatprep.subr.bf16.mxu0 %v2213
    %3126 = vmatpush1.bf16.msra.mxu0 %v2212
    %3127 = vmatprep.subr.bf16.mxu0 %v2217
    %3128 = vmatpush1.bf16.msra.mxu0 %v2216
    %3129 = vmatprep.subr.bf16.mxu0 %v2221
    %3130 = vmatpush1.bf16.msra.mxu0 %v2220
    %3131 = vmatprep.subr.bf16.mxu0 %v2225
    %3132 = vmatpush1.bf16.msra.mxu0 %v2224
    %3133 = vmatprep.subr.bf16.mxu0 0
    %3134 = vmatpush1.bf16.msra.mxu0 0
    %3135 = vmatprep.subr.bf16.mxu0 0
    %3136 = vmatpush1.bf16.msra.mxu0 0
    %3137 = vmatprep.subr.bf16.mxu0 0
    %3138 = vmatpush1.bf16.msra.mxu0 0
    %3139 = vmatprep.subr.bf16.mxu0 0
    %3140 = vmatpush1.bf16.msra.mxu0 0
    %3141 = vmatprep.subr.bf16.mxu0 0
    %3142 = vmatpush1.bf16.msra.mxu0 0
    %3143 = vmatprep.subr.bf16.mxu0 0
    %3144 = vmatpush1.bf16.msra.mxu0 0
    %3145 = vmatprep.subr.bf16.mxu0 0
    %3146 = vmatpush1.bf16.msra.mxu0 0
    %3147 = vmatprep.subr.bf16.mxu0 0
    %3148 = vmatpush1.bf16.msra.mxu0 0
    %3149 = vmatprep.mubr.bf16.mxu0 0
    %3150 = vmatmul.mubr.bf16.gmra.mrb[0].mxu0 %v3069
    %v3151 = vpop.f32.mrb[0].mxu0
    %v3152 = vadd.f32 0.0, %v3151
    %v3153 = vpop.f32.mrb[0].mxu0
    %v3154 = vadd.f32 0.0, %v3153
    %v3155 = vpop.f32.mrb[0].mxu0
    %v3156 = vpop.f32.mrb[0].mxu0
    %3157 = vdwg.mxu0
    %v3158 = vadd.f32 %v3072, %v3111
    %v3159 = vadd.f32 %v3073, %v3113
    %v3160 = vadd.f32 %v3074, %v3152
    %v3161 = vadd.f32 %v3075, %v3154
    %v3162 = vxor.u32 %v3158, 2147483648
    %v3163 = vmul.f32 %v3162, 1.442695
    %v3164 = vpow.pop %v3163
    %v3165 = vadd.f32 %v3164, 1.0
    %v3166 = vrcp.pop %v3165
    %v3167 = vmul.f32 1.0, %v3166
    %v3168 = vxor.u32 %v3159, 2147483648
    %v3169 = vmul.f32 %v3168, 1.442695
    %v3170 = vpow.pop %v3169
    %v3171 = vadd.f32 %v3170, 1.0
    %v3172 = vrcp.pop %v3171
    %v3173 = vmul.f32 1.0, %v3172
    %v3174 = vtanh.pop %v3160
    %v3175 = vxor.u32 %v3161, 2147483648
    %v3176 = vmul.f32 %v3175, 1.442695
    %v3177 = vpow.pop %v3176
    %v3178 = vadd.f32 %v3177, 1.0
    %v3179 = vrcp.pop %v3178
    %v3180 = vmul.f32 1.0, %v3179
    %v3181 = vmul.f32 %v3173, %v3066
    %v3182 = vmul.f32 %v3167, %v3174
    %v3183 = vadd.f32 %v3181, %v3182
    %v3184 = vtanh.pop %v3183
    %v3185 = vmul.f32 %v3180, %v3184
    %v3186 = vpack.c.bf16 %v3185, %v3185
    %s3187 = scalar_lea.vmem %s6, 28
    %3188 = vst [vmem:[%s3187] sm:$0xf] %v3186
    %3189 = vst [vmem:[%s2089] sm:$0xff] %v3185
    %3190 = vst [vmem:[%s2091] sm:$0xff] %v3183
    // Predicated region
    $region38: #{text_generation_forward.2} parent=1 // pred_check
      _
    $region39: #{text_generation_forward.2} parent=1 // pred_check_branch
      %3192 = sbr.rel (0) target = $region41
    $region40: #{text_generation_forward.2} parent=1 // pred_region
      _
    $region41: #{text_generation_forward.2} parent=1 // pred_fallthru
      _
    // Predicated region
    $region42: #{text_generation_forward.2} parent=1 // pred_check
      _
    $region43: #{text_generation_forward.2} parent=1 // pred_check_branch
      %3194 = sbr.rel (0) target = $region45
    $region44: #{text_generation_forward.2} parent=1 // pred_region
      _
    $region45: #{text_generation_forward.2} parent=1 // pred_fallthru
      _
    // Predicated region
    $region46: #{text_generation_forward.2} parent=1 // pred_check
      _
    $region47: #{text_generation_forward.2} parent=1 // pred_check_branch
      %3196 = sbr.rel (0) target = $region49
    $region48: #{text_generation_forward.2} parent=1 // pred_region
      _
    $region49: #{text_generation_forward.2} parent=1 // pred_fallthru
      _
    // Predicated region
    $region50: #{text_generation_forward.2} parent=1 // pred_check
      _
    $region51: #{text_generation_forward.2} parent=1 // pred_check_branch
      %3198 = sbr.rel (0) target = $region53
    $region52: #{text_generation_forward.2} parent=1 // pred_region
      _
    $region53: #{text_generation_forward.2} parent=1 // pred_fallthru
      _
    // Predicated region
    $region54: #{text_generation_forward.2} parent=1 // pred_check
      _
    $region55: #{text_generation_forward.2} parent=1 // pred_check_branch
      %3200 = sbr.rel (0) target = $region57
    $region56: #{text_generation_forward.2} parent=1 // pred_region
      _
    $region57: #{text_generation_forward.2} parent=1 // pred_fallthru
      _
    // Predicated region
    $region58: #{text_generation_forward.2} parent=1 // pred_check
      _
    $region59: #{text_generation_forward.2} parent=1 // pred_check_branch
      %3202 = sbr.rel (0) target = $region61
    $region60: #{text_generation_forward.2} parent=1 // pred_region
      _
    $region61: #{text_generation_forward.2} parent=1 // pred_fallthru
      _
    %3203 = vsyncpa [#allocation5], 1
    %3204 = vsyncpa [#allocation7], 1

</llo_original>
